<compile_context>
chip_gen: v5e
topology: v5e:2x2
jax: 0.10.0
libtpu: 0.0.40
codegen_flags: <defaults>
</compile_context>

<pallas_src>
import math
import functools

import jax
import jax.numpy as jnp
import numpy as np
from jax.experimental import pallas as pl
from jax.experimental.pallas import tpu as pltpu  # noqa: F401


# ----------------------------- config (small) -------------------------------
D_MODEL = 32
D_FF = 64
D_K = 8
D_V = 8
N_HEADS = 4
N_LAYERS = 2
BATCH = 2
SEQ = 8
LN_EPS = 1e-5


# ------------------------------ kernel body ----------------------------------
def _layer_norm(x, gamma, beta):
    # Single-pass statistics: sum(x) and sum(x*x) are independent reductions.
    inv_n = 1.0 / x.shape[-1]
    mu = jnp.sum(x, axis=-1, keepdims=True) * inv_n
    msq = jnp.sum(x * x, axis=-1, keepdims=True) * inv_n
    var = msq - mu * mu
    return (x - mu) * jax.lax.rsqrt(var + LN_EPS) * gamma + beta


def _decoder_kernel(x_ref, pe_ref,
                    wqkv_ref, wo_ref, w1_ref, w2_ref,
                    g1_ref, b1_ref, g2_ref, b2_ref,
                    out_ref, attn_ref,
                    *, n_layers, n_heads, d_k, d_v, batch, seq):
    """Single fused kernel: pos-enc add + all decoder layers (batch folded into rows)."""
    x = x_ref[...] + pe_ref[...]                     # (T, D), fused positional encoding
    scale = 1.0 / math.sqrt(d_k)
    hk = n_heads * d_k
    hv = n_heads * d_v
    T = batch * seq

    def split_heads(mat, dh):
        # (T, H*dh) -> (B*H, S, dh): one leading batched dim for 3-D einsums.
        return (mat.reshape(batch, seq, n_heads, dh)
                   .transpose(0, 2, 1, 3)
                   .reshape(batch * n_heads, seq, dh))

    for l in range(n_layers):                        # static unroll (N_LAYERS small)
        # ---- fused QKV projection: ONE 2-D matmul against packed [Wq|Wk|Wv] ----
        qkv = jnp.dot(x, wqkv_ref[l], preferred_element_type=jnp.float32)  # (T, 2hk+hv)
        q = split_heads(qkv[:, :hk], d_k)                                  # (B*H, S, dk)
        k = split_heads(qkv[:, hk:2 * hk], d_k)                            # (B*H, S, dk)
        v = split_heads(qkv[:, 2 * hk:2 * hk + hv], d_v)                   # (B*H, S, dv)

        # ---- per-example attention (no cross-batch junk, no mask needed:
        #      the reference decoder mask is all-False) ----
        s = jnp.einsum("gqd,gkd->gqk", q, k,
                       preferred_element_type=jnp.float32) * scale         # (B*H, S, S)
        m = jnp.max(s, axis=-1, keepdims=True)
        e = jnp.exp(s - m)
        denom = jnp.sum(e, axis=-1, keepdims=True)
        attn = e * pl.reciprocal(denom, approx=False)                      # (B*H, S, S)

        # one consolidated slab store per layer (leading-dim split only, no relayout)
        attn_ref[l] = attn.reshape(batch, n_heads, seq, seq)

        ctx = jnp.einsum("gqk,gkd->gqd", attn, v,
                         preferred_element_type=jnp.float32)               # (B*H, S, dv)

        # ---- fused output projection + head reduction: merge heads head-major
        #      (matches PyTorch transpose(1,2).reshape) then ONE 2-D matmul ----
        ctx2d = (ctx.reshape(batch, n_heads, seq, d_v)
                    .transpose(0, 2, 1, 3)
                    .reshape(T, hv))                                       # (T, H*dv)
        a_out = jnp.dot(ctx2d, wo_ref[l],
                        preferred_element_type=jnp.float32) + x            # residual
        a_out = _layer_norm(a_out, g1_ref[l], b1_ref[l])

        # ---- position-wise FFN + residual + LayerNorm ----
        h1 = jnp.maximum(
            jnp.dot(a_out, w1_ref[l], preferred_element_type=jnp.float32), 0.0)
        ffn = jnp.dot(h1, w2_ref[l], preferred_element_type=jnp.float32) + a_out
        x = _layer_norm(ffn, g2_ref[l], b2_ref[l])

    out_ref[...] = x


# ------------------------------ pallas wrapper --------------------------------
def positional_encoding(seq_len, d_model):
    position = jnp.arange(seq_len, dtype=jnp.float32)[:, None]
    div_term = jnp.exp(
        jnp.arange(0, d_model, 2, dtype=jnp.float32) * (-math.log(10000.0) / d_model))
    pe = jnp.zeros((seq_len, d_model), dtype=jnp.float32)
    pe = pe.at[:, 0::2].set(jnp.sin(position * div_term))
    pe = pe.at[:, 1::2].set(jnp.cos(position * div_term))
    return pe[None]                                                   # (1, S, D)


def pack_params(layer_params):
    """Re-layout per-layer weights into stacked arrays; QKV packed as (D, H*(2dk+dv))."""
    wqkv, wo, w1, w2, g1, b1, g2, b2 = [], [], [], [], [], [], [], []
    for p in layer_params:
        wqkv.append(jnp.concatenate([p["wq"], p["wk"], p["wv"]], axis=1))  # (D, 2hk+hv)
        wo.append(p["wo"])                                                 # (H*dv, D)
        w1.append(p["w1"]); w2.append(p["w2"])
        g1.append(p["g1"]); b1.append(p["b1"])
        g2.append(p["g2"]); b2.append(p["b2"])
    stk = lambda xs: jnp.stack(xs, axis=0)
    return {"wqkv": stk(wqkv), "wo": stk(wo), "w1": stk(w1), "w2": stk(w2),
            "g1": stk(g1), "b1": stk(b1), "g2": stk(g2), "b2": stk(b2)}


def decoder_forward(x, packed):
    """Full Decoder.forward in one Pallas kernel. x: (B, S, D)."""
    B, S, D = x.shape
    T = B * S
    pe = jnp.tile(positional_encoding(S, D)[0], (B, 1))               # (T, D)

    kernel = functools.partial(
        _decoder_kernel, n_layers=N_LAYERS, n_heads=N_HEADS,
        d_k=D_K, d_v=D_V, batch=B, seq=S)

    out_flat, attn_all = pl.pallas_call(
        kernel,
        out_shape=(
            jax.ShapeDtypeStruct((T, D), jnp.float32),
            jax.ShapeDtypeStruct((N_LAYERS, B, N_HEADS, S, S), jnp.float32),
        ),
    )(x.reshape(T, D), pe,
      packed["wqkv"], packed["wo"], packed["w1"], packed["w2"],
      packed["g1"], packed["b1"], packed["g2"], packed["b2"])

    return out_flat.reshape(B, S, D), [attn_all[l] for l in range(N_LAYERS)]


# ------------------------- parameter init (deterministic) ---------------------
def init_layer_params(key):
    ks = jax.random.split(key, 6)
    s = 0.05
    return {
        "wq": s * jax.random.normal(ks[0], (D_MODEL, N_HEADS * D_K), jnp.float32),
        "wk": s * jax.random.normal(ks[1], (D_MODEL, N_HEADS * D_K), jnp.float32),
        "wv": s * jax.random.normal(ks[2], (D_MODEL, N_HEADS * D_V), jnp.float32),
        "wo": s * jax.random.normal(ks[3], (N_HEADS * D_V, D_MODEL), jnp.float32),
        "g1": jnp.ones((1, D_MODEL), jnp.float32),
        "b1": jnp.zeros((1, D_MODEL), jnp.float32),
        "w1": s * jax.random.normal(ks[4], (D_MODEL, D_FF), jnp.float32),
        "w2": s * jax.random.normal(ks[5], (D_FF, D_MODEL), jnp.float32),
        "g2": jnp.ones((1, D_MODEL), jnp.float32),
        "b2": jnp.zeros((1, D_MODEL), jnp.float32),
    }


# ------------------------------ pure-JAX reference ----------------------------
def _ref_layer(x, p):
    B, S, D = x.shape
    q = (x @ p["wq"]).reshape(B, S, N_HEADS, D_K).transpose(0, 2, 1, 3)
    k = (x @ p["wk"]).reshape(B, S, N_HEADS, D_K).transpose(0, 2, 1, 3)
    v = (x @ p["wv"]).reshape(B, S, N_HEADS, D_V).transpose(0, 2, 1, 3)
    scores = jnp.einsum("bhqd,bhkd->bhqk", q, k) / math.sqrt(D_K)
    attn = jax.nn.softmax(scores, axis=-1)
    ctx = jnp.einsum("bhqk,bhkd->bhqd", attn, v)
    ctx = ctx.transpose(0, 2, 1, 3).reshape(B, S, N_HEADS * D_V)
    out = ctx @ p["wo"] + x
    mu = out.mean(-1, keepdims=True)
    var = ((out - mu) ** 2).mean(-1, keepdims=True)
    out = (out - mu) / jnp.sqrt(var + LN_EPS) * p["g1"] + p["b1"]
    ffn = jnp.maximum(out @ p["w1"], 0.0) @ p["w2"] + out
    mu = ffn.mean(-1, keepdims=True)
    var = ((ffn - mu) ** 2).mean(-1, keepdims=True)
    return (ffn - mu) / jnp.sqrt(var + LN_EPS) * p["g2"] + p["b2"], attn


def _ref_forward(x, layer_params):
    x = x + positional_encoding(x.shape[1], x.shape[2])
    attns = []
    for p in layer_params:
        x, a = _ref_layer(x, p)
        attns.append(a)
    return x, attns


# ----------------------------------- main --------------------------------------
if __name__ == "__main__":
    key = jax.random.PRNGKey(0)
    k_x, *k_layers = jax.random.split(key, N_LAYERS + 1)

    x = jax.random.normal(k_x, (BATCH, SEQ, D_MODEL), jnp.float32)
    layer_params = [init_layer_params(k) for k in k_layers]
    packed = pack_params(layer_params)

    out, attns = decoder_forward(x, packed)
    out = jax.block_until_ready(out)
    attns = [jax.block_until_ready(a) for a in attns]

    # Correctness check against pure-JAX reference.
    ref_out, ref_attns = _ref_forward(x, layer_params)
    np.testing.assert_allclose(np.asarray(out), np.asarray(ref_out),
                               rtol=1e-4, atol=1e-4)
    for a, ra in zip(attns, ref_attns):
        np.testing.assert_allclose(np.asarray(a), np.asarray(ra),
                                   rtol=1e-4, atol=1e-4)

    print("KERNEL_OK")
</pallas_src>

<mosaic_0001>
module attributes {stable_mosaic.version = 11 : i64} {
  func.func @_decoder_kernel(%arg0: memref<16x32xf32, #tpu.memory_space<vmem>>, %arg1: memref<16x32xf32, #tpu.memory_space<vmem>>, %arg2: memref<2x32x96xf32, #tpu.memory_space<vmem>>, %arg3: memref<2x32x32xf32, #tpu.memory_space<vmem>>, %arg4: memref<2x32x64xf32, #tpu.memory_space<vmem>>, %arg5: memref<2x64x32xf32, #tpu.memory_space<vmem>>, %arg6: memref<2x1x32xf32, #tpu.memory_space<vmem>>, %arg7: memref<2x1x32xf32, #tpu.memory_space<vmem>>, %arg8: memref<2x1x32xf32, #tpu.memory_space<vmem>>, %arg9: memref<2x1x32xf32, #tpu.memory_space<vmem>>, %arg10: memref<16x32xf32, #tpu.memory_space<vmem>>, %arg11: memref<2x2x4x8x8xf32, #tpu.memory_space<vmem>>) attributes {dimension_semantics = [], scalar_prefetch = 0 : i64, scratch_operands = 0 : i64, tpu.core_type = #tpu.core_type<tc>} {
    %c0 = arith.constant 0 : index
    %c0_0 = arith.constant 0 : index
    %0 = vector.load %arg0[%c0, %c0_0] : memref<16x32xf32, #tpu.memory_space<vmem>>, vector<16x32xf32>
    %c0_1 = arith.constant 0 : index
    %c0_2 = arith.constant 0 : index
    %1 = vector.load %arg1[%c0_1, %c0_2] : memref<16x32xf32, #tpu.memory_space<vmem>>, vector<16x32xf32>
    %2 = arith.addf %0, %1 : vector<16x32xf32>
    %c0_3 = arith.constant 0 : index
    %c0_4 = arith.constant 0 : index
    %c0_5 = arith.constant 0 : index
    %3 = vector.load %arg2[%c0_3, %c0_4, %c0_5] : memref<2x32x96xf32, #tpu.memory_space<vmem>>, vector<1x32x96xf32>
    %4 = vector.shape_cast %3 : vector<1x32x96xf32> to vector<32x96xf32>
    %cst = arith.constant dense<0.000000e+00> : vector<16x96xf32>
    %5 = tpu.matmul %2, %4, %cst {dimension_numbers = #tpu.dot_dimension_numbers<[1], [0], [0], [1], [0, 0, 1, 1], [], []>} : vector<16x32xf32>, vector<32x96xf32>, vector<16x96xf32> -> vector<16x96xf32>
    %6 = vector.extract_strided_slice %5 {offsets = [0, 0], sizes = [16, 32], strides = [1, 1]} : vector<16x96xf32> to vector<16x32xf32>
    %7 = vector.shape_cast %6 : vector<16x32xf32> to vector<2x8x4x8xf32>
    %8 = tpu.transpose %7, [0, 2, 1, 3] : vector<2x8x4x8xf32> -> vector<2x4x8x8xf32>
    %9 = vector.shape_cast %8 : vector<2x4x8x8xf32> to vector<8x8x8xf32>
    %10 = vector.extract_strided_slice %5 {offsets = [0, 32], sizes = [16, 32], strides = [1, 1]} : vector<16x96xf32> to vector<16x32xf32>
    %11 = vector.shape_cast %10 : vector<16x32xf32> to vector<2x8x4x8xf32>
    %12 = tpu.transpose %11, [0, 2, 1, 3] : vector<2x8x4x8xf32> -> vector<2x4x8x8xf32>
    %13 = vector.shape_cast %12 : vector<2x4x8x8xf32> to vector<8x8x8xf32>
    %14 = vector.extract_strided_slice %5 {offsets = [0, 64], sizes = [16, 32], strides = [1, 1]} : vector<16x96xf32> to vector<16x32xf32>
    %15 = vector.shape_cast %14 : vector<16x32xf32> to vector<2x8x4x8xf32>
    %16 = tpu.transpose %15, [0, 2, 1, 3] : vector<2x8x4x8xf32> -> vector<2x4x8x8xf32>
    %17 = vector.shape_cast %16 : vector<2x4x8x8xf32> to vector<8x8x8xf32>
    "tpu.trace_start"() <{level = 10 : i32, message = "gqd,gkd->gqk"}> : () -> ()
    %cst_6 = arith.constant dense<0.000000e+00> : vector<8x8x8xf32>
    %18 = tpu.matmul %9, %13, %cst_6 {dimension_numbers = #tpu.dot_dimension_numbers<[2], [2], [1], [1], [0, 0, 0, 1, 1, 1], [0], [0]>} : vector<8x8x8xf32>, vector<8x8x8xf32>, vector<8x8x8xf32> -> vector<8x8x8xf32>
    "tpu.trace_stop"() : () -> ()
    %cst_7 = arith.constant 0.353553385 : f32
    %19 = vector.broadcast %cst_7 : f32 to vector<8x8x8xf32>
    %20 = arith.mulf %18, %19 : vector<8x8x8xf32>
    %cst_8 = arith.constant dense<0xFF800000> : vector<8x8xf32>
    %21 = vector.multi_reduction <maximumf>, %20, %cst_8 [2] : vector<8x8x8xf32> to vector<8x8xf32>
    %22 = vector.shape_cast %21 : vector<8x8xf32> to vector<8x8x1xf32>
    %23 = vector.broadcast %22 : vector<8x8x1xf32> to vector<8x8x8xf32>
    %24 = arith.subf %20, %23 : vector<8x8x8xf32>
    %25 = math.exp %24 : vector<8x8x8xf32>
    %cst_9 = arith.constant dense<0.000000e+00> : vector<8x8xf32>
    %26 = vector.multi_reduction <add>, %25, %cst_9 [2] : vector<8x8x8xf32> to vector<8x8xf32>
    %27 = vector.shape_cast %26 : vector<8x8xf32> to vector<8x8x1xf32>
    %28 = tpu.reciprocal %27 : vector<8x8x1xf32> -> vector<8x8x1xf32>
    %29 = vector.broadcast %28 : vector<8x8x1xf32> to vector<8x8x8xf32>
    %30 = arith.mulf %25, %29 : vector<8x8x8xf32>
    %31 = vector.shape_cast %30 : vector<8x8x8xf32> to vector<2x4x8x8xf32>
    %c0_10 = arith.constant 0 : index
    %c0_11 = arith.constant 0 : index
    %c0_12 = arith.constant 0 : index
    %c0_13 = arith.constant 0 : index
    %c0_14 = arith.constant 0 : index
    %32 = vector.load %arg11[%c0_10, %c0_11, %c0_12, %c0_13, %c0_14] : memref<2x2x4x8x8xf32, #tpu.memory_space<vmem>>, vector<1x2x4x8x8xf32>
    %33 = vector.shape_cast %32 : vector<1x2x4x8x8xf32> to vector<2x4x8x8xf32>
    %34 = vector.shape_cast %31 : vector<2x4x8x8xf32> to vector<1x2x4x8x8xf32>
    tpu.vector_store %arg11[%c0_10, %c0_11, %c0_12, %c0_13, %c0_14], %34 {strides = array<i32>} : memref<2x2x4x8x8xf32, #tpu.memory_space<vmem>>, vector<1x2x4x8x8xf32>,
    "tpu.trace_start"() <{level = 10 : i32, message = "gqk,gkd->gqd"}> : () -> ()
    %cst_15 = arith.constant dense<0.000000e+00> : vector<8x8x8xf32>
    %35 = tpu.matmul %30, %17, %cst_15 {dimension_numbers = #tpu.dot_dimension_numbers<[2], [1], [1], [2], [0, 0, 0, 1, 1, 2], [0], [0]>} : vector<8x8x8xf32>, vector<8x8x8xf32>, vector<8x8x8xf32> -> vector<8x8x8xf32>
    "tpu.trace_stop"() : () -> ()
    %36 = vector.shape_cast %35 : vector<8x8x8xf32> to vector<2x4x8x8xf32>
    %37 = tpu.transpose %36, [0, 2, 1, 3] : vector<2x4x8x8xf32> -> vector<2x8x4x8xf32>
    %38 = vector.shape_cast %37 : vector<2x8x4x8xf32> to vector<16x32xf32>
    %c0_16 = arith.constant 0 : index
    %c0_17 = arith.constant 0 : index
    %c0_18 = arith.constant 0 : index
    %39 = vector.load %arg3[%c0_16, %c0_17, %c0_18] : memref<2x32x32xf32, #tpu.memory_space<vmem>>, vector<1x32x32xf32>
    %40 = vector.shape_cast %39 : vector<1x32x32xf32> to vector<32x32xf32>
    %cst_19 = arith.constant dense<0.000000e+00> : vector<16x32xf32>
    %41 = tpu.matmul %38, %40, %cst_19 {dimension_numbers = #tpu.dot_dimension_numbers<[1], [0], [0], [1], [0, 0, 1, 1], [], []>} : vector<16x32xf32>, vector<32x32xf32>, vector<16x32xf32> -> vector<16x32xf32>
    %42 = arith.addf %41, %2 : vector<16x32xf32>
    %c0_20 = arith.constant 0 : index
    %c0_21 = arith.constant 0 : index
    %c0_22 = arith.constant 0 : index
    %43 = vector.load %arg6[%c0_20, %c0_21, %c0_22] : memref<2x1x32xf32, #tpu.memory_space<vmem>>, vector<1x1x32xf32>
    %44 = vector.shape_cast %43 : vector<1x1x32xf32> to vector<1x32xf32>
    %c0_23 = arith.constant 0 : index
    %c0_24 = arith.constant 0 : index
    %c0_25 = arith.constant 0 : index
    %45 = vector.load %arg7[%c0_23, %c0_24, %c0_25] : memref<2x1x32xf32, #tpu.memory_space<vmem>>, vector<1x1x32xf32>
    %46 = vector.shape_cast %45 : vector<1x1x32xf32> to vector<1x32xf32>
    %cst_26 = arith.constant dense<0.000000e+00> : vector<16xf32>
    %47 = vector.multi_reduction <add>, %42, %cst_26 [1] : vector<16x32xf32> to vector<16xf32>
    %48 = vector.shape_cast %47 : vector<16xf32> to vector<16x1xf32>
    %cst_27 = arith.constant 3.125000e-02 : f32
    %49 = vector.broadcast %cst_27 : f32 to vector<16x1xf32>
    %50 = arith.mulf %48, %49 : vector<16x1xf32>
    %51 = arith.mulf %42, %42 : vector<16x32xf32>
    %cst_28 = arith.constant dense<0.000000e+00> : vector<16xf32>
    %52 = vector.multi_reduction <add>, %51, %cst_28 [1] : vector<16x32xf32> to vector<16xf32>
    %53 = vector.shape_cast %52 : vector<16xf32> to vector<16x1xf32>
    %cst_29 = arith.constant 3.125000e-02 : f32
    %54 = vector.broadcast %cst_29 : f32 to vector<16x1xf32>
    %55 = arith.mulf %53, %54 : vector<16x1xf32>
    %56 = arith.mulf %50, %50 : vector<16x1xf32>
    %57 = arith.subf %55, %56 : vector<16x1xf32>
    %58 = vector.broadcast %50 : vector<16x1xf32> to vector<16x32xf32>
    %59 = arith.subf %42, %58 : vector<16x32xf32>
    %cst_30 = arith.constant 9.99999974E-6 : f32
    %60 = vector.broadcast %cst_30 : f32 to vector<16x1xf32>
    %61 = arith.addf %57, %60 : vector<16x1xf32>
    %62 = math.rsqrt %61 : vector<16x1xf32>
    %63 = vector.broadcast %62 : vector<16x1xf32> to vector<16x32xf32>
    %64 = arith.mulf %59, %63 : vector<16x32xf32>
    %65 = vector.broadcast %44 : vector<1x32xf32> to vector<16x32xf32>
    %66 = arith.mulf %64, %65 : vector<16x32xf32>
    %67 = vector.broadcast %46 : vector<1x32xf32> to vector<16x32xf32>
    %68 = arith.addf %66, %67 : vector<16x32xf32>
    %c0_31 = arith.constant 0 : index
    %c0_32 = arith.constant 0 : index
    %c0_33 = arith.constant 0 : index
    %69 = vector.load %arg4[%c0_31, %c0_32, %c0_33] : memref<2x32x64xf32, #tpu.memory_space<vmem>>, vector<1x32x64xf32>
    %70 = vector.shape_cast %69 : vector<1x32x64xf32> to vector<32x64xf32>
    %cst_34 = arith.constant dense<0.000000e+00> : vector<16x64xf32>
    %71 = tpu.matmul %68, %70, %cst_34 {dimension_numbers = #tpu.dot_dimension_numbers<[1], [0], [0], [1], [0, 0, 1, 1], [], []>} : vector<16x32xf32>, vector<32x64xf32>, vector<16x64xf32> -> vector<16x64xf32>
    %cst_35 = arith.constant 0.000000e+00 : f32
    %72 = vector.broadcast %cst_35 : f32 to vector<16x64xf32>
    %73 = arith.maximumf %71, %72 : vector<16x64xf32>
    %c0_36 = arith.constant 0 : index
    %c0_37 = arith.constant 0 : index
    %c0_38 = arith.constant 0 : index
    %74 = vector.load %arg5[%c0_36, %c0_37, %c0_38] : memref<2x64x32xf32, #tpu.memory_space<vmem>>, vector<1x64x32xf32>
    %75 = vector.shape_cast %74 : vector<1x64x32xf32> to vector<64x32xf32>
    %cst_39 = arith.constant dense<0.000000e+00> : vector<16x32xf32>
    %76 = tpu.matmul %73, %75, %cst_39 {dimension_numbers = #tpu.dot_dimension_numbers<[1], [0], [0], [1], [0, 0, 1, 1], [], []>} : vector<16x64xf32>, vector<64x32xf32>, vector<16x32xf32> -> vector<16x32xf32>
    %77 = arith.addf %76, %68 : vector<16x32xf32>
    %c0_40 = arith.constant 0 : index
    %c0_41 = arith.constant 0 : index
    %c0_42 = arith.constant 0 : index
    %78 = vector.load %arg8[%c0_40, %c0_41, %c0_42] : memref<2x1x32xf32, #tpu.memory_space<vmem>>, vector<1x1x32xf32>
    %79 = vector.shape_cast %78 : vector<1x1x32xf32> to vector<1x32xf32>
    %c0_43 = arith.constant 0 : index
    %c0_44 = arith.constant 0 : index
    %c0_45 = arith.constant 0 : index
    %80 = vector.load %arg9[%c0_43, %c0_44, %c0_45] : memref<2x1x32xf32, #tpu.memory_space<vmem>>, vector<1x1x32xf32>
    %81 = vector.shape_cast %80 : vector<1x1x32xf32> to vector<1x32xf32>
    %cst_46 = arith.constant dense<0.000000e+00> : vector<16xf32>
    %82 = vector.multi_reduction <add>, %77, %cst_46 [1] : vector<16x32xf32> to vector<16xf32>
    %83 = vector.shape_cast %82 : vector<16xf32> to vector<16x1xf32>
    %cst_47 = arith.constant 3.125000e-02 : f32
    %84 = vector.broadcast %cst_47 : f32 to vector<16x1xf32>
    %85 = arith.mulf %83, %84 : vector<16x1xf32>
    %86 = arith.mulf %77, %77 : vector<16x32xf32>
    %cst_48 = arith.constant dense<0.000000e+00> : vector<16xf32>
    %87 = vector.multi_reduction <add>, %86, %cst_48 [1] : vector<16x32xf32> to vector<16xf32>
    %88 = vector.shape_cast %87 : vector<16xf32> to vector<16x1xf32>
    %cst_49 = arith.constant 3.125000e-02 : f32
    %89 = vector.broadcast %cst_49 : f32 to vector<16x1xf32>
    %90 = arith.mulf %88, %89 : vector<16x1xf32>
    %91 = arith.mulf %85, %85 : vector<16x1xf32>
    %92 = arith.subf %90, %91 : vector<16x1xf32>
    %93 = vector.broadcast %85 : vector<16x1xf32> to vector<16x32xf32>
    %94 = arith.subf %77, %93 : vector<16x32xf32>
    %cst_50 = arith.constant 9.99999974E-6 : f32
    %95 = vector.broadcast %cst_50 : f32 to vector<16x1xf32>
    %96 = arith.addf %92, %95 : vector<16x1xf32>
    %97 = math.rsqrt %96 : vector<16x1xf32>
    %98 = vector.broadcast %97 : vector<16x1xf32> to vector<16x32xf32>
    %99 = arith.mulf %94, %98 : vector<16x32xf32>
    %100 = vector.broadcast %79 : vector<1x32xf32> to vector<16x32xf32>
    %101 = arith.mulf %99, %100 : vector<16x32xf32>
    %102 = vector.broadcast %81 : vector<1x32xf32> to vector<16x32xf32>
    %103 = arith.addf %101, %102 : vector<16x32xf32>
    %c1 = arith.constant 1 : index
    %c0_51 = arith.constant 0 : index
    %c0_52 = arith.constant 0 : index
    %104 = vector.load %arg2[%c1, %c0_51, %c0_52] : memref<2x32x96xf32, #tpu.memory_space<vmem>>, vector<1x32x96xf32>
    %105 = vector.shape_cast %104 : vector<1x32x96xf32> to vector<32x96xf32>
    %cst_53 = arith.constant dense<0.000000e+00> : vector<16x96xf32>
    %106 = tpu.matmul %103, %105, %cst_53 {dimension_numbers = #tpu.dot_dimension_numbers<[1], [0], [0], [1], [0, 0, 1, 1], [], []>} : vector<16x32xf32>, vector<32x96xf32>, vector<16x96xf32> -> vector<16x96xf32>
    %107 = vector.extract_strided_slice %106 {offsets = [0, 0], sizes = [16, 32], strides = [1, 1]} : vector<16x96xf32> to vector<16x32xf32>
    %108 = vector.shape_cast %107 : vector<16x32xf32> to vector<2x8x4x8xf32>
    %109 = tpu.transpose %108, [0, 2, 1, 3] : vector<2x8x4x8xf32> -> vector<2x4x8x8xf32>
    %110 = vector.shape_cast %109 : vector<2x4x8x8xf32> to vector<8x8x8xf32>
    %111 = vector.extract_strided_slice %106 {offsets = [0, 32], sizes = [16, 32], strides = [1, 1]} : vector<16x96xf32> to vector<16x32xf32>
    %112 = vector.shape_cast %111 : vector<16x32xf32> to vector<2x8x4x8xf32>
    %113 = tpu.transpose %112, [0, 2, 1, 3] : vector<2x8x4x8xf32> -> vector<2x4x8x8xf32>
    %114 = vector.shape_cast %113 : vector<2x4x8x8xf32> to vector<8x8x8xf32>
    %115 = vector.extract_strided_slice %106 {offsets = [0, 64], sizes = [16, 32], strides = [1, 1]} : vector<16x96xf32> to vector<16x32xf32>
    %116 = vector.shape_cast %115 : vector<16x32xf32> to vector<2x8x4x8xf32>
    %117 = tpu.transpose %116, [0, 2, 1, 3] : vector<2x8x4x8xf32> -> vector<2x4x8x8xf32>
    %118 = vector.shape_cast %117 : vector<2x4x8x8xf32> to vector<8x8x8xf32>
    "tpu.trace_start"() <{level = 10 : i32, message = "gqd,gkd->gqk"}> : () -> ()
    %cst_54 = arith.constant dense<0.000000e+00> : vector<8x8x8xf32>
    %119 = tpu.matmul %110, %114, %cst_54 {dimension_numbers = #tpu.dot_dimension_numbers<[2], [2], [1], [1], [0, 0, 0, 1, 1, 1], [0], [0]>} : vector<8x8x8xf32>, vector<8x8x8xf32>, vector<8x8x8xf32> -> vector<8x8x8xf32>
    "tpu.trace_stop"() : () -> ()
    %cst_55 = arith.constant 0.353553385 : f32
    %120 = vector.broadcast %cst_55 : f32 to vector<8x8x8xf32>
    %121 = arith.mulf %119, %120 : vector<8x8x8xf32>
    %cst_56 = arith.constant dense<0xFF800000> : vector<8x8xf32>
    %122 = vector.multi_reduction <maximumf>, %121, %cst_56 [2] : vector<8x8x8xf32> to vector<8x8xf32>
    %123 = vector.shape_cast %122 : vector<8x8xf32> to vector<8x8x1xf32>
    %124 = vector.broadcast %123 : vector<8x8x1xf32> to vector<8x8x8xf32>
    %125 = arith.subf %121, %124 : vector<8x8x8xf32>
    %126 = math.exp %125 : vector<8x8x8xf32>
    %cst_57 = arith.constant dense<0.000000e+00> : vector<8x8xf32>
    %127 = vector.multi_reduction <add>, %126, %cst_57 [2] : vector<8x8x8xf32> to vector<8x8xf32>
    %128 = vector.shape_cast %127 : vector<8x8xf32> to vector<8x8x1xf32>
    %129 = tpu.reciprocal %128 : vector<8x8x1xf32> -> vector<8x8x1xf32>
    %130 = vector.broadcast %129 : vector<8x8x1xf32> to vector<8x8x8xf32>
    %131 = arith.mulf %126, %130 : vector<8x8x8xf32>
    %132 = vector.shape_cast %131 : vector<8x8x8xf32> to vector<2x4x8x8xf32>
    %c1_58 = arith.constant 1 : index
    %c0_59 = arith.constant 0 : index
    %c0_60 = arith.constant 0 : index
    %c0_61 = arith.constant 0 : index
    %c0_62 = arith.constant 0 : index
    %133 = vector.load %arg11[%c1_58, %c0_59, %c0_60, %c0_61, %c0_62] : memref<2x2x4x8x8xf32, #tpu.memory_space<vmem>>, vector<1x2x4x8x8xf32>
    %134 = vector.shape_cast %133 : vector<1x2x4x8x8xf32> to vector<2x4x8x8xf32>
    %135 = vector.shape_cast %132 : vector<2x4x8x8xf32> to vector<1x2x4x8x8xf32>
    tpu.vector_store %arg11[%c1_58, %c0_59, %c0_60, %c0_61, %c0_62], %135 {strides = array<i32>} : memref<2x2x4x8x8xf32, #tpu.memory_space<vmem>>, vector<1x2x4x8x8xf32>,
    "tpu.trace_start"() <{level = 10 : i32, message = "gqk,gkd->gqd"}> : () -> ()
    %cst_63 = arith.constant dense<0.000000e+00> : vector<8x8x8xf32>
    %136 = tpu.matmul %131, %118, %cst_63 {dimension_numbers = #tpu.dot_dimension_numbers<[2], [1], [1], [2], [0, 0, 0, 1, 1, 2], [0], [0]>} : vector<8x8x8xf32>, vector<8x8x8xf32>, vector<8x8x8xf32> -> vector<8x8x8xf32>
    "tpu.trace_stop"() : () -> ()
    %137 = vector.shape_cast %136 : vector<8x8x8xf32> to vector<2x4x8x8xf32>
    %138 = tpu.transpose %137, [0, 2, 1, 3] : vector<2x4x8x8xf32> -> vector<2x8x4x8xf32>
    %139 = vector.shape_cast %138 : vector<2x8x4x8xf32> to vector<16x32xf32>
    %c1_64 = arith.constant 1 : index
    %c0_65 = arith.constant 0 : index
    %c0_66 = arith.constant 0 : index
    %140 = vector.load %arg3[%c1_64, %c0_65, %c0_66] : memref<2x32x32xf32, #tpu.memory_space<vmem>>, vector<1x32x32xf32>
    %141 = vector.shape_cast %140 : vector<1x32x32xf32> to vector<32x32xf32>
    %cst_67 = arith.constant dense<0.000000e+00> : vector<16x32xf32>
    %142 = tpu.matmul %139, %141, %cst_67 {dimension_numbers = #tpu.dot_dimension_numbers<[1], [0], [0], [1], [0, 0, 1, 1], [], []>} : vector<16x32xf32>, vector<32x32xf32>, vector<16x32xf32> -> vector<16x32xf32>
    %143 = arith.addf %142, %103 : vector<16x32xf32>
    %c1_68 = arith.constant 1 : index
    %c0_69 = arith.constant 0 : index
    %c0_70 = arith.constant 0 : index
    %144 = vector.load %arg6[%c1_68, %c0_69, %c0_70] : memref<2x1x32xf32, #tpu.memory_space<vmem>>, vector<1x1x32xf32>
    %145 = vector.shape_cast %144 : vector<1x1x32xf32> to vector<1x32xf32>
    %c1_71 = arith.constant 1 : index
    %c0_72 = arith.constant 0 : index
    %c0_73 = arith.constant 0 : index
    %146 = vector.load %arg7[%c1_71, %c0_72, %c0_73] : memref<2x1x32xf32, #tpu.memory_space<vmem>>, vector<1x1x32xf32>
    %147 = vector.shape_cast %146 : vector<1x1x32xf32> to vector<1x32xf32>
    %cst_74 = arith.constant dense<0.000000e+00> : vector<16xf32>
    %148 = vector.multi_reduction <add>, %143, %cst_74 [1] : vector<16x32xf32> to vector<16xf32>
    %149 = vector.shape_cast %148 : vector<16xf32> to vector<16x1xf32>
    %cst_75 = arith.constant 3.125000e-02 : f32
    %150 = vector.broadcast %cst_75 : f32 to vector<16x1xf32>
    %151 = arith.mulf %149, %150 : vector<16x1xf32>
    %152 = arith.mulf %143, %143 : vector<16x32xf32>
    %cst_76 = arith.constant dense<0.000000e+00> : vector<16xf32>
    %153 = vector.multi_reduction <add>, %152, %cst_76 [1] : vector<16x32xf32> to vector<16xf32>
    %154 = vector.shape_cast %153 : vector<16xf32> to vector<16x1xf32>
    %cst_77 = arith.constant 3.125000e-02 : f32
    %155 = vector.broadcast %cst_77 : f32 to vector<16x1xf32>
    %156 = arith.mulf %154, %155 : vector<16x1xf32>
    %157 = arith.mulf %151, %151 : vector<16x1xf32>
    %158 = arith.subf %156, %157 : vector<16x1xf32>
    %159 = vector.broadcast %151 : vector<16x1xf32> to vector<16x32xf32>
    %160 = arith.subf %143, %159 : vector<16x32xf32>
    %cst_78 = arith.constant 9.99999974E-6 : f32
    %161 = vector.broadcast %cst_78 : f32 to vector<16x1xf32>
    %162 = arith.addf %158, %161 : vector<16x1xf32>
    %163 = math.rsqrt %162 : vector<16x1xf32>
    %164 = vector.broadcast %163 : vector<16x1xf32> to vector<16x32xf32>
    %165 = arith.mulf %160, %164 : vector<16x32xf32>
    %166 = vector.broadcast %145 : vector<1x32xf32> to vector<16x32xf32>
    %167 = arith.mulf %165, %166 : vector<16x32xf32>
    %168 = vector.broadcast %147 : vector<1x32xf32> to vector<16x32xf32>
    %169 = arith.addf %167, %168 : vector<16x32xf32>
    %c1_79 = arith.constant 1 : index
    %c0_80 = arith.constant 0 : index
    %c0_81 = arith.constant 0 : index
    %170 = vector.load %arg4[%c1_79, %c0_80, %c0_81] : memref<2x32x64xf32, #tpu.memory_space<vmem>>, vector<1x32x64xf32>
    %171 = vector.shape_cast %170 : vector<1x32x64xf32> to vector<32x64xf32>
    %cst_82 = arith.constant dense<0.000000e+00> : vector<16x64xf32>
    %172 = tpu.matmul %169, %171, %cst_82 {dimension_numbers = #tpu.dot_dimension_numbers<[1], [0], [0], [1], [0, 0, 1, 1], [], []>} : vector<16x32xf32>, vector<32x64xf32>, vector<16x64xf32> -> vector<16x64xf32>
    %cst_83 = arith.constant 0.000000e+00 : f32
    %173 = vector.broadcast %cst_83 : f32 to vector<16x64xf32>
    %174 = arith.maximumf %172, %173 : vector<16x64xf32>
    %c1_84 = arith.constant 1 : index
    %c0_85 = arith.constant 0 : index
    %c0_86 = arith.constant 0 : index
    %175 = vector.load %arg5[%c1_84, %c0_85, %c0_86] : memref<2x64x32xf32, #tpu.memory_space<vmem>>, vector<1x64x32xf32>
    %176 = vector.shape_cast %175 : vector<1x64x32xf32> to vector<64x32xf32>
    %cst_87 = arith.constant dense<0.000000e+00> : vector<16x32xf32>
    %177 = tpu.matmul %174, %176, %cst_87 {dimension_numbers = #tpu.dot_dimension_numbers<[1], [0], [0], [1], [0, 0, 1, 1], [], []>} : vector<16x64xf32>, vector<64x32xf32>, vector<16x32xf32> -> vector<16x32xf32>
    %178 = arith.addf %177, %169 : vector<16x32xf32>
    %c1_88 = arith.constant 1 : index
    %c0_89 = arith.constant 0 : index
    %c0_90 = arith.constant 0 : index
    %179 = vector.load %arg8[%c1_88, %c0_89, %c0_90] : memref<2x1x32xf32, #tpu.memory_space<vmem>>, vector<1x1x32xf32>
    %180 = vector.shape_cast %179 : vector<1x1x32xf32> to vector<1x32xf32>
    %c1_91 = arith.constant 1 : index
    %c0_92 = arith.constant 0 : index
    %c0_93 = arith.constant 0 : index
    %181 = vector.load %arg9[%c1_91, %c0_92, %c0_93] : memref<2x1x32xf32, #tpu.memory_space<vmem>>, vector<1x1x32xf32>
    %182 = vector.shape_cast %181 : vector<1x1x32xf32> to vector<1x32xf32>
    %cst_94 = arith.constant dense<0.000000e+00> : vector<16xf32>
    %183 = vector.multi_reduction <add>, %178, %cst_94 [1] : vector<16x32xf32> to vector<16xf32>
    %184 = vector.shape_cast %183 : vector<16xf32> to vector<16x1xf32>
    %cst_95 = arith.constant 3.125000e-02 : f32
    %185 = vector.broadcast %cst_95 : f32 to vector<16x1xf32>
    %186 = arith.mulf %184, %185 : vector<16x1xf32>
    %187 = arith.mulf %178, %178 : vector<16x32xf32>
    %cst_96 = arith.constant dense<0.000000e+00> : vector<16xf32>
    %188 = vector.multi_reduction <add>, %187, %cst_96 [1] : vector<16x32xf32> to vector<16xf32>
    %189 = vector.shape_cast %188 : vector<16xf32> to vector<16x1xf32>
    %cst_97 = arith.constant 3.125000e-02 : f32
    %190 = vector.broadcast %cst_97 : f32 to vector<16x1xf32>
    %191 = arith.mulf %189, %190 : vector<16x1xf32>
    %192 = arith.mulf %186, %186 : vector<16x1xf32>
    %193 = arith.subf %191, %192 : vector<16x1xf32>
    %194 = vector.broadcast %186 : vector<16x1xf32> to vector<16x32xf32>
    %195 = arith.subf %178, %194 : vector<16x32xf32>
    %cst_98 = arith.constant 9.99999974E-6 : f32
    %196 = vector.broadcast %cst_98 : f32 to vector<16x1xf32>
    %197 = arith.addf %193, %196 : vector<16x1xf32>
    %198 = math.rsqrt %197 : vector<16x1xf32>
    %199 = vector.broadcast %198 : vector<16x1xf32> to vector<16x32xf32>
    %200 = arith.mulf %195, %199 : vector<16x32xf32>
    %201 = vector.broadcast %180 : vector<1x32xf32> to vector<16x32xf32>
    %202 = arith.mulf %200, %201 : vector<16x32xf32>
    %203 = vector.broadcast %182 : vector<1x32xf32> to vector<16x32xf32>
    %204 = arith.addf %202, %203 : vector<16x32xf32>
    %c0_99 = arith.constant 0 : index
    %c0_100 = arith.constant 0 : index
    %205 = vector.load %arg10[%c0_99, %c0_100] : memref<16x32xf32, #tpu.memory_space<vmem>>, vector<16x32xf32>
    tpu.vector_store %arg10[%c0_99, %c0_100], %204 {strides = array<i32>} : memref<16x32xf32, #tpu.memory_space<vmem>>, vector<16x32xf32>,
    return
  }
}

</mosaic_0001>

<llo_original>
// kernel: tpu_custom_call.1
$region0: #{tpu_custom_call.1}
  #allocation0 [shape = 'u32[]', space=smem, size = 0x4, offset = 0x4, fixed_abs, tag = 'smem constant byte address 0x4 - core index']
  #allocation1 [shape = 'u32[72,128]{1,0:T(1,128)}', space=vmem, size = 0x9000, scoped, tag = 'internal scratch']
  %s0 = inlined_call_operand.hbm [shape: f32[16,32], index: 0, kind: input, shape index: {}]
  %s1 = inlined_call_operand.hbm [shape: f32[16,32], index: 1, kind: input, shape index: {}]
  %s2 = inlined_call_operand.vmem [shape: f32[2,32,96], index: 2, kind: input, shape index: {}]
  %s3 = inlined_call_operand.vmem [shape: f32[2,32,32], index: 3, kind: input, shape index: {}]
  %s4 = inlined_call_operand.vmem [shape: f32[2,32,64], index: 4, kind: input, shape index: {}]
  %s5 = inlined_call_operand.vmem [shape: f32[2,64,32], index: 5, kind: input, shape index: {}]
  %s6 = inlined_call_operand.vmem [shape: f32[2,1,32], index: 6, kind: input, shape index: {}]
  %s7 = inlined_call_operand.vmem [shape: f32[2,1,32], index: 7, kind: input, shape index: {}]
  %s8 = inlined_call_operand.hbm [shape: f32[2,1,32], index: 8, kind: input, shape index: {}]
  %s9 = inlined_call_operand.vmem [shape: f32[2,1,32], index: 9, kind: input, shape index: {}]
  %s10 = inlined_call_operand.hbm [shape: f32[16,32], index: 10, kind: output, shape index: {0}]
  %s11 = inlined_call_operand.hbm [shape: f32[2,2,4,8,8], index: 11, kind: output, shape index: {1}]
  %12 = xla_tuple %s10, %s11
  %s13 = sld [smem:[#allocation0]]
  $region70: #{tpu_custom_call.1} parent=0
    _
  %s15 = ssub.s32 1, %s13
  %s16 = scalar_select 0, %s15, %s13
  $region1: #{tpu_custom_call.1} parent=0
    #allocation2 [shape = 'u8[8192]{0}', space=vmem, size = 0x2000, scoped, tag = 'input window, operand 0, single buffered']
    #allocation3 [shape = 's32[1]{0}', space=sflag, size = 0x4, scoped, tag = 'scoped memory for tpu_custom_call.1']
    #allocation4 [shape = 's32[1]{0}', space=sflag, size = 0x4, scoped, tag = 'scoped memory for tpu_custom_call.1']
    #allocation5 [shape = 'u8[8192]{0}', space=vmem, size = 0x2000, scoped, tag = 'input window, operand 1, single buffered']
    #allocation6 [shape = 's32[1]{0}', space=sflag, size = 0x4, scoped, tag = 'scoped memory for tpu_custom_call.1']
    #allocation7 [shape = 'u8[1024]{0}', space=vmem, size = 0x400, scoped, tag = 'input window, operand 8, single buffered']
    #allocation8 [shape = 'u8[8192]{0}', space=vmem, size = 0x2000, scoped, tag = 'output window, operand 0, single buffered']
    #allocation9 [shape = 'u8[65536]{0}', space=vmem, size = 0x10000, scoped, tag = 'output window, operand 1, single buffered']
    #allocation10 [shape = 's32[1]{0}', space=sflag, size = 0x4, scoped, tag = 'scoped memory for tpu_custom_call.1']
    %17 = vsyncpa [#allocation3], 0
    %18 = vsyncpa [#allocation6], 0
    %19 = vsyncpa [#allocation4], 0
    %20 = vsyncpa [#allocation10], 0
    // Predicated region
    $region2: #{tpu_custom_call.1} parent=1 // pred_check
      _
    $region3: #{tpu_custom_call.1} parent=1 // pred_check_branch
      %22 = sbr.rel (0) target = $region5
    $region4: #{tpu_custom_call.1} parent=1 // pred_region
      %24 = vsyncadd [#allocation3], 0
      %s25 = sshll.u32 %s0, 4
      %s26 = int_to_ptr.hbm [resolvable:$true] %s25
      %s27 = sshll.u32 [#allocation2], 4
      %s28 = int_to_ptr.vmem [resolvable:$true] %s27
      %33 = dma.hbm_to_vmem [thread:$0]  %s26, 256, %s28, [#allocation3], 128, 128, 8
    $region5: #{tpu_custom_call.1} parent=1 // pred_fallthru
      _
    // Predicated region
    $region6: #{tpu_custom_call.1} parent=1 // pred_check
      _
    $region7: #{tpu_custom_call.1} parent=1 // pred_check_branch
      %35 = sbr.rel (0) target = $region9
    $region8: #{tpu_custom_call.1} parent=1 // pred_region
      %37 = vsyncadd [#allocation6], 0
      %s38 = sshll.u32 %s1, 4
      %s39 = int_to_ptr.hbm [resolvable:$true] %s38
      %s40 = sshll.u32 [#allocation5], 4
      %s41 = int_to_ptr.vmem [resolvable:$true] %s40
      %46 = dma.hbm_to_vmem [thread:$0]  %s39, 256, %s41, [#allocation6], 128, 128, 8
    $region9: #{tpu_custom_call.1} parent=1 // pred_fallthru
      _
    // Predicated region
    $region10: #{tpu_custom_call.1} parent=1 // pred_check
      _
    $region11: #{tpu_custom_call.1} parent=1 // pred_check_branch
      %48 = sbr.rel (0) target = $region13
    $region12: #{tpu_custom_call.1} parent=1 // pred_region
      _
    $region13: #{tpu_custom_call.1} parent=1 // pred_fallthru
      _
    // Predicated region
    $region14: #{tpu_custom_call.1} parent=1 // pred_check
      _
    $region15: #{tpu_custom_call.1} parent=1 // pred_check_branch
      %50 = sbr.rel (0) target = $region17
    $region16: #{tpu_custom_call.1} parent=1 // pred_region
      _
    $region17: #{tpu_custom_call.1} parent=1 // pred_fallthru
      _
    // Predicated region
    $region18: #{tpu_custom_call.1} parent=1 // pred_check
      _
    $region19: #{tpu_custom_call.1} parent=1 // pred_check_branch
      %52 = sbr.rel (0) target = $region21
    $region20: #{tpu_custom_call.1} parent=1 // pred_region
      _
    $region21: #{tpu_custom_call.1} parent=1 // pred_fallthru
      _
    // Predicated region
    $region22: #{tpu_custom_call.1} parent=1 // pred_check
      _
    $region23: #{tpu_custom_call.1} parent=1 // pred_check_branch
      %54 = sbr.rel (0) target = $region25
    $region24: #{tpu_custom_call.1} parent=1 // pred_region
      _
    $region25: #{tpu_custom_call.1} parent=1 // pred_fallthru
      _
    // Predicated region
    $region26: #{tpu_custom_call.1} parent=1 // pred_check
      _
    $region27: #{tpu_custom_call.1} parent=1 // pred_check_branch
      %56 = sbr.rel (0) target = $region29
    $region28: #{tpu_custom_call.1} parent=1 // pred_region
      _
    $region29: #{tpu_custom_call.1} parent=1 // pred_fallthru
      _
    // Predicated region
    $region30: #{tpu_custom_call.1} parent=1 // pred_check
      _
    $region31: #{tpu_custom_call.1} parent=1 // pred_check_branch
      %58 = sbr.rel (0) target = $region33
    $region32: #{tpu_custom_call.1} parent=1 // pred_region
      _
    $region33: #{tpu_custom_call.1} parent=1 // pred_fallthru
      _
    // Predicated region
    $region34: #{tpu_custom_call.1} parent=1 // pred_check
      _
    $region35: #{tpu_custom_call.1} parent=1 // pred_check_branch
      %60 = sbr.rel (0) target = $region37
    $region36: #{tpu_custom_call.1} parent=1 // pred_region
      %62 = vsyncadd [#allocation6], 0
      %s63 = sshll.u32 %s8, 4
      %s64 = int_to_ptr.hbm [resolvable:$true] %s63
      %s65 = sshll.u32 [#allocation7], 4
      %s66 = int_to_ptr.vmem [resolvable:$true] %s65
      %71 = dma.hbm_to_vmem [thread:$0]  %s64, 32, %s66, [#allocation6], 16, 16, 1
    $region37: #{tpu_custom_call.1} parent=1 // pred_fallthru
      _
    // Predicated region
    $region38: #{tpu_custom_call.1} parent=1 // pred_check
      _
    $region39: #{tpu_custom_call.1} parent=1 // pred_check_branch
      %73 = sbr.rel (0) target = $region41
    $region40: #{tpu_custom_call.1} parent=1 // pred_region
      _
    $region41: #{tpu_custom_call.1} parent=1 // pred_fallthru
      _
    // Predicated region
    $region42: #{tpu_custom_call.1} parent=1 // pred_check
      _
    $region43: #{tpu_custom_call.1} parent=1 // pred_check_branch
      %75 = sbr.rel (0) target = $region45
    $region44: #{tpu_custom_call.1} parent=1 // pred_region
      %77 = dma.done [#allocation3], 256
    $region45: #{tpu_custom_call.1} parent=1 // pred_fallthru
      _
    // Predicated region
    $region46: #{tpu_custom_call.1} parent=1 // pred_check
      _
    $region47: #{tpu_custom_call.1} parent=1 // pred_check_branch
      %79 = sbr.rel (0) target = $region49
    $region48: #{tpu_custom_call.1} parent=1 // pred_region
      %81 = dma.done [#allocation6], 256
    $region49: #{tpu_custom_call.1} parent=1 // pred_fallthru
      _
    // Predicated region
    $region50: #{tpu_custom_call.1} parent=1 // pred_check
      _
    $region51: #{tpu_custom_call.1} parent=1 // pred_check_branch
      %83 = sbr.rel (0) target = $region53
    $region52: #{tpu_custom_call.1} parent=1 // pred_region
      %85 = dma.done [#allocation6], 32
    $region53: #{tpu_custom_call.1} parent=1 // pred_fallthru
      _
    %v86 = vld [vmem:[#allocation2] sm:$0xff]
    %v87 = vld [vmem:[#allocation2 + $0x8] sm:$0xff]
    %v88 = vld [vmem:[#allocation5] sm:$0xff]
    %v89 = vld [vmem:[#allocation5 + $0x8] sm:$0xff]
    %v90 = vadd.f32 %v86, %v88
    %v91 = vadd.f32 %v87, %v89
    %v92 = vld [vmem:[%s2] sm:$0xff]
    %v93 = vld [vmem:[%s2 + $0x8] sm:$0xff]
    %v94 = vld [vmem:[%s2 + $0x10] sm:$0xff]
    %v95 = vld [vmem:[%s2 + $0x18] sm:$0xff]
    %vm96 = vcmask 261120
    %v98 = vsel %vm96, %v90, 0
    %v101 = vsel %vm96, %v91, 0
    %103 = vmatpush.msra.mxu0 0.0
    %104 = vmatpush.msra.mxu0 0.0
    %105 = vmatpush.msra.mxu0 0.0
    %106 = vmatpush.msra.mxu0 0.0
    %107 = vmatpush.msra.mxu0 0.0
    %108 = vmatpush.msra.mxu0 0.0
    %109 = vmatpush.msra.mxu0 0.0
    %110 = vmatpush.msra.mxu0 0.0
    %111 = vmatpush.msra.mxu0 0.0
    %112 = vmatpush.msra.mxu0 0.0
    %113 = vmatpush.msra.mxu0 0.0
    %114 = vmatpush.msra.mxu0 0.0
    %115 = vmatpush.msra.mxu0 %v95
    %116 = vmatpush.msra.mxu0 %v94
    %117 = vmatpush.msra.mxu0 %v93
    %118 = vmatpush.msra.mxu0 %v92
    %119 = vmatmul.f32.gmra.mxu0 %v98
    %v120 = vpop.f32.mrf.mxu0
    %v121 = vadd.f32 0.0, %v120
    %122 = vmatmul.f32.gmra.mxu0 %v101
    %v123 = vpop.f32.mrf.mxu0
    %v124 = vadd.f32 0.0, %v123
    %125 = vdwg.mxu0
    %128 = vrot.lane.b32.xlu0 %v121, 120
    %v129 = vpop.permute.xlu0 %128
    %130 = vrot.lane.b32.xlu0 %v124, 120
    %v131 = vpop.permute.xlu0 %130
    %134 = vrot.lane.b32.xlu0 %v121, 112
    %v135 = vpop.permute.xlu0 %134
    %136 = vrot.lane.b32.xlu0 %v124, 112
    %v137 = vpop.permute.xlu0 %136
    %140 = vrot.lane.b32.xlu0 %v121, 104
    %v141 = vpop.permute.xlu0 %140
    %142 = vrot.lane.b32.xlu0 %v124, 104
    %v143 = vpop.permute.xlu0 %142
    %v146 = vrot.slane %v135, 4
    %vm147 = vcmask 1047556
    %v148 = vsel %vm147, %v146, %v121
    %v149 = vrot.slane %v121, 4
    %v150 = vsel %vm147, %v135, %v149
    %v152 = vunpack.c.l.s4 1983009808
    %v153 = vunpack.c.0.s8 %v152
    %v154 = vperm.slane %v148, %v153
    %v156 = vunpack.c.l.s4 1983009808
    %v157 = vunpack.c.0.s8 %v156
    %v158 = vperm.slane %v150, %v157
    %v159 = vrot.slane %v141, 4
    %v160 = vsel %vm147, %v159, %v129
    %v161 = vrot.slane %v129, 4
    %v162 = vsel %vm147, %v141, %v161
    %v164 = vunpack.c.l.s4 1983009808
    %v165 = vunpack.c.0.s8 %v164
    %v166 = vperm.slane %v160, %v165
    %v168 = vunpack.c.l.s4 1983009808
    %v169 = vunpack.c.0.s8 %v168
    %v170 = vperm.slane %v162, %v169
    %v171 = vrot.slane %v166, 4
    %v172 = vsel %vm147, %v171, %v154
    %v173 = vrot.slane %v154, 4
    %v174 = vsel %vm147, %v166, %v173
    %v176 = vunpack.c.l.s4 1934713408
    %v177 = vunpack.c.0.s8 %v176
    %v178 = vperm.slane %v172, %v177
    %v180 = vunpack.c.l.s4 1934713408
    %v181 = vunpack.c.0.s8 %v180
    %v182 = vperm.slane %v174, %v181
    %v183 = vrot.slane %v170, 4
    %v184 = vsel %vm147, %v183, %v158
    %v185 = vrot.slane %v158, 4
    %v186 = vsel %vm147, %v170, %v185
    %v188 = vunpack.c.l.s4 1934713408
    %v189 = vunpack.c.0.s8 %v188
    %v190 = vperm.slane %v184, %v189
    %v192 = vunpack.c.l.s4 1934713408
    %v193 = vunpack.c.0.s8 %v192
    %v194 = vperm.slane %v186, %v193
    %v195 = vrot.slane %v178, 4
    %v196 = vsel %vm147, 0.0, %v195
    %v197 = vrot.slane %v182, 4
    %v198 = vsel %vm147, 0.0, %v197
    %v199 = vrot.slane %v190, 4
    %v200 = vsel %vm147, 0.0, %v199
    %v201 = vrot.slane %v194, 4
    %v202 = vsel %vm147, 0.0, %v201
    %v203 = vrot.slane %v137, 4
    %v204 = vsel %vm147, %v203, %v124
    %v205 = vrot.slane %v124, 4
    %v206 = vsel %vm147, %v137, %v205
    %v208 = vunpack.c.l.s4 1983009808
    %v209 = vunpack.c.0.s8 %v208
    %v210 = vperm.slane %v204, %v209
    %v212 = vunpack.c.l.s4 1983009808
    %v213 = vunpack.c.0.s8 %v212
    %v214 = vperm.slane %v206, %v213
    %v215 = vrot.slane %v143, 4
    %v216 = vsel %vm147, %v215, %v131
    %v217 = vrot.slane %v131, 4
    %v218 = vsel %vm147, %v143, %v217
    %v220 = vunpack.c.l.s4 1983009808
    %v221 = vunpack.c.0.s8 %v220
    %v222 = vperm.slane %v216, %v221
    %v224 = vunpack.c.l.s4 1983009808
    %v225 = vunpack.c.0.s8 %v224
    %v226 = vperm.slane %v218, %v225
    %v227 = vrot.slane %v222, 4
    %v228 = vsel %vm147, %v227, %v210
    %v229 = vrot.slane %v210, 4
    %v230 = vsel %vm147, %v222, %v229
    %v232 = vunpack.c.l.s4 1934713408
    %v233 = vunpack.c.0.s8 %v232
    %v234 = vperm.slane %v228, %v233
    %v236 = vunpack.c.l.s4 1934713408
    %v237 = vunpack.c.0.s8 %v236
    %v238 = vperm.slane %v230, %v237
    %v239 = vrot.slane %v226, 4
    %v240 = vsel %vm147, %v239, %v214
    %v241 = vrot.slane %v214, 4
    %v242 = vsel %vm147, %v226, %v241
    %v244 = vunpack.c.l.s4 1934713408
    %v245 = vunpack.c.0.s8 %v244
    %v246 = vperm.slane %v240, %v245
    %v248 = vunpack.c.l.s4 1934713408
    %v249 = vunpack.c.0.s8 %v248
    %v250 = vperm.slane %v242, %v249
    %v251 = vrot.slane %v234, 4
    %v252 = vsel %vm147, 0.0, %v251
    %v253 = vrot.slane %v238, 4
    %v254 = vsel %vm147, 0.0, %v253
    %v255 = vrot.slane %v246, 4
    %v256 = vsel %vm147, 0.0, %v255
    %v257 = vrot.slane %v250, 4
    %v258 = vsel %vm147, 0.0, %v257
    %v259 = vsel %vm147, %v197, %v178
    %v261 = vunpack.c.l.s4 1983009808
    %v262 = vunpack.c.0.s8 %v261
    %v263 = vperm.slane %v259, %v262
    %v264 = vrot.slane %v198, 4
    %v265 = vsel %vm147, %v264, %v196
    %v267 = vunpack.c.l.s4 1983009808
    %v268 = vunpack.c.0.s8 %v267
    %v269 = vperm.slane %v265, %v268
    %v270 = vsel %vm147, %v201, %v190
    %v272 = vunpack.c.l.s4 1983009808
    %v273 = vunpack.c.0.s8 %v272
    %v274 = vperm.slane %v270, %v273
    %v275 = vrot.slane %v202, 4
    %v276 = vsel %vm147, %v275, %v200
    %v278 = vunpack.c.l.s4 1983009808
    %v279 = vunpack.c.0.s8 %v278
    %v280 = vperm.slane %v276, %v279
    %v281 = vrot.slane %v269, 4
    %v282 = vsel %vm147, %v281, %v263
    %v283 = vrot.slane %v263, 4
    %v284 = vsel %vm147, %v269, %v283
    %v286 = vunpack.c.l.s4 1934713408
    %v287 = vunpack.c.0.s8 %v286
    %v288 = vperm.slane %v282, %v287
    %v290 = vunpack.c.l.s4 1934713408
    %v291 = vunpack.c.0.s8 %v290
    %v292 = vperm.slane %v284, %v291
    %v293 = vrot.slane %v280, 4
    %v294 = vsel %vm147, %v293, %v274
    %v295 = vrot.slane %v274, 4
    %v296 = vsel %vm147, %v280, %v295
    %v298 = vunpack.c.l.s4 1934713408
    %v299 = vunpack.c.0.s8 %v298
    %v300 = vperm.slane %v294, %v299
    %v302 = vunpack.c.l.s4 1934713408
    %v303 = vunpack.c.0.s8 %v302
    %v304 = vperm.slane %v296, %v303
    %v305 = vrot.slane %v300, 4
    %v306 = vsel %vm147, %v305, %v288
    %v307 = vrot.slane %v288, 4
    %v308 = vsel %vm147, %v300, %v307
    %v309 = vrot.slane %v304, 4
    %v310 = vsel %vm147, %v309, %v292
    %v311 = vrot.slane %v292, 4
    %v312 = vsel %vm147, %v304, %v311
    %v313 = vsel %vm147, %v253, %v234
    %v315 = vunpack.c.l.s4 1983009808
    %v316 = vunpack.c.0.s8 %v315
    %v317 = vperm.slane %v313, %v316
    %v318 = vrot.slane %v254, 4
    %v319 = vsel %vm147, %v318, %v252
    %v321 = vunpack.c.l.s4 1983009808
    %v322 = vunpack.c.0.s8 %v321
    %v323 = vperm.slane %v319, %v322
    %v324 = vsel %vm147, %v257, %v246
    %v326 = vunpack.c.l.s4 1983009808
    %v327 = vunpack.c.0.s8 %v326
    %v328 = vperm.slane %v324, %v327
    %v329 = vrot.slane %v258, 4
    %v330 = vsel %vm147, %v329, %v256
    %v332 = vunpack.c.l.s4 1983009808
    %v333 = vunpack.c.0.s8 %v332
    %v334 = vperm.slane %v330, %v333
    %v335 = vrot.slane %v323, 4
    %v336 = vsel %vm147, %v335, %v317
    %v337 = vrot.slane %v317, 4
    %v338 = vsel %vm147, %v323, %v337
    %v340 = vunpack.c.l.s4 1934713408
    %v341 = vunpack.c.0.s8 %v340
    %v342 = vperm.slane %v336, %v341
    %v344 = vunpack.c.l.s4 1934713408
    %v345 = vunpack.c.0.s8 %v344
    %v346 = vperm.slane %v338, %v345
    %v347 = vrot.slane %v334, 4
    %v348 = vsel %vm147, %v347, %v328
    %v349 = vrot.slane %v328, 4
    %v350 = vsel %vm147, %v334, %v349
    %v352 = vunpack.c.l.s4 1934713408
    %v353 = vunpack.c.0.s8 %v352
    %v354 = vperm.slane %v348, %v353
    %v356 = vunpack.c.l.s4 1934713408
    %v357 = vunpack.c.0.s8 %v356
    %v358 = vperm.slane %v350, %v357
    %v359 = vrot.slane %v354, 4
    %v360 = vsel %vm147, %v359, %v342
    %v361 = vrot.slane %v342, 4
    %v362 = vsel %vm147, %v354, %v361
    %v363 = vrot.slane %v358, 4
    %v364 = vsel %vm147, %v363, %v346
    %v365 = vrot.slane %v346, 4
    %v366 = vsel %vm147, %v358, %v365
    %367 = vrot.lane.b32.xlu0 %v121, 96
    %v368 = vpop.permute.xlu0 %367
    %369 = vrot.lane.b32.xlu0 %v124, 96
    %v370 = vpop.permute.xlu0 %369
    %371 = vrot.lane.b32.xlu0 %v129, 96
    %v372 = vpop.permute.xlu0 %371
    %373 = vrot.lane.b32.xlu0 %v131, 96
    %v374 = vpop.permute.xlu0 %373
    %375 = vrot.lane.b32.xlu0 %v135, 96
    %v376 = vpop.permute.xlu0 %375
    %377 = vrot.lane.b32.xlu0 %v137, 96
    %v378 = vpop.permute.xlu0 %377
    %379 = vrot.lane.b32.xlu0 %v141, 96
    %v380 = vpop.permute.xlu0 %379
    %381 = vrot.lane.b32.xlu0 %v143, 96
    %v382 = vpop.permute.xlu0 %381
    %v391 = vrot.slane %v376, 4
    %v392 = vsel %vm147, %v391, %v368
    %v393 = vrot.slane %v368, 4
    %v394 = vsel %vm147, %v376, %v393
    %v396 = vunpack.c.l.s4 1983009808
    %v397 = vunpack.c.0.s8 %v396
    %v398 = vperm.slane %v392, %v397
    %v400 = vunpack.c.l.s4 1983009808
    %v401 = vunpack.c.0.s8 %v400
    %v402 = vperm.slane %v394, %v401
    %v403 = vrot.slane %v380, 4
    %v404 = vsel %vm147, %v403, %v372
    %v405 = vrot.slane %v372, 4
    %v406 = vsel %vm147, %v380, %v405
    %v408 = vunpack.c.l.s4 1983009808
    %v409 = vunpack.c.0.s8 %v408
    %v410 = vperm.slane %v404, %v409
    %v412 = vunpack.c.l.s4 1983009808
    %v413 = vunpack.c.0.s8 %v412
    %v414 = vperm.slane %v406, %v413
    %v415 = vrot.slane %v410, 4
    %v416 = vsel %vm147, %v415, %v398
    %v417 = vrot.slane %v398, 4
    %v418 = vsel %vm147, %v410, %v417
    %v420 = vunpack.c.l.s4 1934713408
    %v421 = vunpack.c.0.s8 %v420
    %v422 = vperm.slane %v416, %v421
    %v424 = vunpack.c.l.s4 1934713408
    %v425 = vunpack.c.0.s8 %v424
    %v426 = vperm.slane %v418, %v425
    %v427 = vrot.slane %v414, 4
    %v428 = vsel %vm147, %v427, %v402
    %v429 = vrot.slane %v402, 4
    %v430 = vsel %vm147, %v414, %v429
    %v432 = vunpack.c.l.s4 1934713408
    %v433 = vunpack.c.0.s8 %v432
    %v434 = vperm.slane %v428, %v433
    %v436 = vunpack.c.l.s4 1934713408
    %v437 = vunpack.c.0.s8 %v436
    %v438 = vperm.slane %v430, %v437
    %v439 = vrot.slane %v422, 4
    %v440 = vsel %vm147, 0.0, %v439
    %v441 = vrot.slane %v426, 4
    %v442 = vsel %vm147, 0.0, %v441
    %v443 = vrot.slane %v434, 4
    %v444 = vsel %vm147, 0.0, %v443
    %v445 = vrot.slane %v438, 4
    %v446 = vsel %vm147, 0.0, %v445
    %v447 = vrot.slane %v378, 4
    %v448 = vsel %vm147, %v447, %v370
    %v449 = vrot.slane %v370, 4
    %v450 = vsel %vm147, %v378, %v449
    %v452 = vunpack.c.l.s4 1983009808
    %v453 = vunpack.c.0.s8 %v452
    %v454 = vperm.slane %v448, %v453
    %v456 = vunpack.c.l.s4 1983009808
    %v457 = vunpack.c.0.s8 %v456
    %v458 = vperm.slane %v450, %v457
    %v459 = vrot.slane %v382, 4
    %v460 = vsel %vm147, %v459, %v374
    %v461 = vrot.slane %v374, 4
    %v462 = vsel %vm147, %v382, %v461
    %v464 = vunpack.c.l.s4 1983009808
    %v465 = vunpack.c.0.s8 %v464
    %v466 = vperm.slane %v460, %v465
    %v468 = vunpack.c.l.s4 1983009808
    %v469 = vunpack.c.0.s8 %v468
    %v470 = vperm.slane %v462, %v469
    %v471 = vrot.slane %v466, 4
    %v472 = vsel %vm147, %v471, %v454
    %v473 = vrot.slane %v454, 4
    %v474 = vsel %vm147, %v466, %v473
    %v476 = vunpack.c.l.s4 1934713408
    %v477 = vunpack.c.0.s8 %v476
    %v478 = vperm.slane %v472, %v477
    %v480 = vunpack.c.l.s4 1934713408
    %v481 = vunpack.c.0.s8 %v480
    %v482 = vperm.slane %v474, %v481
    %v483 = vrot.slane %v470, 4
    %v484 = vsel %vm147, %v483, %v458
    %v485 = vrot.slane %v458, 4
    %v486 = vsel %vm147, %v470, %v485
    %v488 = vunpack.c.l.s4 1934713408
    %v489 = vunpack.c.0.s8 %v488
    %v490 = vperm.slane %v484, %v489
    %v492 = vunpack.c.l.s4 1934713408
    %v493 = vunpack.c.0.s8 %v492
    %v494 = vperm.slane %v486, %v493
    %v495 = vrot.slane %v478, 4
    %v496 = vsel %vm147, 0.0, %v495
    %v497 = vrot.slane %v482, 4
    %v498 = vsel %vm147, 0.0, %v497
    %v499 = vrot.slane %v490, 4
    %v500 = vsel %vm147, 0.0, %v499
    %v501 = vrot.slane %v494, 4
    %v502 = vsel %vm147, 0.0, %v501
    %v503 = vsel %vm147, %v441, %v422
    %v505 = vunpack.c.l.s4 1983009808
    %v506 = vunpack.c.0.s8 %v505
    %v507 = vperm.slane %v503, %v506
    %v508 = vrot.slane %v442, 4
    %v509 = vsel %vm147, %v508, %v440
    %v511 = vunpack.c.l.s4 1983009808
    %v512 = vunpack.c.0.s8 %v511
    %v513 = vperm.slane %v509, %v512
    %v514 = vsel %vm147, %v445, %v434
    %v516 = vunpack.c.l.s4 1983009808
    %v517 = vunpack.c.0.s8 %v516
    %v518 = vperm.slane %v514, %v517
    %v519 = vrot.slane %v446, 4
    %v520 = vsel %vm147, %v519, %v444
    %v522 = vunpack.c.l.s4 1983009808
    %v523 = vunpack.c.0.s8 %v522
    %v524 = vperm.slane %v520, %v523
    %v525 = vrot.slane %v513, 4
    %v526 = vsel %vm147, %v525, %v507
    %v527 = vrot.slane %v507, 4
    %v528 = vsel %vm147, %v513, %v527
    %v530 = vunpack.c.l.s4 1934713408
    %v531 = vunpack.c.0.s8 %v530
    %v532 = vperm.slane %v526, %v531
    %v534 = vunpack.c.l.s4 1934713408
    %v535 = vunpack.c.0.s8 %v534
    %v536 = vperm.slane %v528, %v535
    %v537 = vrot.slane %v524, 4
    %v538 = vsel %vm147, %v537, %v518
    %v539 = vrot.slane %v518, 4
    %v540 = vsel %vm147, %v524, %v539
    %v542 = vunpack.c.l.s4 1934713408
    %v543 = vunpack.c.0.s8 %v542
    %v544 = vperm.slane %v538, %v543
    %v546 = vunpack.c.l.s4 1934713408
    %v547 = vunpack.c.0.s8 %v546
    %v548 = vperm.slane %v540, %v547
    %v549 = vrot.slane %v544, 4
    %v550 = vsel %vm147, %v549, %v532
    %v551 = vrot.slane %v532, 4
    %v552 = vsel %vm147, %v544, %v551
    %v553 = vrot.slane %v548, 4
    %v554 = vsel %vm147, %v553, %v536
    %v555 = vrot.slane %v536, 4
    %v556 = vsel %vm147, %v548, %v555
    %v557 = vsel %vm147, %v497, %v478
    %v559 = vunpack.c.l.s4 1983009808
    %v560 = vunpack.c.0.s8 %v559
    %v561 = vperm.slane %v557, %v560
    %v562 = vrot.slane %v498, 4
    %v563 = vsel %vm147, %v562, %v496
    %v565 = vunpack.c.l.s4 1983009808
    %v566 = vunpack.c.0.s8 %v565
    %v567 = vperm.slane %v563, %v566
    %v568 = vsel %vm147, %v501, %v490
    %v570 = vunpack.c.l.s4 1983009808
    %v571 = vunpack.c.0.s8 %v570
    %v572 = vperm.slane %v568, %v571
    %v573 = vrot.slane %v502, 4
    %v574 = vsel %vm147, %v573, %v500
    %v576 = vunpack.c.l.s4 1983009808
    %v577 = vunpack.c.0.s8 %v576
    %v578 = vperm.slane %v574, %v577
    %v579 = vrot.slane %v567, 4
    %v580 = vsel %vm147, %v579, %v561
    %v581 = vrot.slane %v561, 4
    %v582 = vsel %vm147, %v567, %v581
    %v584 = vunpack.c.l.s4 1934713408
    %v585 = vunpack.c.0.s8 %v584
    %v586 = vperm.slane %v580, %v585
    %v588 = vunpack.c.l.s4 1934713408
    %v589 = vunpack.c.0.s8 %v588
    %v590 = vperm.slane %v582, %v589
    %v591 = vrot.slane %v578, 4
    %v592 = vsel %vm147, %v591, %v572
    %v593 = vrot.slane %v572, 4
    %v594 = vsel %vm147, %v578, %v593
    %v596 = vunpack.c.l.s4 1934713408
    %v597 = vunpack.c.0.s8 %v596
    %v598 = vperm.slane %v592, %v597
    %v600 = vunpack.c.l.s4 1934713408
    %v601 = vunpack.c.0.s8 %v600
    %v602 = vperm.slane %v594, %v601
    %v603 = vrot.slane %v598, 4
    %v604 = vsel %vm147, %v603, %v586
    %v605 = vrot.slane %v586, 4
    %v606 = vsel %vm147, %v598, %v605
    %v607 = vrot.slane %v602, 4
    %v608 = vsel %vm147, %v607, %v590
    %v609 = vrot.slane %v590, 4
    %v610 = vsel %vm147, %v602, %v609
    %611 = vrot.lane.b32.xlu0 %v121, 64
    %v612 = vpop.permute.xlu0 %611
    %613 = vrot.lane.b32.xlu0 %v124, 64
    %v614 = vpop.permute.xlu0 %613
    %615 = vrot.lane.b32.xlu0 %v129, 64
    %v616 = vpop.permute.xlu0 %615
    %617 = vrot.lane.b32.xlu0 %v131, 64
    %v618 = vpop.permute.xlu0 %617
    %619 = vrot.lane.b32.xlu0 %v135, 64
    %v620 = vpop.permute.xlu0 %619
    %621 = vrot.lane.b32.xlu0 %v137, 64
    %v622 = vpop.permute.xlu0 %621
    %623 = vrot.lane.b32.xlu0 %v141, 64
    %v624 = vpop.permute.xlu0 %623
    %625 = vrot.lane.b32.xlu0 %v143, 64
    %v626 = vpop.permute.xlu0 %625
    %v635 = vrot.slane %v620, 4
    %v636 = vsel %vm147, %v635, %v612
    %v637 = vrot.slane %v612, 4
    %v638 = vsel %vm147, %v620, %v637
    %v640 = vunpack.c.l.s4 1983009808
    %v641 = vunpack.c.0.s8 %v640
    %v642 = vperm.slane %v636, %v641
    %v644 = vunpack.c.l.s4 1983009808
    %v645 = vunpack.c.0.s8 %v644
    %v646 = vperm.slane %v638, %v645
    %v647 = vrot.slane %v624, 4
    %v648 = vsel %vm147, %v647, %v616
    %v649 = vrot.slane %v616, 4
    %v650 = vsel %vm147, %v624, %v649
    %v652 = vunpack.c.l.s4 1983009808
    %v653 = vunpack.c.0.s8 %v652
    %v654 = vperm.slane %v648, %v653
    %v656 = vunpack.c.l.s4 1983009808
    %v657 = vunpack.c.0.s8 %v656
    %v658 = vperm.slane %v650, %v657
    %v659 = vrot.slane %v654, 4
    %v660 = vsel %vm147, %v659, %v642
    %v661 = vrot.slane %v642, 4
    %v662 = vsel %vm147, %v654, %v661
    %v664 = vunpack.c.l.s4 1934713408
    %v665 = vunpack.c.0.s8 %v664
    %v666 = vperm.slane %v660, %v665
    %v668 = vunpack.c.l.s4 1934713408
    %v669 = vunpack.c.0.s8 %v668
    %v670 = vperm.slane %v662, %v669
    %v671 = vrot.slane %v658, 4
    %v672 = vsel %vm147, %v671, %v646
    %v673 = vrot.slane %v646, 4
    %v674 = vsel %vm147, %v658, %v673
    %v676 = vunpack.c.l.s4 1934713408
    %v677 = vunpack.c.0.s8 %v676
    %v678 = vperm.slane %v672, %v677
    %v680 = vunpack.c.l.s4 1934713408
    %v681 = vunpack.c.0.s8 %v680
    %v682 = vperm.slane %v674, %v681
    %v683 = vrot.slane %v666, 4
    %v684 = vsel %vm147, 0.0, %v683
    %v685 = vrot.slane %v670, 4
    %v686 = vsel %vm147, 0.0, %v685
    %v687 = vrot.slane %v678, 4
    %v688 = vsel %vm147, 0.0, %v687
    %v689 = vrot.slane %v682, 4
    %v690 = vsel %vm147, 0.0, %v689
    %v691 = vrot.slane %v622, 4
    %v692 = vsel %vm147, %v691, %v614
    %v693 = vrot.slane %v614, 4
    %v694 = vsel %vm147, %v622, %v693
    %v696 = vunpack.c.l.s4 1983009808
    %v697 = vunpack.c.0.s8 %v696
    %v698 = vperm.slane %v692, %v697
    %v700 = vunpack.c.l.s4 1983009808
    %v701 = vunpack.c.0.s8 %v700
    %v702 = vperm.slane %v694, %v701
    %v703 = vrot.slane %v626, 4
    %v704 = vsel %vm147, %v703, %v618
    %v705 = vrot.slane %v618, 4
    %v706 = vsel %vm147, %v626, %v705
    %v708 = vunpack.c.l.s4 1983009808
    %v709 = vunpack.c.0.s8 %v708
    %v710 = vperm.slane %v704, %v709
    %v712 = vunpack.c.l.s4 1983009808
    %v713 = vunpack.c.0.s8 %v712
    %v714 = vperm.slane %v706, %v713
    %v715 = vrot.slane %v710, 4
    %v716 = vsel %vm147, %v715, %v698
    %v717 = vrot.slane %v698, 4
    %v718 = vsel %vm147, %v710, %v717
    %v720 = vunpack.c.l.s4 1934713408
    %v721 = vunpack.c.0.s8 %v720
    %v722 = vperm.slane %v716, %v721
    %v724 = vunpack.c.l.s4 1934713408
    %v725 = vunpack.c.0.s8 %v724
    %v726 = vperm.slane %v718, %v725
    %v727 = vrot.slane %v714, 4
    %v728 = vsel %vm147, %v727, %v702
    %v729 = vrot.slane %v702, 4
    %v730 = vsel %vm147, %v714, %v729
    %v732 = vunpack.c.l.s4 1934713408
    %v733 = vunpack.c.0.s8 %v732
    %v734 = vperm.slane %v728, %v733
    %v736 = vunpack.c.l.s4 1934713408
    %v737 = vunpack.c.0.s8 %v736
    %v738 = vperm.slane %v730, %v737
    %v739 = vrot.slane %v722, 4
    %v740 = vsel %vm147, 0.0, %v739
    %v741 = vrot.slane %v726, 4
    %v742 = vsel %vm147, 0.0, %v741
    %v743 = vrot.slane %v734, 4
    %v744 = vsel %vm147, 0.0, %v743
    %v745 = vrot.slane %v738, 4
    %v746 = vsel %vm147, 0.0, %v745
    %v747 = vsel %vm147, %v685, %v666
    %v749 = vunpack.c.l.s4 1983009808
    %v750 = vunpack.c.0.s8 %v749
    %v751 = vperm.slane %v747, %v750
    %v752 = vrot.slane %v686, 4
    %v753 = vsel %vm147, %v752, %v684
    %v755 = vunpack.c.l.s4 1983009808
    %v756 = vunpack.c.0.s8 %v755
    %v757 = vperm.slane %v753, %v756
    %v758 = vsel %vm147, %v689, %v678
    %v760 = vunpack.c.l.s4 1983009808
    %v761 = vunpack.c.0.s8 %v760
    %v762 = vperm.slane %v758, %v761
    %v763 = vrot.slane %v690, 4
    %v764 = vsel %vm147, %v763, %v688
    %v766 = vunpack.c.l.s4 1983009808
    %v767 = vunpack.c.0.s8 %v766
    %v768 = vperm.slane %v764, %v767
    %v769 = vrot.slane %v757, 4
    %v770 = vsel %vm147, %v769, %v751
    %v771 = vrot.slane %v751, 4
    %v772 = vsel %vm147, %v757, %v771
    %v774 = vunpack.c.l.s4 1934713408
    %v775 = vunpack.c.0.s8 %v774
    %v776 = vperm.slane %v770, %v775
    %v778 = vunpack.c.l.s4 1934713408
    %v779 = vunpack.c.0.s8 %v778
    %v780 = vperm.slane %v772, %v779
    %v781 = vrot.slane %v768, 4
    %v782 = vsel %vm147, %v781, %v762
    %v783 = vrot.slane %v762, 4
    %v784 = vsel %vm147, %v768, %v783
    %v786 = vunpack.c.l.s4 1934713408
    %v787 = vunpack.c.0.s8 %v786
    %v788 = vperm.slane %v782, %v787
    %v790 = vunpack.c.l.s4 1934713408
    %v791 = vunpack.c.0.s8 %v790
    %v792 = vperm.slane %v784, %v791
    %v793 = vrot.slane %v788, 4
    %v794 = vsel %vm147, %v793, %v776
    %v795 = vrot.slane %v776, 4
    %v796 = vsel %vm147, %v788, %v795
    %v797 = vrot.slane %v792, 4
    %v798 = vsel %vm147, %v797, %v780
    %v799 = vrot.slane %v780, 4
    %v800 = vsel %vm147, %v792, %v799
    %v801 = vsel %vm147, %v741, %v722
    %v803 = vunpack.c.l.s4 1983009808
    %v804 = vunpack.c.0.s8 %v803
    %v805 = vperm.slane %v801, %v804
    %v806 = vrot.slane %v742, 4
    %v807 = vsel %vm147, %v806, %v740
    %v809 = vunpack.c.l.s4 1983009808
    %v810 = vunpack.c.0.s8 %v809
    %v811 = vperm.slane %v807, %v810
    %v812 = vsel %vm147, %v745, %v734
    %v814 = vunpack.c.l.s4 1983009808
    %v815 = vunpack.c.0.s8 %v814
    %v816 = vperm.slane %v812, %v815
    %v817 = vrot.slane %v746, 4
    %v818 = vsel %vm147, %v817, %v744
    %v820 = vunpack.c.l.s4 1983009808
    %v821 = vunpack.c.0.s8 %v820
    %v822 = vperm.slane %v818, %v821
    %v823 = vrot.slane %v811, 4
    %v824 = vsel %vm147, %v823, %v805
    %v825 = vrot.slane %v805, 4
    %v826 = vsel %vm147, %v811, %v825
    %v828 = vunpack.c.l.s4 1934713408
    %v829 = vunpack.c.0.s8 %v828
    %v830 = vperm.slane %v824, %v829
    %v832 = vunpack.c.l.s4 1934713408
    %v833 = vunpack.c.0.s8 %v832
    %v834 = vperm.slane %v826, %v833
    %v835 = vrot.slane %v822, 4
    %v836 = vsel %vm147, %v835, %v816
    %v837 = vrot.slane %v816, 4
    %v838 = vsel %vm147, %v822, %v837
    %v840 = vunpack.c.l.s4 1934713408
    %v841 = vunpack.c.0.s8 %v840
    %v842 = vperm.slane %v836, %v841
    %v844 = vunpack.c.l.s4 1934713408
    %v845 = vunpack.c.0.s8 %v844
    %v846 = vperm.slane %v838, %v845
    %v847 = vrot.slane %v842, 4
    %v848 = vsel %vm147, %v847, %v830
    %v849 = vrot.slane %v830, 4
    %v850 = vsel %vm147, %v842, %v849
    %v851 = vrot.slane %v846, 4
    %v852 = vsel %vm147, %v851, %v834
    %v853 = vrot.slane %v834, 4
    %v854 = vsel %vm147, %v846, %v853
    %vm855 = vcmask 64512
    %v857 = vsel %vm855, %v306, 0
    %v860 = vsel %vm855, %v550, 0
    %862 = vmatpush.xpose.msra.mxu0 0.0
    %863 = vmatpush.xpose.msra.mxu0 0.0
    %864 = vmatpush.xpose.msra.mxu0 0.0
    %865 = vmatpush.xpose.msra.mxu0 0.0
    %866 = vmatpush.xpose.msra.mxu0 0.0
    %867 = vmatpush.xpose.msra.mxu0 0.0
    %868 = vmatpush.xpose.msra.mxu0 0.0
    %869 = vmatpush.xpose.msra.mxu0 0.0
    %870 = vmatpush.xpose.msra.mxu0 0.0
    %871 = vmatpush.xpose.msra.mxu0 0.0
    %872 = vmatpush.xpose.msra.mxu0 0.0
    %873 = vmatpush.xpose.msra.mxu0 0.0
    %874 = vmatpush.xpose.msra.mxu0 0.0
    %875 = vmatpush.xpose.msra.mxu0 0.0
    %876 = vmatpush.xpose.msra.mxu0 0.0
    %877 = vmatpush.xpose.msra.mxu0 %v860
    %878 = vmatmul.f32.gmra.mxu0 %v857
    %v879 = vpop.f32.mrf.mxu0
    %v880 = vadd.f32 0.0, %v879
    %881 = vdwg.mxu0
    %v883 = vsel %vm855, %v308, 0
    %v886 = vsel %vm855, %v552, 0
    %888 = vmatpush.xpose.msra.mxu0 0.0
    %889 = vmatpush.xpose.msra.mxu0 0.0
    %890 = vmatpush.xpose.msra.mxu0 0.0
    %891 = vmatpush.xpose.msra.mxu0 0.0
    %892 = vmatpush.xpose.msra.mxu0 0.0
    %893 = vmatpush.xpose.msra.mxu0 0.0
    %894 = vmatpush.xpose.msra.mxu0 0.0
    %895 = vmatpush.xpose.msra.mxu0 0.0
    %896 = vmatpush.xpose.msra.mxu0 0.0
    %897 = vmatpush.xpose.msra.mxu0 0.0
    %898 = vmatpush.xpose.msra.mxu0 0.0
    %899 = vmatpush.xpose.msra.mxu0 0.0
    %900 = vmatpush.xpose.msra.mxu0 0.0
    %901 = vmatpush.xpose.msra.mxu0 0.0
    %902 = vmatpush.xpose.msra.mxu0 0.0
    %903 = vmatpush.xpose.msra.mxu0 %v886
    %904 = vmatmul.f32.gmra.mxu0 %v883
    %v905 = vpop.f32.mrf.mxu0
    %v906 = vadd.f32 0.0, %v905
    %907 = vdwg.mxu0
    %v909 = vsel %vm855, %v310, 0
    %v912 = vsel %vm855, %v554, 0
    %914 = vmatpush.xpose.msra.mxu0 0.0
    %915 = vmatpush.xpose.msra.mxu0 0.0
    %916 = vmatpush.xpose.msra.mxu0 0.0
    %917 = vmatpush.xpose.msra.mxu0 0.0
    %918 = vmatpush.xpose.msra.mxu0 0.0
    %919 = vmatpush.xpose.msra.mxu0 0.0
    %920 = vmatpush.xpose.msra.mxu0 0.0
    %921 = vmatpush.xpose.msra.mxu0 0.0
    %922 = vmatpush.xpose.msra.mxu0 0.0
    %923 = vmatpush.xpose.msra.mxu0 0.0
    %924 = vmatpush.xpose.msra.mxu0 0.0
    %925 = vmatpush.xpose.msra.mxu0 0.0
    %926 = vmatpush.xpose.msra.mxu0 0.0
    %927 = vmatpush.xpose.msra.mxu0 0.0
    %928 = vmatpush.xpose.msra.mxu0 0.0
    %929 = vmatpush.xpose.msra.mxu0 %v912
    %930 = vmatmul.f32.gmra.mxu0 %v909
    %v931 = vpop.f32.mrf.mxu0
    %v932 = vadd.f32 0.0, %v931
    %933 = vdwg.mxu0
    %v935 = vsel %vm855, %v312, 0
    %v938 = vsel %vm855, %v556, 0
    %940 = vmatpush.xpose.msra.mxu0 0.0
    %941 = vmatpush.xpose.msra.mxu0 0.0
    %942 = vmatpush.xpose.msra.mxu0 0.0
    %943 = vmatpush.xpose.msra.mxu0 0.0
    %944 = vmatpush.xpose.msra.mxu0 0.0
    %945 = vmatpush.xpose.msra.mxu0 0.0
    %946 = vmatpush.xpose.msra.mxu0 0.0
    %947 = vmatpush.xpose.msra.mxu0 0.0
    %948 = vmatpush.xpose.msra.mxu0 0.0
    %949 = vmatpush.xpose.msra.mxu0 0.0
    %950 = vmatpush.xpose.msra.mxu0 0.0
    %951 = vmatpush.xpose.msra.mxu0 0.0
    %952 = vmatpush.xpose.msra.mxu0 0.0
    %953 = vmatpush.xpose.msra.mxu0 0.0
    %954 = vmatpush.xpose.msra.mxu0 0.0
    %955 = vmatpush.xpose.msra.mxu0 %v938
    %956 = vmatmul.f32.gmra.mxu0 %v935
    %v957 = vpop.f32.mrf.mxu0
    %v958 = vadd.f32 0.0, %v957
    %959 = vdwg.mxu0
    %v961 = vsel %vm855, %v360, 0
    %v964 = vsel %vm855, %v604, 0
    %966 = vmatpush.xpose.msra.mxu0 0.0
    %967 = vmatpush.xpose.msra.mxu0 0.0
    %968 = vmatpush.xpose.msra.mxu0 0.0
    %969 = vmatpush.xpose.msra.mxu0 0.0
    %970 = vmatpush.xpose.msra.mxu0 0.0
    %971 = vmatpush.xpose.msra.mxu0 0.0
    %972 = vmatpush.xpose.msra.mxu0 0.0
    %973 = vmatpush.xpose.msra.mxu0 0.0
    %974 = vmatpush.xpose.msra.mxu0 0.0
    %975 = vmatpush.xpose.msra.mxu0 0.0
    %976 = vmatpush.xpose.msra.mxu0 0.0
    %977 = vmatpush.xpose.msra.mxu0 0.0
    %978 = vmatpush.xpose.msra.mxu0 0.0
    %979 = vmatpush.xpose.msra.mxu0 0.0
    %980 = vmatpush.xpose.msra.mxu0 0.0
    %981 = vmatpush.xpose.msra.mxu0 %v964
    %982 = vmatmul.f32.gmra.mxu0 %v961
    %v983 = vpop.f32.mrf.mxu0
    %v984 = vadd.f32 0.0, %v983
    %985 = vdwg.mxu0
    %v987 = vsel %vm855, %v362, 0
    %v990 = vsel %vm855, %v606, 0
    %992 = vmatpush.xpose.msra.mxu0 0.0
    %993 = vmatpush.xpose.msra.mxu0 0.0
    %994 = vmatpush.xpose.msra.mxu0 0.0
    %995 = vmatpush.xpose.msra.mxu0 0.0
    %996 = vmatpush.xpose.msra.mxu0 0.0
    %997 = vmatpush.xpose.msra.mxu0 0.0
    %998 = vmatpush.xpose.msra.mxu0 0.0
    %999 = vmatpush.xpose.msra.mxu0 0.0
    %1000 = vmatpush.xpose.msra.mxu0 0.0
    %1001 = vmatpush.xpose.msra.mxu0 0.0
    %1002 = vmatpush.xpose.msra.mxu0 0.0
    %1003 = vmatpush.xpose.msra.mxu0 0.0
    %1004 = vmatpush.xpose.msra.mxu0 0.0
    %1005 = vmatpush.xpose.msra.mxu0 0.0
    %1006 = vmatpush.xpose.msra.mxu0 0.0
    %1007 = vmatpush.xpose.msra.mxu0 %v990
    %1008 = vmatmul.f32.gmra.mxu0 %v987
    %v1009 = vpop.f32.mrf.mxu0
    %v1010 = vadd.f32 0.0, %v1009
    %1011 = vdwg.mxu0
    %v1013 = vsel %vm855, %v364, 0
    %v1016 = vsel %vm855, %v608, 0
    %1018 = vmatpush.xpose.msra.mxu0 0.0
    %1019 = vmatpush.xpose.msra.mxu0 0.0
    %1020 = vmatpush.xpose.msra.mxu0 0.0
    %1021 = vmatpush.xpose.msra.mxu0 0.0
    %1022 = vmatpush.xpose.msra.mxu0 0.0
    %1023 = vmatpush.xpose.msra.mxu0 0.0
    %1024 = vmatpush.xpose.msra.mxu0 0.0
    %1025 = vmatpush.xpose.msra.mxu0 0.0
    %1026 = vmatpush.xpose.msra.mxu0 0.0
    %1027 = vmatpush.xpose.msra.mxu0 0.0
    %1028 = vmatpush.xpose.msra.mxu0 0.0
    %1029 = vmatpush.xpose.msra.mxu0 0.0
    %1030 = vmatpush.xpose.msra.mxu0 0.0
    %1031 = vmatpush.xpose.msra.mxu0 0.0
    %1032 = vmatpush.xpose.msra.mxu0 0.0
    %1033 = vmatpush.xpose.msra.mxu0 %v1016
    %1034 = vmatmul.f32.gmra.mxu0 %v1013
    %v1035 = vpop.f32.mrf.mxu0
    %v1036 = vadd.f32 0.0, %v1035
    %1037 = vdwg.mxu0
    %v1039 = vsel %vm855, %v366, 0
    %v1042 = vsel %vm855, %v610, 0
    %1044 = vmatpush.xpose.msra.mxu0 0.0
    %1045 = vmatpush.xpose.msra.mxu0 0.0
    %1046 = vmatpush.xpose.msra.mxu0 0.0
    %1047 = vmatpush.xpose.msra.mxu0 0.0
    %1048 = vmatpush.xpose.msra.mxu0 0.0
    %1049 = vmatpush.xpose.msra.mxu0 0.0
    %1050 = vmatpush.xpose.msra.mxu0 0.0
    %1051 = vmatpush.xpose.msra.mxu0 0.0
    %1052 = vmatpush.xpose.msra.mxu0 0.0
    %1053 = vmatpush.xpose.msra.mxu0 0.0
    %1054 = vmatpush.xpose.msra.mxu0 0.0
    %1055 = vmatpush.xpose.msra.mxu0 0.0
    %1056 = vmatpush.xpose.msra.mxu0 0.0
    %1057 = vmatpush.xpose.msra.mxu0 0.0
    %1058 = vmatpush.xpose.msra.mxu0 0.0
    %1059 = vmatpush.xpose.msra.mxu0 %v1042
    %1060 = vmatmul.f32.gmra.mxu0 %v1039
    %v1061 = vpop.f32.mrf.mxu0
    %v1062 = vadd.f32 0.0, %v1061
    %1063 = vdwg.mxu0
    %v1064 = vmul.f32 %v880, 0.35355338
    %v1065 = vmul.f32 %v906, 0.35355338
    %v1066 = vmul.f32 %v932, 0.35355338
    %v1067 = vmul.f32 %v958, 0.35355338
    %v1068 = vmul.f32 %v984, 0.35355338
    %v1069 = vmul.f32 %v1010, 0.35355338
    %v1070 = vmul.f32 %v1036, 0.35355338
    %v1071 = vmul.f32 %v1062, 0.35355338
    %v1072 = vsel %vm855, %v1064, -inf
    %1073 = vmax.xlane.f32.xlu0 %v1072
    %v1074 = vpop.xlane.xlu0 %1073
    %v1075 = vsel %vm855, %v1065, -inf
    %1076 = vmax.xlane.f32.xlu0 %v1075
    %v1077 = vpop.xlane.xlu0 %1076
    %v1078 = vsel %vm855, %v1066, -inf
    %1079 = vmax.xlane.f32.xlu0 %v1078
    %v1080 = vpop.xlane.xlu0 %1079
    %v1081 = vsel %vm855, %v1067, -inf
    %1082 = vmax.xlane.f32.xlu0 %v1081
    %v1083 = vpop.xlane.xlu0 %1082
    %v1084 = vsel %vm855, %v1068, -inf
    %1085 = vmax.xlane.f32.xlu0 %v1084
    %v1086 = vpop.xlane.xlu0 %1085
    %v1087 = vsel %vm855, %v1069, -inf
    %1088 = vmax.xlane.f32.xlu0 %v1087
    %v1089 = vpop.xlane.xlu0 %1088
    %v1090 = vsel %vm855, %v1070, -inf
    %1091 = vmax.xlane.f32.xlu0 %v1090
    %v1092 = vpop.xlane.xlu0 %1091
    %v1093 = vsel %vm855, %v1071, -inf
    %1094 = vmax.xlane.f32.xlu0 %v1093
    %v1095 = vpop.xlane.xlu0 %1094
    %v1096 = vsub.f32 %v1064, %v1074
    %v1097 = vsub.f32 %v1065, %v1077
    %v1098 = vsub.f32 %v1066, %v1080
    %v1099 = vsub.f32 %v1067, %v1083
    %v1100 = vsub.f32 %v1068, %v1086
    %v1101 = vsub.f32 %v1069, %v1089
    %v1102 = vsub.f32 %v1070, %v1092
    %v1103 = vsub.f32 %v1071, %v1095
    %v1104 = vmul.f32 %v1096, 1.442695
    %v1105 = vpow.pop %v1104
    %v1106 = vmul.f32 %v1097, 1.442695
    %v1107 = vpow.pop %v1106
    %v1108 = vmul.f32 %v1098, 1.442695
    %v1109 = vpow.pop %v1108
    %v1110 = vmul.f32 %v1099, 1.442695
    %v1111 = vpow.pop %v1110
    %v1112 = vmul.f32 %v1100, 1.442695
    %v1113 = vpow.pop %v1112
    %v1114 = vmul.f32 %v1101, 1.442695
    %v1115 = vpow.pop %v1114
    %v1116 = vmul.f32 %v1102, 1.442695
    %v1117 = vpow.pop %v1116
    %v1118 = vmul.f32 %v1103, 1.442695
    %v1119 = vpow.pop %v1118
    %v1120 = vsel %vm855, %v1105, 0.0
    %1121 = vadd.xlane.f32.xlu0 %v1120
    %v1122 = vpop.xlane.xlu0 %1121
    %v1123 = vsel %vm855, %v1107, 0.0
    %1124 = vadd.xlane.f32.xlu0 %v1123
    %v1125 = vpop.xlane.xlu0 %1124
    %v1126 = vsel %vm855, %v1109, 0.0
    %1127 = vadd.xlane.f32.xlu0 %v1126
    %v1128 = vpop.xlane.xlu0 %1127
    %v1129 = vsel %vm855, %v1111, 0.0
    %1130 = vadd.xlane.f32.xlu0 %v1129
    %v1131 = vpop.xlane.xlu0 %1130
    %v1132 = vsel %vm855, %v1113, 0.0
    %1133 = vadd.xlane.f32.xlu0 %v1132
    %v1134 = vpop.xlane.xlu0 %1133
    %v1135 = vsel %vm855, %v1115, 0.0
    %1136 = vadd.xlane.f32.xlu0 %v1135
    %v1137 = vpop.xlane.xlu0 %1136
    %v1138 = vsel %vm855, %v1117, 0.0
    %1139 = vadd.xlane.f32.xlu0 %v1138
    %v1140 = vpop.xlane.xlu0 %1139
    %v1141 = vsel %vm855, %v1119, 0.0
    %1142 = vadd.xlane.f32.xlu0 %v1141
    %v1143 = vpop.xlane.xlu0 %1142
    %v1144 = vrcp.pop %v1122
    %v1145 = vmul.f32 %v1122, %v1144
    %v1146 = vsub.f32 1.0, %v1145
    %v1147 = vmul.f32 %v1144, %v1146
    %v1148 = vadd.f32 %v1144, %v1147
    %vm1149 = vweird.f32 %v1122
    %vm1150 = vweird.f32 %v1144
    %vm1151 = vmor %vm1149, %vm1150
    %v1152 = vsel %vm1151, %v1144, %v1148
    %v1153 = vand.u32 2147483647, %v1122
    %vm1154 = vcmp.eq.f32.partialorder %v1153, 8.507059e+37
    %v1155 = vand.u32 %v1122, 2147483648
    %v1156 = vor.u32 1.1754944e-38, %v1155
    %v1157 = vsel %vm1154, %v1156, %v1152
    %v1158 = vrcp.pop %v1125
    %v1159 = vmul.f32 %v1125, %v1158
    %v1160 = vsub.f32 1.0, %v1159
    %v1161 = vmul.f32 %v1158, %v1160
    %v1162 = vadd.f32 %v1158, %v1161
    %vm1163 = vweird.f32 %v1125
    %vm1164 = vweird.f32 %v1158
    %vm1165 = vmor %vm1163, %vm1164
    %v1166 = vsel %vm1165, %v1158, %v1162
    %v1167 = vand.u32 2147483647, %v1125
    %vm1168 = vcmp.eq.f32.partialorder %v1167, 8.507059e+37
    %v1169 = vand.u32 %v1125, 2147483648
    %v1170 = vor.u32 1.1754944e-38, %v1169
    %v1171 = vsel %vm1168, %v1170, %v1166
    %v1172 = vrcp.pop %v1128
    %v1173 = vmul.f32 %v1128, %v1172
    %v1174 = vsub.f32 1.0, %v1173
    %v1175 = vmul.f32 %v1172, %v1174
    %v1176 = vadd.f32 %v1172, %v1175
    %vm1177 = vweird.f32 %v1128
    %vm1178 = vweird.f32 %v1172
    %vm1179 = vmor %vm1177, %vm1178
    %v1180 = vsel %vm1179, %v1172, %v1176
    %v1181 = vand.u32 2147483647, %v1128
    %vm1182 = vcmp.eq.f32.partialorder %v1181, 8.507059e+37
    %v1183 = vand.u32 %v1128, 2147483648
    %v1184 = vor.u32 1.1754944e-38, %v1183
    %v1185 = vsel %vm1182, %v1184, %v1180
    %v1186 = vrcp.pop %v1131
    %v1187 = vmul.f32 %v1131, %v1186
    %v1188 = vsub.f32 1.0, %v1187
    %v1189 = vmul.f32 %v1186, %v1188
    %v1190 = vadd.f32 %v1186, %v1189
    %vm1191 = vweird.f32 %v1131
    %vm1192 = vweird.f32 %v1186
    %vm1193 = vmor %vm1191, %vm1192
    %v1194 = vsel %vm1193, %v1186, %v1190
    %v1195 = vand.u32 2147483647, %v1131
    %vm1196 = vcmp.eq.f32.partialorder %v1195, 8.507059e+37
    %v1197 = vand.u32 %v1131, 2147483648
    %v1198 = vor.u32 1.1754944e-38, %v1197
    %v1199 = vsel %vm1196, %v1198, %v1194
    %v1200 = vrcp.pop %v1134
    %v1201 = vmul.f32 %v1134, %v1200
    %v1202 = vsub.f32 1.0, %v1201
    %v1203 = vmul.f32 %v1200, %v1202
    %v1204 = vadd.f32 %v1200, %v1203
    %vm1205 = vweird.f32 %v1134
    %vm1206 = vweird.f32 %v1200
    %vm1207 = vmor %vm1205, %vm1206
    %v1208 = vsel %vm1207, %v1200, %v1204
    %v1209 = vand.u32 2147483647, %v1134
    %vm1210 = vcmp.eq.f32.partialorder %v1209, 8.507059e+37
    %v1211 = vand.u32 %v1134, 2147483648
    %v1212 = vor.u32 1.1754944e-38, %v1211
    %v1213 = vsel %vm1210, %v1212, %v1208
    %v1214 = vrcp.pop %v1137
    %v1215 = vmul.f32 %v1137, %v1214
    %v1216 = vsub.f32 1.0, %v1215
    %v1217 = vmul.f32 %v1214, %v1216
    %v1218 = vadd.f32 %v1214, %v1217
    %vm1219 = vweird.f32 %v1137
    %vm1220 = vweird.f32 %v1214
    %vm1221 = vmor %vm1219, %vm1220
    %v1222 = vsel %vm1221, %v1214, %v1218
    %v1223 = vand.u32 2147483647, %v1137
    %vm1224 = vcmp.eq.f32.partialorder %v1223, 8.507059e+37
    %v1225 = vand.u32 %v1137, 2147483648
    %v1226 = vor.u32 1.1754944e-38, %v1225
    %v1227 = vsel %vm1224, %v1226, %v1222
    %v1228 = vrcp.pop %v1140
    %v1229 = vmul.f32 %v1140, %v1228
    %v1230 = vsub.f32 1.0, %v1229
    %v1231 = vmul.f32 %v1228, %v1230
    %v1232 = vadd.f32 %v1228, %v1231
    %vm1233 = vweird.f32 %v1140
    %vm1234 = vweird.f32 %v1228
    %vm1235 = vmor %vm1233, %vm1234
    %v1236 = vsel %vm1235, %v1228, %v1232
    %v1237 = vand.u32 2147483647, %v1140
    %vm1238 = vcmp.eq.f32.partialorder %v1237, 8.507059e+37
    %v1239 = vand.u32 %v1140, 2147483648
    %v1240 = vor.u32 1.1754944e-38, %v1239
    %v1241 = vsel %vm1238, %v1240, %v1236
    %v1242 = vrcp.pop %v1143
    %v1243 = vmul.f32 %v1143, %v1242
    %v1244 = vsub.f32 1.0, %v1243
    %v1245 = vmul.f32 %v1242, %v1244
    %v1246 = vadd.f32 %v1242, %v1245
    %vm1247 = vweird.f32 %v1143
    %vm1248 = vweird.f32 %v1242
    %vm1249 = vmor %vm1247, %vm1248
    %v1250 = vsel %vm1249, %v1242, %v1246
    %v1251 = vand.u32 2147483647, %v1143
    %vm1252 = vcmp.eq.f32.partialorder %v1251, 8.507059e+37
    %v1253 = vand.u32 %v1143, 2147483648
    %v1254 = vor.u32 1.1754944e-38, %v1253
    %v1255 = vsel %vm1252, %v1254, %v1250
    %v1256 = vmul.f32 %v1105, %v1157
    %v1257 = vmul.f32 %v1107, %v1171
    %v1258 = vmul.f32 %v1109, %v1185
    %v1259 = vmul.f32 %v1111, %v1199
    %v1260 = vmul.f32 %v1113, %v1213
    %v1261 = vmul.f32 %v1115, %v1227
    %v1262 = vmul.f32 %v1117, %v1241
    %v1263 = vmul.f32 %v1119, %v1255
    %1264 = vst.msk [vmem:[#allocation9] sm:$0xff] %vm855, %v1256
    %1265 = vst.msk [vmem:[#allocation9 + $0x8] sm:$0xff] %vm855, %v1257
    %1266 = vst.msk [vmem:[#allocation9 + $0x10] sm:$0xff] %vm855, %v1258
    %1267 = vst.msk [vmem:[#allocation9 + $0x18] sm:$0xff] %vm855, %v1259
    %1268 = vst.msk [vmem:[#allocation9 + $0x20] sm:$0xff] %vm855, %v1260
    %1269 = vst.msk [vmem:[#allocation9 + $0x28] sm:$0xff] %vm855, %v1261
    %1270 = vst.msk [vmem:[#allocation9 + $0x30] sm:$0xff] %vm855, %v1262
    %1271 = vst.msk [vmem:[#allocation9 + $0x38] sm:$0xff] %vm855, %v1263
    %v1273 = vsel %vm855, %v1256, 0
    %1275 = vmatpush.msra.mxu0 0.0
    %1276 = vmatpush.msra.mxu0 0.0
    %1277 = vmatpush.msra.mxu0 0.0
    %1278 = vmatpush.msra.mxu0 0.0
    %1279 = vmatpush.msra.mxu0 0.0
    %1280 = vmatpush.msra.mxu0 0.0
    %1281 = vmatpush.msra.mxu0 0.0
    %1282 = vmatpush.msra.mxu0 0.0
    %1283 = vmatpush.msra.mxu0 0.0
    %1284 = vmatpush.msra.mxu0 0.0
    %1285 = vmatpush.msra.mxu0 0.0
    %1286 = vmatpush.msra.mxu0 0.0
    %1287 = vmatpush.msra.mxu0 0.0
    %1288 = vmatpush.msra.mxu0 0.0
    %1289 = vmatpush.msra.mxu0 0.0
    %1290 = vmatpush.msra.mxu0 %v794
    %1291 = vmatmul.f32.gmra.mxu0 %v1273
    %v1292 = vpop.f32.mrf.mxu0
    %v1293 = vadd.f32 0.0, %v1292
    %1294 = vdwg.mxu0
    %v1296 = vsel %vm855, %v1257, 0
    %1298 = vmatpush.msra.mxu0 0.0
    %1299 = vmatpush.msra.mxu0 0.0
    %1300 = vmatpush.msra.mxu0 0.0
    %1301 = vmatpush.msra.mxu0 0.0
    %1302 = vmatpush.msra.mxu0 0.0
    %1303 = vmatpush.msra.mxu0 0.0
    %1304 = vmatpush.msra.mxu0 0.0
    %1305 = vmatpush.msra.mxu0 0.0
    %1306 = vmatpush.msra.mxu0 0.0
    %1307 = vmatpush.msra.mxu0 0.0
    %1308 = vmatpush.msra.mxu0 0.0
    %1309 = vmatpush.msra.mxu0 0.0
    %1310 = vmatpush.msra.mxu0 0.0
    %1311 = vmatpush.msra.mxu0 0.0
    %1312 = vmatpush.msra.mxu0 0.0
    %1313 = vmatpush.msra.mxu0 %v796
    %1314 = vmatmul.f32.gmra.mxu0 %v1296
    %v1315 = vpop.f32.mrf.mxu0
    %v1316 = vadd.f32 0.0, %v1315
    %1317 = vdwg.mxu0
    %v1319 = vsel %vm855, %v1258, 0
    %1321 = vmatpush.msra.mxu0 0.0
    %1322 = vmatpush.msra.mxu0 0.0
    %1323 = vmatpush.msra.mxu0 0.0
    %1324 = vmatpush.msra.mxu0 0.0
    %1325 = vmatpush.msra.mxu0 0.0
    %1326 = vmatpush.msra.mxu0 0.0
    %1327 = vmatpush.msra.mxu0 0.0
    %1328 = vmatpush.msra.mxu0 0.0
    %1329 = vmatpush.msra.mxu0 0.0
    %1330 = vmatpush.msra.mxu0 0.0
    %1331 = vmatpush.msra.mxu0 0.0
    %1332 = vmatpush.msra.mxu0 0.0
    %1333 = vmatpush.msra.mxu0 0.0
    %1334 = vmatpush.msra.mxu0 0.0
    %1335 = vmatpush.msra.mxu0 0.0
    %1336 = vmatpush.msra.mxu0 %v798
    %1337 = vmatmul.f32.gmra.mxu0 %v1319
    %v1338 = vpop.f32.mrf.mxu0
    %v1339 = vadd.f32 0.0, %v1338
    %1340 = vdwg.mxu0
    %v1342 = vsel %vm855, %v1259, 0
    %1344 = vmatpush.msra.mxu0 0.0
    %1345 = vmatpush.msra.mxu0 0.0
    %1346 = vmatpush.msra.mxu0 0.0
    %1347 = vmatpush.msra.mxu0 0.0
    %1348 = vmatpush.msra.mxu0 0.0
    %1349 = vmatpush.msra.mxu0 0.0
    %1350 = vmatpush.msra.mxu0 0.0
    %1351 = vmatpush.msra.mxu0 0.0
    %1352 = vmatpush.msra.mxu0 0.0
    %1353 = vmatpush.msra.mxu0 0.0
    %1354 = vmatpush.msra.mxu0 0.0
    %1355 = vmatpush.msra.mxu0 0.0
    %1356 = vmatpush.msra.mxu0 0.0
    %1357 = vmatpush.msra.mxu0 0.0
    %1358 = vmatpush.msra.mxu0 0.0
    %1359 = vmatpush.msra.mxu0 %v800
    %1360 = vmatmul.f32.gmra.mxu0 %v1342
    %v1361 = vpop.f32.mrf.mxu0
    %v1362 = vadd.f32 0.0, %v1361
    %1363 = vdwg.mxu0
    %v1365 = vsel %vm855, %v1260, 0
    %1367 = vmatpush.msra.mxu0 0.0
    %1368 = vmatpush.msra.mxu0 0.0
    %1369 = vmatpush.msra.mxu0 0.0
    %1370 = vmatpush.msra.mxu0 0.0
    %1371 = vmatpush.msra.mxu0 0.0
    %1372 = vmatpush.msra.mxu0 0.0
    %1373 = vmatpush.msra.mxu0 0.0
    %1374 = vmatpush.msra.mxu0 0.0
    %1375 = vmatpush.msra.mxu0 0.0
    %1376 = vmatpush.msra.mxu0 0.0
    %1377 = vmatpush.msra.mxu0 0.0
    %1378 = vmatpush.msra.mxu0 0.0
    %1379 = vmatpush.msra.mxu0 0.0
    %1380 = vmatpush.msra.mxu0 0.0
    %1381 = vmatpush.msra.mxu0 0.0
    %1382 = vmatpush.msra.mxu0 %v848
    %1383 = vmatmul.f32.gmra.mxu0 %v1365
    %v1384 = vpop.f32.mrf.mxu0
    %v1385 = vadd.f32 0.0, %v1384
    %1386 = vdwg.mxu0
    %v1388 = vsel %vm855, %v1261, 0
    %1390 = vmatpush.msra.mxu0 0.0
    %1391 = vmatpush.msra.mxu0 0.0
    %1392 = vmatpush.msra.mxu0 0.0
    %1393 = vmatpush.msra.mxu0 0.0
    %1394 = vmatpush.msra.mxu0 0.0
    %1395 = vmatpush.msra.mxu0 0.0
    %1396 = vmatpush.msra.mxu0 0.0
    %1397 = vmatpush.msra.mxu0 0.0
    %1398 = vmatpush.msra.mxu0 0.0
    %1399 = vmatpush.msra.mxu0 0.0
    %1400 = vmatpush.msra.mxu0 0.0
    %1401 = vmatpush.msra.mxu0 0.0
    %1402 = vmatpush.msra.mxu0 0.0
    %1403 = vmatpush.msra.mxu0 0.0
    %1404 = vmatpush.msra.mxu0 0.0
    %1405 = vmatpush.msra.mxu0 %v850
    %1406 = vmatmul.f32.gmra.mxu0 %v1388
    %v1407 = vpop.f32.mrf.mxu0
    %v1408 = vadd.f32 0.0, %v1407
    %1409 = vdwg.mxu0
    %v1411 = vsel %vm855, %v1262, 0
    %1413 = vmatpush.msra.mxu0 0.0
    %1414 = vmatpush.msra.mxu0 0.0
    %1415 = vmatpush.msra.mxu0 0.0
    %1416 = vmatpush.msra.mxu0 0.0
    %1417 = vmatpush.msra.mxu0 0.0
    %1418 = vmatpush.msra.mxu0 0.0
    %1419 = vmatpush.msra.mxu0 0.0
    %1420 = vmatpush.msra.mxu0 0.0
    %1421 = vmatpush.msra.mxu0 0.0
    %1422 = vmatpush.msra.mxu0 0.0
    %1423 = vmatpush.msra.mxu0 0.0
    %1424 = vmatpush.msra.mxu0 0.0
    %1425 = vmatpush.msra.mxu0 0.0
    %1426 = vmatpush.msra.mxu0 0.0
    %1427 = vmatpush.msra.mxu0 0.0
    %1428 = vmatpush.msra.mxu0 %v852
    %1429 = vmatmul.f32.gmra.mxu0 %v1411
    %v1430 = vpop.f32.mrf.mxu0
    %v1431 = vadd.f32 0.0, %v1430
    %1432 = vdwg.mxu0
    %v1434 = vsel %vm855, %v1263, 0
    %1436 = vmatpush.msra.mxu0 0.0
    %1437 = vmatpush.msra.mxu0 0.0
    %1438 = vmatpush.msra.mxu0 0.0
    %1439 = vmatpush.msra.mxu0 0.0
    %1440 = vmatpush.msra.mxu0 0.0
    %1441 = vmatpush.msra.mxu0 0.0
    %1442 = vmatpush.msra.mxu0 0.0
    %1443 = vmatpush.msra.mxu0 0.0
    %1444 = vmatpush.msra.mxu0 0.0
    %1445 = vmatpush.msra.mxu0 0.0
    %1446 = vmatpush.msra.mxu0 0.0
    %1447 = vmatpush.msra.mxu0 0.0
    %1448 = vmatpush.msra.mxu0 0.0
    %1449 = vmatpush.msra.mxu0 0.0
    %1450 = vmatpush.msra.mxu0 0.0
    %1451 = vmatpush.msra.mxu0 %v854
    %1452 = vmatmul.f32.gmra.mxu0 %v1434
    %v1453 = vpop.f32.mrf.mxu0
    %v1454 = vadd.f32 0.0, %v1453
    %1455 = vdwg.mxu0
    %v1456 = vrot.slane %v1339, 4
    %v1457 = vsel %vm147, %v1456, %v1293
    %v1458 = vrot.slane %v1293, 4
    %v1459 = vsel %vm147, %v1339, %v1458
    %v1461 = vunpack.c.l.s4 1983009808
    %v1462 = vunpack.c.0.s8 %v1461
    %v1463 = vperm.slane %v1457, %v1462
    %v1465 = vunpack.c.l.s4 1983009808
    %v1466 = vunpack.c.0.s8 %v1465
    %v1467 = vperm.slane %v1459, %v1466
    %v1468 = vrot.slane %v1362, 4
    %v1469 = vsel %vm147, %v1468, %v1316
    %v1470 = vrot.slane %v1316, 4
    %v1471 = vsel %vm147, %v1362, %v1470
    %v1473 = vunpack.c.l.s4 1983009808
    %v1474 = vunpack.c.0.s8 %v1473
    %v1475 = vperm.slane %v1469, %v1474
    %v1477 = vunpack.c.l.s4 1983009808
    %v1478 = vunpack.c.0.s8 %v1477
    %v1479 = vperm.slane %v1471, %v1478
    %v1480 = vrot.slane %v1475, 4
    %v1481 = vsel %vm147, %v1480, %v1463
    %v1482 = vrot.slane %v1463, 4
    %v1483 = vsel %vm147, %v1475, %v1482
    %v1485 = vunpack.c.l.s4 1934713408
    %v1486 = vunpack.c.0.s8 %v1485
    %v1487 = vperm.slane %v1481, %v1486
    %v1489 = vunpack.c.l.s4 1934713408
    %v1490 = vunpack.c.0.s8 %v1489
    %v1491 = vperm.slane %v1483, %v1490
    %v1492 = vrot.slane %v1479, 4
    %v1493 = vsel %vm147, %v1492, %v1467
    %v1494 = vrot.slane %v1467, 4
    %v1495 = vsel %vm147, %v1479, %v1494
    %v1497 = vunpack.c.l.s4 1934713408
    %v1498 = vunpack.c.0.s8 %v1497
    %v1499 = vperm.slane %v1493, %v1498
    %v1501 = vunpack.c.l.s4 1934713408
    %v1502 = vunpack.c.0.s8 %v1501
    %v1503 = vperm.slane %v1495, %v1502
    %v1504 = vrot.slane %v1487, 4
    %v1505 = vsel %vm147, 0.0, %v1504
    %v1506 = vrot.slane %v1491, 4
    %v1507 = vsel %vm147, 0.0, %v1506
    %v1508 = vrot.slane %v1499, 4
    %v1509 = vsel %vm147, 0.0, %v1508
    %v1510 = vrot.slane %v1503, 4
    %v1511 = vsel %vm147, 0.0, %v1510
    %v1512 = vrot.slane %v1431, 4
    %v1513 = vsel %vm147, %v1512, %v1385
    %v1514 = vrot.slane %v1385, 4
    %v1515 = vsel %vm147, %v1431, %v1514
    %v1517 = vunpack.c.l.s4 1983009808
    %v1518 = vunpack.c.0.s8 %v1517
    %v1519 = vperm.slane %v1513, %v1518
    %v1521 = vunpack.c.l.s4 1983009808
    %v1522 = vunpack.c.0.s8 %v1521
    %v1523 = vperm.slane %v1515, %v1522
    %v1524 = vrot.slane %v1454, 4
    %v1525 = vsel %vm147, %v1524, %v1408
    %v1526 = vrot.slane %v1408, 4
    %v1527 = vsel %vm147, %v1454, %v1526
    %v1529 = vunpack.c.l.s4 1983009808
    %v1530 = vunpack.c.0.s8 %v1529
    %v1531 = vperm.slane %v1525, %v1530
    %v1533 = vunpack.c.l.s4 1983009808
    %v1534 = vunpack.c.0.s8 %v1533
    %v1535 = vperm.slane %v1527, %v1534
    %v1536 = vrot.slane %v1531, 4
    %v1537 = vsel %vm147, %v1536, %v1519
    %v1538 = vrot.slane %v1519, 4
    %v1539 = vsel %vm147, %v1531, %v1538
    %v1541 = vunpack.c.l.s4 1934713408
    %v1542 = vunpack.c.0.s8 %v1541
    %v1543 = vperm.slane %v1537, %v1542
    %v1545 = vunpack.c.l.s4 1934713408
    %v1546 = vunpack.c.0.s8 %v1545
    %v1547 = vperm.slane %v1539, %v1546
    %v1548 = vrot.slane %v1535, 4
    %v1549 = vsel %vm147, %v1548, %v1523
    %v1550 = vrot.slane %v1523, 4
    %v1551 = vsel %vm147, %v1535, %v1550
    %v1553 = vunpack.c.l.s4 1934713408
    %v1554 = vunpack.c.0.s8 %v1553
    %v1555 = vperm.slane %v1549, %v1554
    %v1557 = vunpack.c.l.s4 1934713408
    %v1558 = vunpack.c.0.s8 %v1557
    %v1559 = vperm.slane %v1551, %v1558
    %v1560 = vrot.slane %v1543, 4
    %v1561 = vsel %vm147, 0.0, %v1560
    %v1562 = vrot.slane %v1547, 4
    %v1563 = vsel %vm147, 0.0, %v1562
    %v1564 = vrot.slane %v1555, 4
    %v1565 = vsel %vm147, 0.0, %v1564
    %v1566 = vrot.slane %v1559, 4
    %v1567 = vsel %vm147, 0.0, %v1566
    %v1568 = vsel %vm147, %v1506, %v1487
    %v1570 = vunpack.c.l.s4 1983009808
    %v1571 = vunpack.c.0.s8 %v1570
    %v1572 = vperm.slane %v1568, %v1571
    %v1573 = vrot.slane %v1507, 4
    %v1574 = vsel %vm147, %v1573, %v1505
    %v1576 = vunpack.c.l.s4 1983009808
    %v1577 = vunpack.c.0.s8 %v1576
    %v1578 = vperm.slane %v1574, %v1577
    %v1579 = vsel %vm147, %v1510, %v1499
    %v1581 = vunpack.c.l.s4 1983009808
    %v1582 = vunpack.c.0.s8 %v1581
    %v1583 = vperm.slane %v1579, %v1582
    %v1584 = vrot.slane %v1511, 4
    %v1585 = vsel %vm147, %v1584, %v1509
    %v1587 = vunpack.c.l.s4 1983009808
    %v1588 = vunpack.c.0.s8 %v1587
    %v1589 = vperm.slane %v1585, %v1588
    %v1590 = vrot.slane %v1578, 4
    %v1591 = vsel %vm147, %v1590, %v1572
    %v1592 = vrot.slane %v1572, 4
    %v1593 = vsel %vm147, %v1578, %v1592
    %v1595 = vunpack.c.l.s4 1934713408
    %v1596 = vunpack.c.0.s8 %v1595
    %v1597 = vperm.slane %v1591, %v1596
    %v1599 = vunpack.c.l.s4 1934713408
    %v1600 = vunpack.c.0.s8 %v1599
    %v1601 = vperm.slane %v1593, %v1600
    %v1602 = vrot.slane %v1589, 4
    %v1603 = vsel %vm147, %v1602, %v1583
    %v1604 = vrot.slane %v1583, 4
    %v1605 = vsel %vm147, %v1589, %v1604
    %v1607 = vunpack.c.l.s4 1934713408
    %v1608 = vunpack.c.0.s8 %v1607
    %v1609 = vperm.slane %v1603, %v1608
    %v1611 = vunpack.c.l.s4 1934713408
    %v1612 = vunpack.c.0.s8 %v1611
    %v1613 = vperm.slane %v1605, %v1612
    %v1614 = vrot.slane %v1609, 4
    %v1615 = vsel %vm147, %v1614, %v1597
    %v1616 = vrot.slane %v1597, 4
    %v1617 = vsel %vm147, %v1609, %v1616
    %v1618 = vrot.slane %v1613, 4
    %v1619 = vsel %vm147, %v1618, %v1601
    %v1620 = vrot.slane %v1601, 4
    %v1621 = vsel %vm147, %v1613, %v1620
    %v1622 = vsel %vm147, %v1562, %v1543
    %v1624 = vunpack.c.l.s4 1983009808
    %v1625 = vunpack.c.0.s8 %v1624
    %v1626 = vperm.slane %v1622, %v1625
    %v1627 = vrot.slane %v1563, 4
    %v1628 = vsel %vm147, %v1627, %v1561
    %v1630 = vunpack.c.l.s4 1983009808
    %v1631 = vunpack.c.0.s8 %v1630
    %v1632 = vperm.slane %v1628, %v1631
    %v1633 = vsel %vm147, %v1566, %v1555
    %v1635 = vunpack.c.l.s4 1983009808
    %v1636 = vunpack.c.0.s8 %v1635
    %v1637 = vperm.slane %v1633, %v1636
    %v1638 = vrot.slane %v1567, 4
    %v1639 = vsel %vm147, %v1638, %v1565
    %v1641 = vunpack.c.l.s4 1983009808
    %v1642 = vunpack.c.0.s8 %v1641
    %v1643 = vperm.slane %v1639, %v1642
    %v1644 = vrot.slane %v1632, 4
    %v1645 = vsel %vm147, %v1644, %v1626
    %v1646 = vrot.slane %v1626, 4
    %v1647 = vsel %vm147, %v1632, %v1646
    %v1649 = vunpack.c.l.s4 1934713408
    %v1650 = vunpack.c.0.s8 %v1649
    %v1651 = vperm.slane %v1645, %v1650
    %v1653 = vunpack.c.l.s4 1934713408
    %v1654 = vunpack.c.0.s8 %v1653
    %v1655 = vperm.slane %v1647, %v1654
    %v1656 = vrot.slane %v1643, 4
    %v1657 = vsel %vm147, %v1656, %v1637
    %v1658 = vrot.slane %v1637, 4
    %v1659 = vsel %vm147, %v1643, %v1658
    %v1661 = vunpack.c.l.s4 1934713408
    %v1662 = vunpack.c.0.s8 %v1661
    %v1663 = vperm.slane %v1657, %v1662
    %v1665 = vunpack.c.l.s4 1934713408
    %v1666 = vunpack.c.0.s8 %v1665
    %v1667 = vperm.slane %v1659, %v1666
    %v1668 = vrot.slane %v1663, 4
    %v1669 = vsel %vm147, %v1668, %v1651
    %v1670 = vrot.slane %v1651, 4
    %v1671 = vsel %vm147, %v1663, %v1670
    %v1672 = vrot.slane %v1667, 4
    %v1673 = vsel %vm147, %v1672, %v1655
    %v1674 = vrot.slane %v1655, 4
    %v1675 = vsel %vm147, %v1667, %v1674
    %1678 = vrot.lane.b32.xlu0 %v1617, 8
    %v1679 = vpop.permute.xlu0 %1678
    %1680 = vrot.lane.b32.xlu0 %v1671, 8
    %v1681 = vpop.permute.xlu0 %1680
    %1686 = vrot.lane.b32.xlu0 %v1619, 16
    %v1687 = vpop.permute.xlu0 %1686
    %1688 = vrot.lane.b32.xlu0 %v1673, 16
    %v1689 = vpop.permute.xlu0 %1688
    %1694 = vrot.lane.b32.xlu0 %v1621, 24
    %v1695 = vpop.permute.xlu0 %1694
    %1696 = vrot.lane.b32.xlu0 %v1675, 24
    %v1697 = vpop.permute.xlu0 %1696
    %v1700 = vsel %vm855, %v1615, %v1679
    %v1701 = vsel %vm855, %v1669, %v1681
    %vm1702 = vcmask 130048
    %v1703 = vsel %vm1702, %v1700, %v1687
    %v1704 = vsel %vm1702, %v1701, %v1689
    %vm1705 = vcmask 195584
    %v1706 = vsel %vm1705, %v1703, %v1695
    %v1707 = vsel %vm1705, %v1704, %v1697
    %v1708 = vld [vmem:[%s3] sm:$0xff]
    %v1709 = vld [vmem:[%s3 + $0x8] sm:$0xff]
    %v1710 = vld [vmem:[%s3 + $0x10] sm:$0xff]
    %v1711 = vld [vmem:[%s3 + $0x18] sm:$0xff]
    %v1713 = vsel %vm96, %v1706, 0
    %v1716 = vsel %vm96, %v1707, 0
    %1718 = vmatpush.msra.mxu0 0.0
    %1719 = vmatpush.msra.mxu0 0.0
    %1720 = vmatpush.msra.mxu0 0.0
    %1721 = vmatpush.msra.mxu0 0.0
    %1722 = vmatpush.msra.mxu0 0.0
    %1723 = vmatpush.msra.mxu0 0.0
    %1724 = vmatpush.msra.mxu0 0.0
    %1725 = vmatpush.msra.mxu0 0.0
    %1726 = vmatpush.msra.mxu0 0.0
    %1727 = vmatpush.msra.mxu0 0.0
    %1728 = vmatpush.msra.mxu0 0.0
    %1729 = vmatpush.msra.mxu0 0.0
    %1730 = vmatpush.msra.mxu0 %v1711
    %1731 = vmatpush.msra.mxu0 %v1710
    %1732 = vmatpush.msra.mxu0 %v1709
    %1733 = vmatpush.msra.mxu0 %v1708
    %1734 = vmatmul.f32.gmra.mxu0 %v1713
    %v1735 = vpop.f32.mrf.mxu0
    %v1736 = vadd.f32 %v90, %v1735
    %1737 = vmatmul.f32.gmra.mxu0 %v1716
    %v1738 = vpop.f32.mrf.mxu0
    %v1739 = vadd.f32 %v91, %v1738
    %1740 = vdwg.mxu0
    %v1741 = vld [vmem:[%s6] sm:$0x1]
    %v1742 = vld [vmem:[%s7] sm:$0x1]
    %v1743 = vsel %vm96, %v1736, 0.0
    %1744 = vadd.xlane.f32.xlu0 %v1743
    %v1745 = vpop.xlane.xlu0 %1744
    %v1746 = vsel %vm96, %v1739, 0.0
    %1747 = vadd.xlane.f32.xlu0 %v1746
    %v1748 = vpop.xlane.xlu0 %1747
    %v1749 = vmul.f32 %v1745, 0.03125
    %v1750 = vmul.f32 %v1748, 0.03125
    %v1751 = vmul.f32 %v1736, %v1736
    %v1752 = vmul.f32 %v1739, %v1739
    %v1753 = vsel %vm96, %v1751, 0.0
    %1754 = vadd.xlane.f32.xlu0 %v1753
    %v1755 = vpop.xlane.xlu0 %1754
    %v1756 = vsel %vm96, %v1752, 0.0
    %1757 = vadd.xlane.f32.xlu0 %v1756
    %v1758 = vpop.xlane.xlu0 %1757
    %v1759 = vmul.f32 %v1755, 0.03125
    %v1760 = vmul.f32 %v1758, 0.03125
    %v1761 = vmul.f32 %v1749, %v1749
    %v1762 = vmul.f32 %v1750, %v1750
    %v1763 = vsub.f32 %v1759, %v1761
    %v1764 = vsub.f32 %v1760, %v1762
    %v1765 = vsub.f32 %v1736, %v1749
    %v1766 = vsub.f32 %v1739, %v1750
    %v1767 = vadd.f32 %v1763, 1e-05
    %v1768 = vadd.f32 %v1764, 1e-05
    %v1769 = vrsqrt.pop %v1767
    %v1770 = vmul.f32 %v1769, %v1767
    %v1771 = vmul.f32 %v1770, %v1769
    %v1772 = vmul.f32 0.5, %v1771
    %v1773 = vsub.f32 1.5, %v1772
    %v1774 = vmul.f32 %v1769, %v1773
    %vm1775 = vweird.f32 %v1767
    %vm1776 = vweird.f32 %v1769
    %vm1777 = vmor %vm1775, %vm1776
    %v1778 = vsel %vm1777, %v1769, %v1774
    %v1779 = vrsqrt.pop %v1768
    %v1780 = vmul.f32 %v1779, %v1768
    %v1781 = vmul.f32 %v1780, %v1779
    %v1782 = vmul.f32 0.5, %v1781
    %v1783 = vsub.f32 1.5, %v1782
    %v1784 = vmul.f32 %v1779, %v1783
    %vm1785 = vweird.f32 %v1768
    %vm1786 = vweird.f32 %v1779
    %vm1787 = vmor %vm1785, %vm1786
    %v1788 = vsel %vm1787, %v1779, %v1784
    %v1789 = vmul.f32 %v1765, %v1778
    %v1790 = vmul.f32 %v1766, %v1788
    %v1792 = vperm.slane %v1741, 0
    %v1794 = vmul.f32 %v1789, %v1792
    %v1795 = vmul.f32 %v1790, %v1792
    %v1797 = vperm.slane %v1742, 0
    %v1799 = vadd.f32 %v1794, %v1797
    %v1800 = vadd.f32 %v1795, %v1797
    %v1801 = vld [vmem:[%s4] sm:$0xff]
    %v1802 = vld [vmem:[%s4 + $0x8] sm:$0xff]
    %v1803 = vld [vmem:[%s4 + $0x10] sm:$0xff]
    %v1804 = vld [vmem:[%s4 + $0x18] sm:$0xff]
    %v1806 = vsel %vm96, %v1799, 0
    %v1809 = vsel %vm96, %v1800, 0
    %1811 = vmatpush.msra.mxu0 0.0
    %1812 = vmatpush.msra.mxu0 0.0
    %1813 = vmatpush.msra.mxu0 0.0
    %1814 = vmatpush.msra.mxu0 0.0
    %1815 = vmatpush.msra.mxu0 0.0
    %1816 = vmatpush.msra.mxu0 0.0
    %1817 = vmatpush.msra.mxu0 0.0
    %1818 = vmatpush.msra.mxu0 0.0
    %1819 = vmatpush.msra.mxu0 0.0
    %1820 = vmatpush.msra.mxu0 0.0
    %1821 = vmatpush.msra.mxu0 0.0
    %1822 = vmatpush.msra.mxu0 0.0
    %1823 = vmatpush.msra.mxu0 %v1804
    %1824 = vmatpush.msra.mxu0 %v1803
    %1825 = vmatpush.msra.mxu0 %v1802
    %1826 = vmatpush.msra.mxu0 %v1801
    %1827 = vmatmul.f32.gmra.mxu0 %v1806
    %v1828 = vpop.f32.mrf.mxu0
    %v1829 = vadd.f32 0.0, %v1828
    %1830 = vmatmul.f32.gmra.mxu0 %v1809
    %v1831 = vpop.f32.mrf.mxu0
    %v1832 = vadd.f32 0.0, %v1831
    %1833 = vdwg.mxu0
    %v1834 = vmax.f32 %v1829, 0.0
    %v1835 = vmax.f32 %v1832, 0.0
    %v1836 = vld [vmem:[%s5] sm:$0xff]
    %v1837 = vld [vmem:[%s5 + $0x8] sm:$0xff]
    %v1838 = vld [vmem:[%s5 + $0x10] sm:$0xff]
    %v1839 = vld [vmem:[%s5 + $0x18] sm:$0xff]
    %v1840 = vld [vmem:[%s5 + $0x20] sm:$0xff]
    %v1841 = vld [vmem:[%s5 + $0x28] sm:$0xff]
    %v1842 = vld [vmem:[%s5 + $0x30] sm:$0xff]
    %v1843 = vld [vmem:[%s5 + $0x38] sm:$0xff]
    %vm1844 = vcmask 523264
    %v1846 = vsel %vm1844, %v1834, 0
    %v1849 = vsel %vm1844, %v1835, 0
    %1851 = vmatpush.msra.mxu0 0.0
    %1852 = vmatpush.msra.mxu0 0.0
    %1853 = vmatpush.msra.mxu0 0.0
    %1854 = vmatpush.msra.mxu0 0.0
    %1855 = vmatpush.msra.mxu0 0.0
    %1856 = vmatpush.msra.mxu0 0.0
    %1857 = vmatpush.msra.mxu0 0.0
    %1858 = vmatpush.msra.mxu0 0.0
    %1859 = vmatpush.msra.mxu0 %v1843
    %1860 = vmatpush.msra.mxu0 %v1842
    %1861 = vmatpush.msra.mxu0 %v1841
    %1862 = vmatpush.msra.mxu0 %v1840
    %1863 = vmatpush.msra.mxu0 %v1839
    %1864 = vmatpush.msra.mxu0 %v1838
    %1865 = vmatpush.msra.mxu0 %v1837
    %1866 = vmatpush.msra.mxu0 %v1836
    %1867 = vmatmul.f32.gmra.mxu0 %v1846
    %v1868 = vpop.f32.mrf.mxu0
    %v1869 = vadd.f32 %v1799, %v1868
    %1870 = vmatmul.f32.gmra.mxu0 %v1849
    %v1871 = vpop.f32.mrf.mxu0
    %v1872 = vadd.f32 %v1800, %v1871
    %1873 = vdwg.mxu0
    %v1874 = vld [vmem:[#allocation7] sm:$0x1]
    %v1875 = vld [vmem:[%s9] sm:$0x1]
    %v1876 = vsel %vm96, %v1869, 0.0
    %1877 = vadd.xlane.f32.xlu0 %v1876
    %v1878 = vpop.xlane.xlu0 %1877
    %v1879 = vsel %vm96, %v1872, 0.0
    %1880 = vadd.xlane.f32.xlu0 %v1879
    %v1881 = vpop.xlane.xlu0 %1880
    %v1882 = vmul.f32 %v1878, 0.03125
    %v1883 = vmul.f32 %v1881, 0.03125
    %v1884 = vmul.f32 %v1869, %v1869
    %v1885 = vmul.f32 %v1872, %v1872
    %v1886 = vsel %vm96, %v1884, 0.0
    %1887 = vadd.xlane.f32.xlu0 %v1886
    %v1888 = vpop.xlane.xlu0 %1887
    %v1889 = vsel %vm96, %v1885, 0.0
    %1890 = vadd.xlane.f32.xlu0 %v1889
    %v1891 = vpop.xlane.xlu0 %1890
    %v1892 = vmul.f32 %v1888, 0.03125
    %v1893 = vmul.f32 %v1891, 0.03125
    %v1894 = vmul.f32 %v1882, %v1882
    %v1895 = vmul.f32 %v1883, %v1883
    %v1896 = vsub.f32 %v1892, %v1894
    %v1897 = vsub.f32 %v1893, %v1895
    %v1898 = vsub.f32 %v1869, %v1882
    %v1899 = vsub.f32 %v1872, %v1883
    %v1900 = vadd.f32 %v1896, 1e-05
    %v1901 = vadd.f32 %v1897, 1e-05
    %v1902 = vrsqrt.pop %v1900
    %v1903 = vmul.f32 %v1902, %v1900
    %v1904 = vmul.f32 %v1903, %v1902
    %v1905 = vmul.f32 0.5, %v1904
    %v1906 = vsub.f32 1.5, %v1905
    %v1907 = vmul.f32 %v1902, %v1906
    %vm1908 = vweird.f32 %v1900
    %vm1909 = vweird.f32 %v1902
    %vm1910 = vmor %vm1908, %vm1909
    %v1911 = vsel %vm1910, %v1902, %v1907
    %v1912 = vrsqrt.pop %v1901
    %v1913 = vmul.f32 %v1912, %v1901
    %v1914 = vmul.f32 %v1913, %v1912
    %v1915 = vmul.f32 0.5, %v1914
    %v1916 = vsub.f32 1.5, %v1915
    %v1917 = vmul.f32 %v1912, %v1916
    %vm1918 = vweird.f32 %v1901
    %vm1919 = vweird.f32 %v1912
    %vm1920 = vmor %vm1918, %vm1919
    %v1921 = vsel %vm1920, %v1912, %v1917
    %v1922 = vmul.f32 %v1898, %v1911
    %v1923 = vmul.f32 %v1899, %v1921
    %v1925 = vperm.slane %v1874, 0
    %v1927 = vmul.f32 %v1922, %v1925
    %v1928 = vmul.f32 %v1923, %v1925
    %v1930 = vperm.slane %v1875, 0
    %v1932 = vadd.f32 %v1927, %v1930
    %v1933 = vadd.f32 %v1928, %v1930
    %s1934 = scalar_lea.vmem %s2, 32
    %v1935 = vld [vmem:[%s1934] sm:$0xff]
    %v1936 = vld [vmem:[%s1934 + $0x8] sm:$0xff]
    %v1937 = vld [vmem:[%s1934 + $0x10] sm:$0xff]
    %v1938 = vld [vmem:[%s1934 + $0x18] sm:$0xff]
    %v1940 = vsel %vm96, %v1932, 0
    %v1943 = vsel %vm96, %v1933, 0
    %1945 = vmatpush.msra.mxu0 0.0
    %1946 = vmatpush.msra.mxu0 0.0
    %1947 = vmatpush.msra.mxu0 0.0
    %1948 = vmatpush.msra.mxu0 0.0
    %1949 = vmatpush.msra.mxu0 0.0
    %1950 = vmatpush.msra.mxu0 0.0
    %1951 = vmatpush.msra.mxu0 0.0
    %1952 = vmatpush.msra.mxu0 0.0
    %1953 = vmatpush.msra.mxu0 0.0
    %1954 = vmatpush.msra.mxu0 0.0
    %1955 = vmatpush.msra.mxu0 0.0
    %1956 = vmatpush.msra.mxu0 0.0
    %1957 = vmatpush.msra.mxu0 %v1938
    %1958 = vmatpush.msra.mxu0 %v1937
    %1959 = vmatpush.msra.mxu0 %v1936
    %1960 = vmatpush.msra.mxu0 %v1935
    %1961 = vmatmul.f32.gmra.mxu0 %v1940
    %v1962 = vpop.f32.mrf.mxu0
    %v1963 = vadd.f32 0.0, %v1962
    %1964 = vmatmul.f32.gmra.mxu0 %v1943
    %v1965 = vpop.f32.mrf.mxu0
    %v1966 = vadd.f32 0.0, %v1965
    %1967 = vdwg.mxu0
    %1970 = vrot.lane.b32.xlu0 %v1963, 120
    %v1971 = vpop.permute.xlu0 %1970
    %1972 = vrot.lane.b32.xlu0 %v1966, 120
    %v1973 = vpop.permute.xlu0 %1972
    %1976 = vrot.lane.b32.xlu0 %v1963, 112
    %v1977 = vpop.permute.xlu0 %1976
    %1978 = vrot.lane.b32.xlu0 %v1966, 112
    %v1979 = vpop.permute.xlu0 %1978
    %1982 = vrot.lane.b32.xlu0 %v1963, 104
    %v1983 = vpop.permute.xlu0 %1982
    %1984 = vrot.lane.b32.xlu0 %v1966, 104
    %v1985 = vpop.permute.xlu0 %1984
    %v1988 = vrot.slane %v1977, 4
    %v1989 = vsel %vm147, %v1988, %v1963
    %v1990 = vrot.slane %v1963, 4
    %v1991 = vsel %vm147, %v1977, %v1990
    %v1993 = vunpack.c.l.s4 1983009808
    %v1994 = vunpack.c.0.s8 %v1993
    %v1995 = vperm.slane %v1989, %v1994
    %v1997 = vunpack.c.l.s4 1983009808
    %v1998 = vunpack.c.0.s8 %v1997
    %v1999 = vperm.slane %v1991, %v1998
    %v2000 = vrot.slane %v1983, 4
    %v2001 = vsel %vm147, %v2000, %v1971
    %v2002 = vrot.slane %v1971, 4
    %v2003 = vsel %vm147, %v1983, %v2002
    %v2005 = vunpack.c.l.s4 1983009808
    %v2006 = vunpack.c.0.s8 %v2005
    %v2007 = vperm.slane %v2001, %v2006
    %v2009 = vunpack.c.l.s4 1983009808
    %v2010 = vunpack.c.0.s8 %v2009
    %v2011 = vperm.slane %v2003, %v2010
    %v2012 = vrot.slane %v2007, 4
    %v2013 = vsel %vm147, %v2012, %v1995
    %v2014 = vrot.slane %v1995, 4
    %v2015 = vsel %vm147, %v2007, %v2014
    %v2017 = vunpack.c.l.s4 1934713408
    %v2018 = vunpack.c.0.s8 %v2017
    %v2019 = vperm.slane %v2013, %v2018
    %v2021 = vunpack.c.l.s4 1934713408
    %v2022 = vunpack.c.0.s8 %v2021
    %v2023 = vperm.slane %v2015, %v2022
    %v2024 = vrot.slane %v2011, 4
    %v2025 = vsel %vm147, %v2024, %v1999
    %v2026 = vrot.slane %v1999, 4
    %v2027 = vsel %vm147, %v2011, %v2026
    %v2029 = vunpack.c.l.s4 1934713408
    %v2030 = vunpack.c.0.s8 %v2029
    %v2031 = vperm.slane %v2025, %v2030
    %v2033 = vunpack.c.l.s4 1934713408
    %v2034 = vunpack.c.0.s8 %v2033
    %v2035 = vperm.slane %v2027, %v2034
    %v2036 = vrot.slane %v2019, 4
    %v2037 = vsel %vm147, 0.0, %v2036
    %v2038 = vrot.slane %v2023, 4
    %v2039 = vsel %vm147, 0.0, %v2038
    %v2040 = vrot.slane %v2031, 4
    %v2041 = vsel %vm147, 0.0, %v2040
    %v2042 = vrot.slane %v2035, 4
    %v2043 = vsel %vm147, 0.0, %v2042
    %v2044 = vrot.slane %v1979, 4
    %v2045 = vsel %vm147, %v2044, %v1966
    %v2046 = vrot.slane %v1966, 4
    %v2047 = vsel %vm147, %v1979, %v2046
    %v2049 = vunpack.c.l.s4 1983009808
    %v2050 = vunpack.c.0.s8 %v2049
    %v2051 = vperm.slane %v2045, %v2050
    %v2053 = vunpack.c.l.s4 1983009808
    %v2054 = vunpack.c.0.s8 %v2053
    %v2055 = vperm.slane %v2047, %v2054
    %v2056 = vrot.slane %v1985, 4
    %v2057 = vsel %vm147, %v2056, %v1973
    %v2058 = vrot.slane %v1973, 4
    %v2059 = vsel %vm147, %v1985, %v2058
    %v2061 = vunpack.c.l.s4 1983009808
    %v2062 = vunpack.c.0.s8 %v2061
    %v2063 = vperm.slane %v2057, %v2062
    %v2065 = vunpack.c.l.s4 1983009808
    %v2066 = vunpack.c.0.s8 %v2065
    %v2067 = vperm.slane %v2059, %v2066
    %v2068 = vrot.slane %v2063, 4
    %v2069 = vsel %vm147, %v2068, %v2051
    %v2070 = vrot.slane %v2051, 4
    %v2071 = vsel %vm147, %v2063, %v2070
    %v2073 = vunpack.c.l.s4 1934713408
    %v2074 = vunpack.c.0.s8 %v2073
    %v2075 = vperm.slane %v2069, %v2074
    %v2077 = vunpack.c.l.s4 1934713408
    %v2078 = vunpack.c.0.s8 %v2077
    %v2079 = vperm.slane %v2071, %v2078
    %v2080 = vrot.slane %v2067, 4
    %v2081 = vsel %vm147, %v2080, %v2055
    %v2082 = vrot.slane %v2055, 4
    %v2083 = vsel %vm147, %v2067, %v2082
    %v2085 = vunpack.c.l.s4 1934713408
    %v2086 = vunpack.c.0.s8 %v2085
    %v2087 = vperm.slane %v2081, %v2086
    %v2089 = vunpack.c.l.s4 1934713408
    %v2090 = vunpack.c.0.s8 %v2089
    %v2091 = vperm.slane %v2083, %v2090
    %v2092 = vrot.slane %v2075, 4
    %v2093 = vsel %vm147, 0.0, %v2092
    %v2094 = vrot.slane %v2079, 4
    %v2095 = vsel %vm147, 0.0, %v2094
    %v2096 = vrot.slane %v2087, 4
    %v2097 = vsel %vm147, 0.0, %v2096
    %v2098 = vrot.slane %v2091, 4
    %v2099 = vsel %vm147, 0.0, %v2098
    %v2100 = vsel %vm147, %v2038, %v2019
    %v2102 = vunpack.c.l.s4 1983009808
    %v2103 = vunpack.c.0.s8 %v2102
    %v2104 = vperm.slane %v2100, %v2103
    %v2105 = vrot.slane %v2039, 4
    %v2106 = vsel %vm147, %v2105, %v2037
    %v2108 = vunpack.c.l.s4 1983009808
    %v2109 = vunpack.c.0.s8 %v2108
    %v2110 = vperm.slane %v2106, %v2109
    %v2111 = vsel %vm147, %v2042, %v2031
    %v2113 = vunpack.c.l.s4 1983009808
    %v2114 = vunpack.c.0.s8 %v2113
    %v2115 = vperm.slane %v2111, %v2114
    %v2116 = vrot.slane %v2043, 4
    %v2117 = vsel %vm147, %v2116, %v2041
    %v2119 = vunpack.c.l.s4 1983009808
    %v2120 = vunpack.c.0.s8 %v2119
    %v2121 = vperm.slane %v2117, %v2120
    %v2122 = vrot.slane %v2110, 4
    %v2123 = vsel %vm147, %v2122, %v2104
    %v2124 = vrot.slane %v2104, 4
    %v2125 = vsel %vm147, %v2110, %v2124
    %v2127 = vunpack.c.l.s4 1934713408
    %v2128 = vunpack.c.0.s8 %v2127
    %v2129 = vperm.slane %v2123, %v2128
    %v2131 = vunpack.c.l.s4 1934713408
    %v2132 = vunpack.c.0.s8 %v2131
    %v2133 = vperm.slane %v2125, %v2132
    %v2134 = vrot.slane %v2121, 4
    %v2135 = vsel %vm147, %v2134, %v2115
    %v2136 = vrot.slane %v2115, 4
    %v2137 = vsel %vm147, %v2121, %v2136
    %v2139 = vunpack.c.l.s4 1934713408
    %v2140 = vunpack.c.0.s8 %v2139
    %v2141 = vperm.slane %v2135, %v2140
    %v2143 = vunpack.c.l.s4 1934713408
    %v2144 = vunpack.c.0.s8 %v2143
    %v2145 = vperm.slane %v2137, %v2144
    %v2146 = vrot.slane %v2141, 4
    %v2147 = vsel %vm147, %v2146, %v2129
    %v2148 = vrot.slane %v2129, 4
    %v2149 = vsel %vm147, %v2141, %v2148
    %v2150 = vrot.slane %v2145, 4
    %v2151 = vsel %vm147, %v2150, %v2133
    %v2152 = vrot.slane %v2133, 4
    %v2153 = vsel %vm147, %v2145, %v2152
    %v2154 = vsel %vm147, %v2094, %v2075
    %v2156 = vunpack.c.l.s4 1983009808
    %v2157 = vunpack.c.0.s8 %v2156
    %v2158 = vperm.slane %v2154, %v2157
    %v2159 = vrot.slane %v2095, 4
    %v2160 = vsel %vm147, %v2159, %v2093
    %v2162 = vunpack.c.l.s4 1983009808
    %v2163 = vunpack.c.0.s8 %v2162
    %v2164 = vperm.slane %v2160, %v2163
    %v2165 = vsel %vm147, %v2098, %v2087
    %v2167 = vunpack.c.l.s4 1983009808
    %v2168 = vunpack.c.0.s8 %v2167
    %v2169 = vperm.slane %v2165, %v2168
    %v2170 = vrot.slane %v2099, 4
    %v2171 = vsel %vm147, %v2170, %v2097
    %v2173 = vunpack.c.l.s4 1983009808
    %v2174 = vunpack.c.0.s8 %v2173
    %v2175 = vperm.slane %v2171, %v2174
    %v2176 = vrot.slane %v2164, 4
    %v2177 = vsel %vm147, %v2176, %v2158
    %v2178 = vrot.slane %v2158, 4
    %v2179 = vsel %vm147, %v2164, %v2178
    %v2181 = vunpack.c.l.s4 1934713408
    %v2182 = vunpack.c.0.s8 %v2181
    %v2183 = vperm.slane %v2177, %v2182
    %v2185 = vunpack.c.l.s4 1934713408
    %v2186 = vunpack.c.0.s8 %v2185
    %v2187 = vperm.slane %v2179, %v2186
    %v2188 = vrot.slane %v2175, 4
    %v2189 = vsel %vm147, %v2188, %v2169
    %v2190 = vrot.slane %v2169, 4
    %v2191 = vsel %vm147, %v2175, %v2190
    %v2193 = vunpack.c.l.s4 1934713408
    %v2194 = vunpack.c.0.s8 %v2193
    %v2195 = vperm.slane %v2189, %v2194
    %v2197 = vunpack.c.l.s4 1934713408
    %v2198 = vunpack.c.0.s8 %v2197
    %v2199 = vperm.slane %v2191, %v2198
    %v2200 = vrot.slane %v2195, 4
    %v2201 = vsel %vm147, %v2200, %v2183
    %v2202 = vrot.slane %v2183, 4
    %v2203 = vsel %vm147, %v2195, %v2202
    %v2204 = vrot.slane %v2199, 4
    %v2205 = vsel %vm147, %v2204, %v2187
    %v2206 = vrot.slane %v2187, 4
    %v2207 = vsel %vm147, %v2199, %v2206
    %2208 = vrot.lane.b32.xlu0 %v1963, 96
    %v2209 = vpop.permute.xlu0 %2208
    %2210 = vrot.lane.b32.xlu0 %v1966, 96
    %v2211 = vpop.permute.xlu0 %2210
    %2212 = vrot.lane.b32.xlu0 %v1971, 96
    %v2213 = vpop.permute.xlu0 %2212
    %2214 = vrot.lane.b32.xlu0 %v1973, 96
    %v2215 = vpop.permute.xlu0 %2214
    %2216 = vrot.lane.b32.xlu0 %v1977, 96
    %v2217 = vpop.permute.xlu0 %2216
    %2218 = vrot.lane.b32.xlu0 %v1979, 96
    %v2219 = vpop.permute.xlu0 %2218
    %2220 = vrot.lane.b32.xlu0 %v1983, 96
    %v2221 = vpop.permute.xlu0 %2220
    %2222 = vrot.lane.b32.xlu0 %v1985, 96
    %v2223 = vpop.permute.xlu0 %2222
    %v2232 = vrot.slane %v2217, 4
    %v2233 = vsel %vm147, %v2232, %v2209
    %v2234 = vrot.slane %v2209, 4
    %v2235 = vsel %vm147, %v2217, %v2234
    %v2237 = vunpack.c.l.s4 1983009808
    %v2238 = vunpack.c.0.s8 %v2237
    %v2239 = vperm.slane %v2233, %v2238
    %v2241 = vunpack.c.l.s4 1983009808
    %v2242 = vunpack.c.0.s8 %v2241
    %v2243 = vperm.slane %v2235, %v2242
    %v2244 = vrot.slane %v2221, 4
    %v2245 = vsel %vm147, %v2244, %v2213
    %v2246 = vrot.slane %v2213, 4
    %v2247 = vsel %vm147, %v2221, %v2246
    %v2249 = vunpack.c.l.s4 1983009808
    %v2250 = vunpack.c.0.s8 %v2249
    %v2251 = vperm.slane %v2245, %v2250
    %v2253 = vunpack.c.l.s4 1983009808
    %v2254 = vunpack.c.0.s8 %v2253
    %v2255 = vperm.slane %v2247, %v2254
    %v2256 = vrot.slane %v2251, 4
    %v2257 = vsel %vm147, %v2256, %v2239
    %v2258 = vrot.slane %v2239, 4
    %v2259 = vsel %vm147, %v2251, %v2258
    %v2261 = vunpack.c.l.s4 1934713408
    %v2262 = vunpack.c.0.s8 %v2261
    %v2263 = vperm.slane %v2257, %v2262
    %v2265 = vunpack.c.l.s4 1934713408
    %v2266 = vunpack.c.0.s8 %v2265
    %v2267 = vperm.slane %v2259, %v2266
    %v2268 = vrot.slane %v2255, 4
    %v2269 = vsel %vm147, %v2268, %v2243
    %v2270 = vrot.slane %v2243, 4
    %v2271 = vsel %vm147, %v2255, %v2270
    %v2273 = vunpack.c.l.s4 1934713408
    %v2274 = vunpack.c.0.s8 %v2273
    %v2275 = vperm.slane %v2269, %v2274
    %v2277 = vunpack.c.l.s4 1934713408
    %v2278 = vunpack.c.0.s8 %v2277
    %v2279 = vperm.slane %v2271, %v2278
    %v2280 = vrot.slane %v2263, 4
    %v2281 = vsel %vm147, 0.0, %v2280
    %v2282 = vrot.slane %v2267, 4
    %v2283 = vsel %vm147, 0.0, %v2282
    %v2284 = vrot.slane %v2275, 4
    %v2285 = vsel %vm147, 0.0, %v2284
    %v2286 = vrot.slane %v2279, 4
    %v2287 = vsel %vm147, 0.0, %v2286
    %v2288 = vrot.slane %v2219, 4
    %v2289 = vsel %vm147, %v2288, %v2211
    %v2290 = vrot.slane %v2211, 4
    %v2291 = vsel %vm147, %v2219, %v2290
    %v2293 = vunpack.c.l.s4 1983009808
    %v2294 = vunpack.c.0.s8 %v2293
    %v2295 = vperm.slane %v2289, %v2294
    %v2297 = vunpack.c.l.s4 1983009808
    %v2298 = vunpack.c.0.s8 %v2297
    %v2299 = vperm.slane %v2291, %v2298
    %v2300 = vrot.slane %v2223, 4
    %v2301 = vsel %vm147, %v2300, %v2215
    %v2302 = vrot.slane %v2215, 4
    %v2303 = vsel %vm147, %v2223, %v2302
    %v2305 = vunpack.c.l.s4 1983009808
    %v2306 = vunpack.c.0.s8 %v2305
    %v2307 = vperm.slane %v2301, %v2306
    %v2309 = vunpack.c.l.s4 1983009808
    %v2310 = vunpack.c.0.s8 %v2309
    %v2311 = vperm.slane %v2303, %v2310
    %v2312 = vrot.slane %v2307, 4
    %v2313 = vsel %vm147, %v2312, %v2295
    %v2314 = vrot.slane %v2295, 4
    %v2315 = vsel %vm147, %v2307, %v2314
    %v2317 = vunpack.c.l.s4 1934713408
    %v2318 = vunpack.c.0.s8 %v2317
    %v2319 = vperm.slane %v2313, %v2318
    %v2321 = vunpack.c.l.s4 1934713408
    %v2322 = vunpack.c.0.s8 %v2321
    %v2323 = vperm.slane %v2315, %v2322
    %v2324 = vrot.slane %v2311, 4
    %v2325 = vsel %vm147, %v2324, %v2299
    %v2326 = vrot.slane %v2299, 4
    %v2327 = vsel %vm147, %v2311, %v2326
    %v2329 = vunpack.c.l.s4 1934713408
    %v2330 = vunpack.c.0.s8 %v2329
    %v2331 = vperm.slane %v2325, %v2330
    %v2333 = vunpack.c.l.s4 1934713408
    %v2334 = vunpack.c.0.s8 %v2333
    %v2335 = vperm.slane %v2327, %v2334
    %v2336 = vrot.slane %v2319, 4
    %v2337 = vsel %vm147, 0.0, %v2336
    %v2338 = vrot.slane %v2323, 4
    %v2339 = vsel %vm147, 0.0, %v2338
    %v2340 = vrot.slane %v2331, 4
    %v2341 = vsel %vm147, 0.0, %v2340
    %v2342 = vrot.slane %v2335, 4
    %v2343 = vsel %vm147, 0.0, %v2342
    %v2344 = vsel %vm147, %v2282, %v2263
    %v2346 = vunpack.c.l.s4 1983009808
    %v2347 = vunpack.c.0.s8 %v2346
    %v2348 = vperm.slane %v2344, %v2347
    %v2349 = vrot.slane %v2283, 4
    %v2350 = vsel %vm147, %v2349, %v2281
    %v2352 = vunpack.c.l.s4 1983009808
    %v2353 = vunpack.c.0.s8 %v2352
    %v2354 = vperm.slane %v2350, %v2353
    %v2355 = vsel %vm147, %v2286, %v2275
    %v2357 = vunpack.c.l.s4 1983009808
    %v2358 = vunpack.c.0.s8 %v2357
    %v2359 = vperm.slane %v2355, %v2358
    %v2360 = vrot.slane %v2287, 4
    %v2361 = vsel %vm147, %v2360, %v2285
    %v2363 = vunpack.c.l.s4 1983009808
    %v2364 = vunpack.c.0.s8 %v2363
    %v2365 = vperm.slane %v2361, %v2364
    %v2366 = vrot.slane %v2354, 4
    %v2367 = vsel %vm147, %v2366, %v2348
    %v2368 = vrot.slane %v2348, 4
    %v2369 = vsel %vm147, %v2354, %v2368
    %v2371 = vunpack.c.l.s4 1934713408
    %v2372 = vunpack.c.0.s8 %v2371
    %v2373 = vperm.slane %v2367, %v2372
    %v2375 = vunpack.c.l.s4 1934713408
    %v2376 = vunpack.c.0.s8 %v2375
    %v2377 = vperm.slane %v2369, %v2376
    %v2378 = vrot.slane %v2365, 4
    %v2379 = vsel %vm147, %v2378, %v2359
    %v2380 = vrot.slane %v2359, 4
    %v2381 = vsel %vm147, %v2365, %v2380
    %v2383 = vunpack.c.l.s4 1934713408
    %v2384 = vunpack.c.0.s8 %v2383
    %v2385 = vperm.slane %v2379, %v2384
    %v2387 = vunpack.c.l.s4 1934713408
    %v2388 = vunpack.c.0.s8 %v2387
    %v2389 = vperm.slane %v2381, %v2388
    %v2390 = vrot.slane %v2385, 4
    %v2391 = vsel %vm147, %v2390, %v2373
    %v2392 = vrot.slane %v2373, 4
    %v2393 = vsel %vm147, %v2385, %v2392
    %v2394 = vrot.slane %v2389, 4
    %v2395 = vsel %vm147, %v2394, %v2377
    %v2396 = vrot.slane %v2377, 4
    %v2397 = vsel %vm147, %v2389, %v2396
    %v2398 = vsel %vm147, %v2338, %v2319
    %v2400 = vunpack.c.l.s4 1983009808
    %v2401 = vunpack.c.0.s8 %v2400
    %v2402 = vperm.slane %v2398, %v2401
    %v2403 = vrot.slane %v2339, 4
    %v2404 = vsel %vm147, %v2403, %v2337
    %v2406 = vunpack.c.l.s4 1983009808
    %v2407 = vunpack.c.0.s8 %v2406
    %v2408 = vperm.slane %v2404, %v2407
    %v2409 = vsel %vm147, %v2342, %v2331
    %v2411 = vunpack.c.l.s4 1983009808
    %v2412 = vunpack.c.0.s8 %v2411
    %v2413 = vperm.slane %v2409, %v2412
    %v2414 = vrot.slane %v2343, 4
    %v2415 = vsel %vm147, %v2414, %v2341
    %v2417 = vunpack.c.l.s4 1983009808
    %v2418 = vunpack.c.0.s8 %v2417
    %v2419 = vperm.slane %v2415, %v2418
    %v2420 = vrot.slane %v2408, 4
    %v2421 = vsel %vm147, %v2420, %v2402
    %v2422 = vrot.slane %v2402, 4
    %v2423 = vsel %vm147, %v2408, %v2422
    %v2425 = vunpack.c.l.s4 1934713408
    %v2426 = vunpack.c.0.s8 %v2425
    %v2427 = vperm.slane %v2421, %v2426
    %v2429 = vunpack.c.l.s4 1934713408
    %v2430 = vunpack.c.0.s8 %v2429
    %v2431 = vperm.slane %v2423, %v2430
    %v2432 = vrot.slane %v2419, 4
    %v2433 = vsel %vm147, %v2432, %v2413
    %v2434 = vrot.slane %v2413, 4
    %v2435 = vsel %vm147, %v2419, %v2434
    %v2437 = vunpack.c.l.s4 1934713408
    %v2438 = vunpack.c.0.s8 %v2437
    %v2439 = vperm.slane %v2433, %v2438
    %v2441 = vunpack.c.l.s4 1934713408
    %v2442 = vunpack.c.0.s8 %v2441
    %v2443 = vperm.slane %v2435, %v2442
    %v2444 = vrot.slane %v2439, 4
    %v2445 = vsel %vm147, %v2444, %v2427
    %v2446 = vrot.slane %v2427, 4
    %v2447 = vsel %vm147, %v2439, %v2446
    %v2448 = vrot.slane %v2443, 4
    %v2449 = vsel %vm147, %v2448, %v2431
    %v2450 = vrot.slane %v2431, 4
    %v2451 = vsel %vm147, %v2443, %v2450
    %2452 = vrot.lane.b32.xlu0 %v1963, 64
    %v2453 = vpop.permute.xlu0 %2452
    %2454 = vrot.lane.b32.xlu0 %v1966, 64
    %v2455 = vpop.permute.xlu0 %2454
    %2456 = vrot.lane.b32.xlu0 %v1971, 64
    %v2457 = vpop.permute.xlu0 %2456
    %2458 = vrot.lane.b32.xlu0 %v1973, 64
    %v2459 = vpop.permute.xlu0 %2458
    %2460 = vrot.lane.b32.xlu0 %v1977, 64
    %v2461 = vpop.permute.xlu0 %2460
    %2462 = vrot.lane.b32.xlu0 %v1979, 64
    %v2463 = vpop.permute.xlu0 %2462
    %2464 = vrot.lane.b32.xlu0 %v1983, 64
    %v2465 = vpop.permute.xlu0 %2464
    %2466 = vrot.lane.b32.xlu0 %v1985, 64
    %v2467 = vpop.permute.xlu0 %2466
    %v2476 = vrot.slane %v2461, 4
    %v2477 = vsel %vm147, %v2476, %v2453
    %v2478 = vrot.slane %v2453, 4
    %v2479 = vsel %vm147, %v2461, %v2478
    %v2481 = vunpack.c.l.s4 1983009808
    %v2482 = vunpack.c.0.s8 %v2481
    %v2483 = vperm.slane %v2477, %v2482
    %v2485 = vunpack.c.l.s4 1983009808
    %v2486 = vunpack.c.0.s8 %v2485
    %v2487 = vperm.slane %v2479, %v2486
    %v2488 = vrot.slane %v2465, 4
    %v2489 = vsel %vm147, %v2488, %v2457
    %v2490 = vrot.slane %v2457, 4
    %v2491 = vsel %vm147, %v2465, %v2490
    %v2493 = vunpack.c.l.s4 1983009808
    %v2494 = vunpack.c.0.s8 %v2493
    %v2495 = vperm.slane %v2489, %v2494
    %v2497 = vunpack.c.l.s4 1983009808
    %v2498 = vunpack.c.0.s8 %v2497
    %v2499 = vperm.slane %v2491, %v2498
    %v2500 = vrot.slane %v2495, 4
    %v2501 = vsel %vm147, %v2500, %v2483
    %v2502 = vrot.slane %v2483, 4
    %v2503 = vsel %vm147, %v2495, %v2502
    %v2505 = vunpack.c.l.s4 1934713408
    %v2506 = vunpack.c.0.s8 %v2505
    %v2507 = vperm.slane %v2501, %v2506
    %v2509 = vunpack.c.l.s4 1934713408
    %v2510 = vunpack.c.0.s8 %v2509
    %v2511 = vperm.slane %v2503, %v2510
    %v2512 = vrot.slane %v2499, 4
    %v2513 = vsel %vm147, %v2512, %v2487
    %v2514 = vrot.slane %v2487, 4
    %v2515 = vsel %vm147, %v2499, %v2514
    %v2517 = vunpack.c.l.s4 1934713408
    %v2518 = vunpack.c.0.s8 %v2517
    %v2519 = vperm.slane %v2513, %v2518
    %v2521 = vunpack.c.l.s4 1934713408
    %v2522 = vunpack.c.0.s8 %v2521
    %v2523 = vperm.slane %v2515, %v2522
    %v2524 = vrot.slane %v2507, 4
    %v2525 = vsel %vm147, 0.0, %v2524
    %v2526 = vrot.slane %v2511, 4
    %v2527 = vsel %vm147, 0.0, %v2526
    %v2528 = vrot.slane %v2519, 4
    %v2529 = vsel %vm147, 0.0, %v2528
    %v2530 = vrot.slane %v2523, 4
    %v2531 = vsel %vm147, 0.0, %v2530
    %v2532 = vrot.slane %v2463, 4
    %v2533 = vsel %vm147, %v2532, %v2455
    %v2534 = vrot.slane %v2455, 4
    %v2535 = vsel %vm147, %v2463, %v2534
    %v2537 = vunpack.c.l.s4 1983009808
    %v2538 = vunpack.c.0.s8 %v2537
    %v2539 = vperm.slane %v2533, %v2538
    %v2541 = vunpack.c.l.s4 1983009808
    %v2542 = vunpack.c.0.s8 %v2541
    %v2543 = vperm.slane %v2535, %v2542
    %v2544 = vrot.slane %v2467, 4
    %v2545 = vsel %vm147, %v2544, %v2459
    %v2546 = vrot.slane %v2459, 4
    %v2547 = vsel %vm147, %v2467, %v2546
    %v2549 = vunpack.c.l.s4 1983009808
    %v2550 = vunpack.c.0.s8 %v2549
    %v2551 = vperm.slane %v2545, %v2550
    %v2553 = vunpack.c.l.s4 1983009808
    %v2554 = vunpack.c.0.s8 %v2553
    %v2555 = vperm.slane %v2547, %v2554
    %v2556 = vrot.slane %v2551, 4
    %v2557 = vsel %vm147, %v2556, %v2539
    %v2558 = vrot.slane %v2539, 4
    %v2559 = vsel %vm147, %v2551, %v2558
    %v2561 = vunpack.c.l.s4 1934713408
    %v2562 = vunpack.c.0.s8 %v2561
    %v2563 = vperm.slane %v2557, %v2562
    %v2565 = vunpack.c.l.s4 1934713408
    %v2566 = vunpack.c.0.s8 %v2565
    %v2567 = vperm.slane %v2559, %v2566
    %v2568 = vrot.slane %v2555, 4
    %v2569 = vsel %vm147, %v2568, %v2543
    %v2570 = vrot.slane %v2543, 4
    %v2571 = vsel %vm147, %v2555, %v2570
    %v2573 = vunpack.c.l.s4 1934713408
    %v2574 = vunpack.c.0.s8 %v2573
    %v2575 = vperm.slane %v2569, %v2574
    %v2577 = vunpack.c.l.s4 1934713408
    %v2578 = vunpack.c.0.s8 %v2577
    %v2579 = vperm.slane %v2571, %v2578
    %v2580 = vrot.slane %v2563, 4
    %v2581 = vsel %vm147, 0.0, %v2580
    %v2582 = vrot.slane %v2567, 4
    %v2583 = vsel %vm147, 0.0, %v2582
    %v2584 = vrot.slane %v2575, 4
    %v2585 = vsel %vm147, 0.0, %v2584
    %v2586 = vrot.slane %v2579, 4
    %v2587 = vsel %vm147, 0.0, %v2586
    %v2588 = vsel %vm147, %v2526, %v2507
    %v2590 = vunpack.c.l.s4 1983009808
    %v2591 = vunpack.c.0.s8 %v2590
    %v2592 = vperm.slane %v2588, %v2591
    %v2593 = vrot.slane %v2527, 4
    %v2594 = vsel %vm147, %v2593, %v2525
    %v2596 = vunpack.c.l.s4 1983009808
    %v2597 = vunpack.c.0.s8 %v2596
    %v2598 = vperm.slane %v2594, %v2597
    %v2599 = vsel %vm147, %v2530, %v2519
    %v2601 = vunpack.c.l.s4 1983009808
    %v2602 = vunpack.c.0.s8 %v2601
    %v2603 = vperm.slane %v2599, %v2602
    %v2604 = vrot.slane %v2531, 4
    %v2605 = vsel %vm147, %v2604, %v2529
    %v2607 = vunpack.c.l.s4 1983009808
    %v2608 = vunpack.c.0.s8 %v2607
    %v2609 = vperm.slane %v2605, %v2608
    %v2610 = vrot.slane %v2598, 4
    %v2611 = vsel %vm147, %v2610, %v2592
    %v2612 = vrot.slane %v2592, 4
    %v2613 = vsel %vm147, %v2598, %v2612
    %v2615 = vunpack.c.l.s4 1934713408
    %v2616 = vunpack.c.0.s8 %v2615
    %v2617 = vperm.slane %v2611, %v2616
    %v2619 = vunpack.c.l.s4 1934713408
    %v2620 = vunpack.c.0.s8 %v2619
    %v2621 = vperm.slane %v2613, %v2620
    %v2622 = vrot.slane %v2609, 4
    %v2623 = vsel %vm147, %v2622, %v2603
    %v2624 = vrot.slane %v2603, 4
    %v2625 = vsel %vm147, %v2609, %v2624
    %v2627 = vunpack.c.l.s4 1934713408
    %v2628 = vunpack.c.0.s8 %v2627
    %v2629 = vperm.slane %v2623, %v2628
    %v2631 = vunpack.c.l.s4 1934713408
    %v2632 = vunpack.c.0.s8 %v2631
    %v2633 = vperm.slane %v2625, %v2632
    %v2634 = vrot.slane %v2629, 4
    %v2635 = vsel %vm147, %v2634, %v2617
    %v2636 = vrot.slane %v2617, 4
    %v2637 = vsel %vm147, %v2629, %v2636
    %v2638 = vrot.slane %v2633, 4
    %v2639 = vsel %vm147, %v2638, %v2621
    %v2640 = vrot.slane %v2621, 4
    %v2641 = vsel %vm147, %v2633, %v2640
    %v2642 = vsel %vm147, %v2582, %v2563
    %v2644 = vunpack.c.l.s4 1983009808
    %v2645 = vunpack.c.0.s8 %v2644
    %v2646 = vperm.slane %v2642, %v2645
    %v2647 = vrot.slane %v2583, 4
    %v2648 = vsel %vm147, %v2647, %v2581
    %v2650 = vunpack.c.l.s4 1983009808
    %v2651 = vunpack.c.0.s8 %v2650
    %v2652 = vperm.slane %v2648, %v2651
    %v2653 = vsel %vm147, %v2586, %v2575
    %v2655 = vunpack.c.l.s4 1983009808
    %v2656 = vunpack.c.0.s8 %v2655
    %v2657 = vperm.slane %v2653, %v2656
    %v2658 = vrot.slane %v2587, 4
    %v2659 = vsel %vm147, %v2658, %v2585
    %v2661 = vunpack.c.l.s4 1983009808
    %v2662 = vunpack.c.0.s8 %v2661
    %v2663 = vperm.slane %v2659, %v2662
    %v2664 = vrot.slane %v2652, 4
    %v2665 = vsel %vm147, %v2664, %v2646
    %v2666 = vrot.slane %v2646, 4
    %v2667 = vsel %vm147, %v2652, %v2666
    %v2669 = vunpack.c.l.s4 1934713408
    %v2670 = vunpack.c.0.s8 %v2669
    %v2671 = vperm.slane %v2665, %v2670
    %v2673 = vunpack.c.l.s4 1934713408
    %v2674 = vunpack.c.0.s8 %v2673
    %v2675 = vperm.slane %v2667, %v2674
    %v2676 = vrot.slane %v2663, 4
    %v2677 = vsel %vm147, %v2676, %v2657
    %v2678 = vrot.slane %v2657, 4
    %v2679 = vsel %vm147, %v2663, %v2678
    %v2681 = vunpack.c.l.s4 1934713408
    %v2682 = vunpack.c.0.s8 %v2681
    %v2683 = vperm.slane %v2677, %v2682
    %v2685 = vunpack.c.l.s4 1934713408
    %v2686 = vunpack.c.0.s8 %v2685
    %v2687 = vperm.slane %v2679, %v2686
    %v2688 = vrot.slane %v2683, 4
    %v2689 = vsel %vm147, %v2688, %v2671
    %v2690 = vrot.slane %v2671, 4
    %v2691 = vsel %vm147, %v2683, %v2690
    %v2692 = vrot.slane %v2687, 4
    %v2693 = vsel %vm147, %v2692, %v2675
    %v2694 = vrot.slane %v2675, 4
    %v2695 = vsel %vm147, %v2687, %v2694
    %v2697 = vsel %vm855, %v2147, 0
    %v2700 = vsel %vm855, %v2391, 0
    %2702 = vmatpush.xpose.msra.mxu0 0.0
    %2703 = vmatpush.xpose.msra.mxu0 0.0
    %2704 = vmatpush.xpose.msra.mxu0 0.0
    %2705 = vmatpush.xpose.msra.mxu0 0.0
    %2706 = vmatpush.xpose.msra.mxu0 0.0
    %2707 = vmatpush.xpose.msra.mxu0 0.0
    %2708 = vmatpush.xpose.msra.mxu0 0.0
    %2709 = vmatpush.xpose.msra.mxu0 0.0
    %2710 = vmatpush.xpose.msra.mxu0 0.0
    %2711 = vmatpush.xpose.msra.mxu0 0.0
    %2712 = vmatpush.xpose.msra.mxu0 0.0
    %2713 = vmatpush.xpose.msra.mxu0 0.0
    %2714 = vmatpush.xpose.msra.mxu0 0.0
    %2715 = vmatpush.xpose.msra.mxu0 0.0
    %2716 = vmatpush.xpose.msra.mxu0 0.0
    %2717 = vmatpush.xpose.msra.mxu0 %v2700
    %2718 = vmatmul.f32.gmra.mxu0 %v2697
    %v2719 = vpop.f32.mrf.mxu0
    %v2720 = vadd.f32 0.0, %v2719
    %2721 = vdwg.mxu0
    %v2723 = vsel %vm855, %v2149, 0
    %v2726 = vsel %vm855, %v2393, 0
    %2728 = vmatpush.xpose.msra.mxu0 0.0
    %2729 = vmatpush.xpose.msra.mxu0 0.0
    %2730 = vmatpush.xpose.msra.mxu0 0.0
    %2731 = vmatpush.xpose.msra.mxu0 0.0
    %2732 = vmatpush.xpose.msra.mxu0 0.0
    %2733 = vmatpush.xpose.msra.mxu0 0.0
    %2734 = vmatpush.xpose.msra.mxu0 0.0
    %2735 = vmatpush.xpose.msra.mxu0 0.0
    %2736 = vmatpush.xpose.msra.mxu0 0.0
    %2737 = vmatpush.xpose.msra.mxu0 0.0
    %2738 = vmatpush.xpose.msra.mxu0 0.0
    %2739 = vmatpush.xpose.msra.mxu0 0.0
    %2740 = vmatpush.xpose.msra.mxu0 0.0
    %2741 = vmatpush.xpose.msra.mxu0 0.0
    %2742 = vmatpush.xpose.msra.mxu0 0.0
    %2743 = vmatpush.xpose.msra.mxu0 %v2726
    %2744 = vmatmul.f32.gmra.mxu0 %v2723
    %v2745 = vpop.f32.mrf.mxu0
    %v2746 = vadd.f32 0.0, %v2745
    %2747 = vdwg.mxu0
    %v2749 = vsel %vm855, %v2151, 0
    %v2752 = vsel %vm855, %v2395, 0
    %2754 = vmatpush.xpose.msra.mxu0 0.0
    %2755 = vmatpush.xpose.msra.mxu0 0.0
    %2756 = vmatpush.xpose.msra.mxu0 0.0
    %2757 = vmatpush.xpose.msra.mxu0 0.0
    %2758 = vmatpush.xpose.msra.mxu0 0.0
    %2759 = vmatpush.xpose.msra.mxu0 0.0
    %2760 = vmatpush.xpose.msra.mxu0 0.0
    %2761 = vmatpush.xpose.msra.mxu0 0.0
    %2762 = vmatpush.xpose.msra.mxu0 0.0
    %2763 = vmatpush.xpose.msra.mxu0 0.0
    %2764 = vmatpush.xpose.msra.mxu0 0.0
    %2765 = vmatpush.xpose.msra.mxu0 0.0
    %2766 = vmatpush.xpose.msra.mxu0 0.0
    %2767 = vmatpush.xpose.msra.mxu0 0.0
    %2768 = vmatpush.xpose.msra.mxu0 0.0
    %2769 = vmatpush.xpose.msra.mxu0 %v2752
    %2770 = vmatmul.f32.gmra.mxu0 %v2749
    %v2771 = vpop.f32.mrf.mxu0
    %v2772 = vadd.f32 0.0, %v2771
    %2773 = vdwg.mxu0
    %v2775 = vsel %vm855, %v2153, 0
    %v2778 = vsel %vm855, %v2397, 0
    %2780 = vmatpush.xpose.msra.mxu0 0.0
    %2781 = vmatpush.xpose.msra.mxu0 0.0
    %2782 = vmatpush.xpose.msra.mxu0 0.0
    %2783 = vmatpush.xpose.msra.mxu0 0.0
    %2784 = vmatpush.xpose.msra.mxu0 0.0
    %2785 = vmatpush.xpose.msra.mxu0 0.0
    %2786 = vmatpush.xpose.msra.mxu0 0.0
    %2787 = vmatpush.xpose.msra.mxu0 0.0
    %2788 = vmatpush.xpose.msra.mxu0 0.0
    %2789 = vmatpush.xpose.msra.mxu0 0.0
    %2790 = vmatpush.xpose.msra.mxu0 0.0
    %2791 = vmatpush.xpose.msra.mxu0 0.0
    %2792 = vmatpush.xpose.msra.mxu0 0.0
    %2793 = vmatpush.xpose.msra.mxu0 0.0
    %2794 = vmatpush.xpose.msra.mxu0 0.0
    %2795 = vmatpush.xpose.msra.mxu0 %v2778
    %2796 = vmatmul.f32.gmra.mxu0 %v2775
    %v2797 = vpop.f32.mrf.mxu0
    %v2798 = vadd.f32 0.0, %v2797
    %2799 = vdwg.mxu0
    %v2801 = vsel %vm855, %v2201, 0
    %v2804 = vsel %vm855, %v2445, 0
    %2806 = vmatpush.xpose.msra.mxu0 0.0
    %2807 = vmatpush.xpose.msra.mxu0 0.0
    %2808 = vmatpush.xpose.msra.mxu0 0.0
    %2809 = vmatpush.xpose.msra.mxu0 0.0
    %2810 = vmatpush.xpose.msra.mxu0 0.0
    %2811 = vmatpush.xpose.msra.mxu0 0.0
    %2812 = vmatpush.xpose.msra.mxu0 0.0
    %2813 = vmatpush.xpose.msra.mxu0 0.0
    %2814 = vmatpush.xpose.msra.mxu0 0.0
    %2815 = vmatpush.xpose.msra.mxu0 0.0
    %2816 = vmatpush.xpose.msra.mxu0 0.0
    %2817 = vmatpush.xpose.msra.mxu0 0.0
    %2818 = vmatpush.xpose.msra.mxu0 0.0
    %2819 = vmatpush.xpose.msra.mxu0 0.0
    %2820 = vmatpush.xpose.msra.mxu0 0.0
    %2821 = vmatpush.xpose.msra.mxu0 %v2804
    %2822 = vmatmul.f32.gmra.mxu0 %v2801
    %v2823 = vpop.f32.mrf.mxu0
    %v2824 = vadd.f32 0.0, %v2823
    %2825 = vdwg.mxu0
    %v2827 = vsel %vm855, %v2203, 0
    %v2830 = vsel %vm855, %v2447, 0
    %2832 = vmatpush.xpose.msra.mxu0 0.0
    %2833 = vmatpush.xpose.msra.mxu0 0.0
    %2834 = vmatpush.xpose.msra.mxu0 0.0
    %2835 = vmatpush.xpose.msra.mxu0 0.0
    %2836 = vmatpush.xpose.msra.mxu0 0.0
    %2837 = vmatpush.xpose.msra.mxu0 0.0
    %2838 = vmatpush.xpose.msra.mxu0 0.0
    %2839 = vmatpush.xpose.msra.mxu0 0.0
    %2840 = vmatpush.xpose.msra.mxu0 0.0
    %2841 = vmatpush.xpose.msra.mxu0 0.0
    %2842 = vmatpush.xpose.msra.mxu0 0.0
    %2843 = vmatpush.xpose.msra.mxu0 0.0
    %2844 = vmatpush.xpose.msra.mxu0 0.0
    %2845 = vmatpush.xpose.msra.mxu0 0.0
    %2846 = vmatpush.xpose.msra.mxu0 0.0
    %2847 = vmatpush.xpose.msra.mxu0 %v2830
    %2848 = vmatmul.f32.gmra.mxu0 %v2827
    %v2849 = vpop.f32.mrf.mxu0
    %v2850 = vadd.f32 0.0, %v2849
    %2851 = vdwg.mxu0
    %v2853 = vsel %vm855, %v2205, 0
    %v2856 = vsel %vm855, %v2449, 0
    %2858 = vmatpush.xpose.msra.mxu0 0.0
    %2859 = vmatpush.xpose.msra.mxu0 0.0
    %2860 = vmatpush.xpose.msra.mxu0 0.0
    %2861 = vmatpush.xpose.msra.mxu0 0.0
    %2862 = vmatpush.xpose.msra.mxu0 0.0
    %2863 = vmatpush.xpose.msra.mxu0 0.0
    %2864 = vmatpush.xpose.msra.mxu0 0.0
    %2865 = vmatpush.xpose.msra.mxu0 0.0
    %2866 = vmatpush.xpose.msra.mxu0 0.0
    %2867 = vmatpush.xpose.msra.mxu0 0.0
    %2868 = vmatpush.xpose.msra.mxu0 0.0
    %2869 = vmatpush.xpose.msra.mxu0 0.0
    %2870 = vmatpush.xpose.msra.mxu0 0.0
    %2871 = vmatpush.xpose.msra.mxu0 0.0
    %2872 = vmatpush.xpose.msra.mxu0 0.0
    %2873 = vmatpush.xpose.msra.mxu0 %v2856
    %2874 = vmatmul.f32.gmra.mxu0 %v2853
    %v2875 = vpop.f32.mrf.mxu0
    %v2876 = vadd.f32 0.0, %v2875
    %2877 = vdwg.mxu0
    %v2879 = vsel %vm855, %v2207, 0
    %v2882 = vsel %vm855, %v2451, 0
    %2884 = vmatpush.xpose.msra.mxu0 0.0
    %2885 = vmatpush.xpose.msra.mxu0 0.0
    %2886 = vmatpush.xpose.msra.mxu0 0.0
    %2887 = vmatpush.xpose.msra.mxu0 0.0
    %2888 = vmatpush.xpose.msra.mxu0 0.0
    %2889 = vmatpush.xpose.msra.mxu0 0.0
    %2890 = vmatpush.xpose.msra.mxu0 0.0
    %2891 = vmatpush.xpose.msra.mxu0 0.0
    %2892 = vmatpush.xpose.msra.mxu0 0.0
    %2893 = vmatpush.xpose.msra.mxu0 0.0
    %2894 = vmatpush.xpose.msra.mxu0 0.0
    %2895 = vmatpush.xpose.msra.mxu0 0.0
    %2896 = vmatpush.xpose.msra.mxu0 0.0
    %2897 = vmatpush.xpose.msra.mxu0 0.0
    %2898 = vmatpush.xpose.msra.mxu0 0.0
    %2899 = vmatpush.xpose.msra.mxu0 %v2882
    %2900 = vmatmul.f32.gmra.mxu0 %v2879
    %v2901 = vpop.f32.mrf.mxu0
    %v2902 = vadd.f32 0.0, %v2901
    %2903 = vdwg.mxu0
    %v2904 = vmul.f32 %v2720, 0.35355338
    %v2905 = vmul.f32 %v2746, 0.35355338
    %v2906 = vmul.f32 %v2772, 0.35355338
    %v2907 = vmul.f32 %v2798, 0.35355338
    %v2908 = vmul.f32 %v2824, 0.35355338
    %v2909 = vmul.f32 %v2850, 0.35355338
    %v2910 = vmul.f32 %v2876, 0.35355338
    %v2911 = vmul.f32 %v2902, 0.35355338
    %v2912 = vsel %vm855, %v2904, -inf
    %2913 = vmax.xlane.f32.xlu0 %v2912
    %v2914 = vpop.xlane.xlu0 %2913
    %v2915 = vsel %vm855, %v2905, -inf
    %2916 = vmax.xlane.f32.xlu0 %v2915
    %v2917 = vpop.xlane.xlu0 %2916
    %v2918 = vsel %vm855, %v2906, -inf
    %2919 = vmax.xlane.f32.xlu0 %v2918
    %v2920 = vpop.xlane.xlu0 %2919
    %v2921 = vsel %vm855, %v2907, -inf
    %2922 = vmax.xlane.f32.xlu0 %v2921
    %v2923 = vpop.xlane.xlu0 %2922
    %v2924 = vsel %vm855, %v2908, -inf
    %2925 = vmax.xlane.f32.xlu0 %v2924
    %v2926 = vpop.xlane.xlu0 %2925
    %v2927 = vsel %vm855, %v2909, -inf
    %2928 = vmax.xlane.f32.xlu0 %v2927
    %v2929 = vpop.xlane.xlu0 %2928
    %v2930 = vsel %vm855, %v2910, -inf
    %2931 = vmax.xlane.f32.xlu0 %v2930
    %v2932 = vpop.xlane.xlu0 %2931
    %v2933 = vsel %vm855, %v2911, -inf
    %2934 = vmax.xlane.f32.xlu0 %v2933
    %v2935 = vpop.xlane.xlu0 %2934
    %v2936 = vsub.f32 %v2904, %v2914
    %v2937 = vsub.f32 %v2905, %v2917
    %v2938 = vsub.f32 %v2906, %v2920
    %v2939 = vsub.f32 %v2907, %v2923
    %v2940 = vsub.f32 %v2908, %v2926
    %v2941 = vsub.f32 %v2909, %v2929
    %v2942 = vsub.f32 %v2910, %v2932
    %v2943 = vsub.f32 %v2911, %v2935
    %v2944 = vmul.f32 %v2936, 1.442695
    %v2945 = vpow.pop %v2944
    %v2946 = vmul.f32 %v2937, 1.442695
    %v2947 = vpow.pop %v2946
    %v2948 = vmul.f32 %v2938, 1.442695
    %v2949 = vpow.pop %v2948
    %v2950 = vmul.f32 %v2939, 1.442695
    %v2951 = vpow.pop %v2950
    %v2952 = vmul.f32 %v2940, 1.442695
    %v2953 = vpow.pop %v2952
    %v2954 = vmul.f32 %v2941, 1.442695
    %v2955 = vpow.pop %v2954
    %v2956 = vmul.f32 %v2942, 1.442695
    %v2957 = vpow.pop %v2956
    %v2958 = vmul.f32 %v2943, 1.442695
    %v2959 = vpow.pop %v2958
    %v2960 = vsel %vm855, %v2945, 0.0
    %2961 = vadd.xlane.f32.xlu0 %v2960
    %v2962 = vpop.xlane.xlu0 %2961
    %v2963 = vsel %vm855, %v2947, 0.0
    %2964 = vadd.xlane.f32.xlu0 %v2963
    %v2965 = vpop.xlane.xlu0 %2964
    %v2966 = vsel %vm855, %v2949, 0.0
    %2967 = vadd.xlane.f32.xlu0 %v2966
    %v2968 = vpop.xlane.xlu0 %2967
    %v2969 = vsel %vm855, %v2951, 0.0
    %2970 = vadd.xlane.f32.xlu0 %v2969
    %v2971 = vpop.xlane.xlu0 %2970
    %v2972 = vsel %vm855, %v2953, 0.0
    %2973 = vadd.xlane.f32.xlu0 %v2972
    %v2974 = vpop.xlane.xlu0 %2973
    %v2975 = vsel %vm855, %v2955, 0.0
    %2976 = vadd.xlane.f32.xlu0 %v2975
    %v2977 = vpop.xlane.xlu0 %2976
    %v2978 = vsel %vm855, %v2957, 0.0
    %2979 = vadd.xlane.f32.xlu0 %v2978
    %v2980 = vpop.xlane.xlu0 %2979
    %v2981 = vsel %vm855, %v2959, 0.0
    %2982 = vadd.xlane.f32.xlu0 %v2981
    %v2983 = vpop.xlane.xlu0 %2982
    %v2984 = vrcp.pop %v2962
    %v2985 = vmul.f32 %v2962, %v2984
    %v2986 = vsub.f32 1.0, %v2985
    %v2987 = vmul.f32 %v2984, %v2986
    %v2988 = vadd.f32 %v2984, %v2987
    %vm2989 = vweird.f32 %v2962
    %vm2990 = vweird.f32 %v2984
    %vm2991 = vmor %vm2989, %vm2990
    %v2992 = vsel %vm2991, %v2984, %v2988
    %v2993 = vand.u32 2147483647, %v2962
    %vm2994 = vcmp.eq.f32.partialorder %v2993, 8.507059e+37
    %v2995 = vand.u32 %v2962, 2147483648
    %v2996 = vor.u32 1.1754944e-38, %v2995
    %v2997 = vsel %vm2994, %v2996, %v2992
    %v2998 = vrcp.pop %v2965
    %v2999 = vmul.f32 %v2965, %v2998
    %v3000 = vsub.f32 1.0, %v2999
    %v3001 = vmul.f32 %v2998, %v3000
    %v3002 = vadd.f32 %v2998, %v3001
    %vm3003 = vweird.f32 %v2965
    %vm3004 = vweird.f32 %v2998
    %vm3005 = vmor %vm3003, %vm3004
    %v3006 = vsel %vm3005, %v2998, %v3002
    %v3007 = vand.u32 2147483647, %v2965
    %vm3008 = vcmp.eq.f32.partialorder %v3007, 8.507059e+37
    %v3009 = vand.u32 %v2965, 2147483648
    %v3010 = vor.u32 1.1754944e-38, %v3009
    %v3011 = vsel %vm3008, %v3010, %v3006
    %v3012 = vrcp.pop %v2968
    %v3013 = vmul.f32 %v2968, %v3012
    %v3014 = vsub.f32 1.0, %v3013
    %v3015 = vmul.f32 %v3012, %v3014
    %v3016 = vadd.f32 %v3012, %v3015
    %vm3017 = vweird.f32 %v2968
    %vm3018 = vweird.f32 %v3012
    %vm3019 = vmor %vm3017, %vm3018
    %v3020 = vsel %vm3019, %v3012, %v3016
    %v3021 = vand.u32 2147483647, %v2968
    %vm3022 = vcmp.eq.f32.partialorder %v3021, 8.507059e+37
    %v3023 = vand.u32 %v2968, 2147483648
    %v3024 = vor.u32 1.1754944e-38, %v3023
    %v3025 = vsel %vm3022, %v3024, %v3020
    %v3026 = vrcp.pop %v2971
    %v3027 = vmul.f32 %v2971, %v3026
    %v3028 = vsub.f32 1.0, %v3027
    %v3029 = vmul.f32 %v3026, %v3028
    %v3030 = vadd.f32 %v3026, %v3029
    %vm3031 = vweird.f32 %v2971
    %vm3032 = vweird.f32 %v3026
    %vm3033 = vmor %vm3031, %vm3032
    %v3034 = vsel %vm3033, %v3026, %v3030
    %v3035 = vand.u32 2147483647, %v2971
    %vm3036 = vcmp.eq.f32.partialorder %v3035, 8.507059e+37
    %v3037 = vand.u32 %v2971, 2147483648
    %v3038 = vor.u32 1.1754944e-38, %v3037
    %v3039 = vsel %vm3036, %v3038, %v3034
    %v3040 = vrcp.pop %v2974
    %v3041 = vmul.f32 %v2974, %v3040
    %v3042 = vsub.f32 1.0, %v3041
    %v3043 = vmul.f32 %v3040, %v3042
    %v3044 = vadd.f32 %v3040, %v3043
    %vm3045 = vweird.f32 %v2974
    %vm3046 = vweird.f32 %v3040
    %vm3047 = vmor %vm3045, %vm3046
    %v3048 = vsel %vm3047, %v3040, %v3044
    %v3049 = vand.u32 2147483647, %v2974
    %vm3050 = vcmp.eq.f32.partialorder %v3049, 8.507059e+37
    %v3051 = vand.u32 %v2974, 2147483648
    %v3052 = vor.u32 1.1754944e-38, %v3051
    %v3053 = vsel %vm3050, %v3052, %v3048
    %v3054 = vrcp.pop %v2977
    %v3055 = vmul.f32 %v2977, %v3054
    %v3056 = vsub.f32 1.0, %v3055
    %v3057 = vmul.f32 %v3054, %v3056
    %v3058 = vadd.f32 %v3054, %v3057
    %vm3059 = vweird.f32 %v2977
    %vm3060 = vweird.f32 %v3054
    %vm3061 = vmor %vm3059, %vm3060
    %v3062 = vsel %vm3061, %v3054, %v3058
    %v3063 = vand.u32 2147483647, %v2977
    %vm3064 = vcmp.eq.f32.partialorder %v3063, 8.507059e+37
    %v3065 = vand.u32 %v2977, 2147483648
    %v3066 = vor.u32 1.1754944e-38, %v3065
    %v3067 = vsel %vm3064, %v3066, %v3062
    %v3068 = vrcp.pop %v2980
    %v3069 = vmul.f32 %v2980, %v3068
    %v3070 = vsub.f32 1.0, %v3069
    %v3071 = vmul.f32 %v3068, %v3070
    %v3072 = vadd.f32 %v3068, %v3071
    %vm3073 = vweird.f32 %v2980
    %vm3074 = vweird.f32 %v3068
    %vm3075 = vmor %vm3073, %vm3074
    %v3076 = vsel %vm3075, %v3068, %v3072
    %v3077 = vand.u32 2147483647, %v2980
    %vm3078 = vcmp.eq.f32.partialorder %v3077, 8.507059e+37
    %v3079 = vand.u32 %v2980, 2147483648
    %v3080 = vor.u32 1.1754944e-38, %v3079
    %v3081 = vsel %vm3078, %v3080, %v3076
    %v3082 = vrcp.pop %v2983
    %v3083 = vmul.f32 %v2983, %v3082
    %v3084 = vsub.f32 1.0, %v3083
    %v3085 = vmul.f32 %v3082, %v3084
    %v3086 = vadd.f32 %v3082, %v3085
    %vm3087 = vweird.f32 %v2983
    %vm3088 = vweird.f32 %v3082
    %vm3089 = vmor %vm3087, %vm3088
    %v3090 = vsel %vm3089, %v3082, %v3086
    %v3091 = vand.u32 2147483647, %v2983
    %vm3092 = vcmp.eq.f32.partialorder %v3091, 8.507059e+37
    %v3093 = vand.u32 %v2983, 2147483648
    %v3094 = vor.u32 1.1754944e-38, %v3093
    %v3095 = vsel %vm3092, %v3094, %v3090
    %v3096 = vmul.f32 %v2945, %v2997
    %v3097 = vmul.f32 %v2947, %v3011
    %v3098 = vmul.f32 %v2949, %v3025
    %v3099 = vmul.f32 %v2951, %v3039
    %v3100 = vmul.f32 %v2953, %v3053
    %v3101 = vmul.f32 %v2955, %v3067
    %v3102 = vmul.f32 %v2957, %v3081
    %v3103 = vmul.f32 %v2959, %v3095
    %s3104 = scalar_lea.vmem [#allocation9], 64
    %3105 = vst.msk [vmem:[%s3104] sm:$0xff] %vm855, %v3096
    %3106 = vst.msk [vmem:[%s3104 + $0x8] sm:$0xff] %vm855, %v3097
    %3107 = vst.msk [vmem:[%s3104 + $0x10] sm:$0xff] %vm855, %v3098
    %3108 = vst.msk [vmem:[%s3104 + $0x18] sm:$0xff] %vm855, %v3099
    %3109 = vst.msk [vmem:[%s3104 + $0x20] sm:$0xff] %vm855, %v3100
    %3110 = vst.msk [vmem:[%s3104 + $0x28] sm:$0xff] %vm855, %v3101
    %3111 = vst.msk [vmem:[%s3104 + $0x30] sm:$0xff] %vm855, %v3102
    %3112 = vst.msk [vmem:[%s3104 + $0x38] sm:$0xff] %vm855, %v3103
    %v3114 = vsel %vm855, %v3096, 0
    %3116 = vmatpush.msra.mxu0 0.0
    %3117 = vmatpush.msra.mxu0 0.0
    %3118 = vmatpush.msra.mxu0 0.0
    %3119 = vmatpush.msra.mxu0 0.0
    %3120 = vmatpush.msra.mxu0 0.0
    %3121 = vmatpush.msra.mxu0 0.0
    %3122 = vmatpush.msra.mxu0 0.0
    %3123 = vmatpush.msra.mxu0 0.0
    %3124 = vmatpush.msra.mxu0 0.0
    %3125 = vmatpush.msra.mxu0 0.0
    %3126 = vmatpush.msra.mxu0 0.0
    %3127 = vmatpush.msra.mxu0 0.0
    %3128 = vmatpush.msra.mxu0 0.0
    %3129 = vmatpush.msra.mxu0 0.0
    %3130 = vmatpush.msra.mxu0 0.0
    %3131 = vmatpush.msra.mxu0 %v2635
    %3132 = vmatmul.f32.gmra.mxu0 %v3114
    %v3133 = vpop.f32.mrf.mxu0
    %v3134 = vadd.f32 0.0, %v3133
    %3135 = vdwg.mxu0
    %v3137 = vsel %vm855, %v3097, 0
    %3139 = vmatpush.msra.mxu0 0.0
    %3140 = vmatpush.msra.mxu0 0.0
    %3141 = vmatpush.msra.mxu0 0.0
    %3142 = vmatpush.msra.mxu0 0.0
    %3143 = vmatpush.msra.mxu0 0.0
    %3144 = vmatpush.msra.mxu0 0.0
    %3145 = vmatpush.msra.mxu0 0.0
    %3146 = vmatpush.msra.mxu0 0.0
    %3147 = vmatpush.msra.mxu0 0.0
    %3148 = vmatpush.msra.mxu0 0.0
    %3149 = vmatpush.msra.mxu0 0.0
    %3150 = vmatpush.msra.mxu0 0.0
    %3151 = vmatpush.msra.mxu0 0.0
    %3152 = vmatpush.msra.mxu0 0.0
    %3153 = vmatpush.msra.mxu0 0.0
    %3154 = vmatpush.msra.mxu0 %v2637
    %3155 = vmatmul.f32.gmra.mxu0 %v3137
    %v3156 = vpop.f32.mrf.mxu0
    %v3157 = vadd.f32 0.0, %v3156
    %3158 = vdwg.mxu0
    %v3160 = vsel %vm855, %v3098, 0
    %3162 = vmatpush.msra.mxu0 0.0
    %3163 = vmatpush.msra.mxu0 0.0
    %3164 = vmatpush.msra.mxu0 0.0
    %3165 = vmatpush.msra.mxu0 0.0
    %3166 = vmatpush.msra.mxu0 0.0
    %3167 = vmatpush.msra.mxu0 0.0
    %3168 = vmatpush.msra.mxu0 0.0
    %3169 = vmatpush.msra.mxu0 0.0
    %3170 = vmatpush.msra.mxu0 0.0
    %3171 = vmatpush.msra.mxu0 0.0
    %3172 = vmatpush.msra.mxu0 0.0
    %3173 = vmatpush.msra.mxu0 0.0
    %3174 = vmatpush.msra.mxu0 0.0
    %3175 = vmatpush.msra.mxu0 0.0
    %3176 = vmatpush.msra.mxu0 0.0
    %3177 = vmatpush.msra.mxu0 %v2639
    %3178 = vmatmul.f32.gmra.mxu0 %v3160
    %v3179 = vpop.f32.mrf.mxu0
    %v3180 = vadd.f32 0.0, %v3179
    %3181 = vdwg.mxu0
    %v3183 = vsel %vm855, %v3099, 0
    %3185 = vmatpush.msra.mxu0 0.0
    %3186 = vmatpush.msra.mxu0 0.0
    %3187 = vmatpush.msra.mxu0 0.0
    %3188 = vmatpush.msra.mxu0 0.0
    %3189 = vmatpush.msra.mxu0 0.0
    %3190 = vmatpush.msra.mxu0 0.0
    %3191 = vmatpush.msra.mxu0 0.0
    %3192 = vmatpush.msra.mxu0 0.0
    %3193 = vmatpush.msra.mxu0 0.0
    %3194 = vmatpush.msra.mxu0 0.0
    %3195 = vmatpush.msra.mxu0 0.0
    %3196 = vmatpush.msra.mxu0 0.0
    %3197 = vmatpush.msra.mxu0 0.0
    %3198 = vmatpush.msra.mxu0 0.0
    %3199 = vmatpush.msra.mxu0 0.0
    %3200 = vmatpush.msra.mxu0 %v2641
    %3201 = vmatmul.f32.gmra.mxu0 %v3183
    %v3202 = vpop.f32.mrf.mxu0
    %v3203 = vadd.f32 0.0, %v3202
    %3204 = vdwg.mxu0
    %v3206 = vsel %vm855, %v3100, 0
    %3208 = vmatpush.msra.mxu0 0.0
    %3209 = vmatpush.msra.mxu0 0.0
    %3210 = vmatpush.msra.mxu0 0.0
    %3211 = vmatpush.msra.mxu0 0.0
    %3212 = vmatpush.msra.mxu0 0.0
    %3213 = vmatpush.msra.mxu0 0.0
    %3214 = vmatpush.msra.mxu0 0.0
    %3215 = vmatpush.msra.mxu0 0.0
    %3216 = vmatpush.msra.mxu0 0.0
    %3217 = vmatpush.msra.mxu0 0.0
    %3218 = vmatpush.msra.mxu0 0.0
    %3219 = vmatpush.msra.mxu0 0.0
    %3220 = vmatpush.msra.mxu0 0.0
    %3221 = vmatpush.msra.mxu0 0.0
    %3222 = vmatpush.msra.mxu0 0.0
    %3223 = vmatpush.msra.mxu0 %v2689
    %3224 = vmatmul.f32.gmra.mxu0 %v3206
    %v3225 = vpop.f32.mrf.mxu0
    %v3226 = vadd.f32 0.0, %v3225
    %3227 = vdwg.mxu0
    %v3229 = vsel %vm855, %v3101, 0
    %3231 = vmatpush.msra.mxu0 0.0
    %3232 = vmatpush.msra.mxu0 0.0
    %3233 = vmatpush.msra.mxu0 0.0
    %3234 = vmatpush.msra.mxu0 0.0
    %3235 = vmatpush.msra.mxu0 0.0
    %3236 = vmatpush.msra.mxu0 0.0
    %3237 = vmatpush.msra.mxu0 0.0
    %3238 = vmatpush.msra.mxu0 0.0
    %3239 = vmatpush.msra.mxu0 0.0
    %3240 = vmatpush.msra.mxu0 0.0
    %3241 = vmatpush.msra.mxu0 0.0
    %3242 = vmatpush.msra.mxu0 0.0
    %3243 = vmatpush.msra.mxu0 0.0
    %3244 = vmatpush.msra.mxu0 0.0
    %3245 = vmatpush.msra.mxu0 0.0
    %3246 = vmatpush.msra.mxu0 %v2691
    %3247 = vmatmul.f32.gmra.mxu0 %v3229
    %v3248 = vpop.f32.mrf.mxu0
    %v3249 = vadd.f32 0.0, %v3248
    %3250 = vdwg.mxu0
    %v3252 = vsel %vm855, %v3102, 0
    %3254 = vmatpush.msra.mxu0 0.0
    %3255 = vmatpush.msra.mxu0 0.0
    %3256 = vmatpush.msra.mxu0 0.0
    %3257 = vmatpush.msra.mxu0 0.0
    %3258 = vmatpush.msra.mxu0 0.0
    %3259 = vmatpush.msra.mxu0 0.0
    %3260 = vmatpush.msra.mxu0 0.0
    %3261 = vmatpush.msra.mxu0 0.0
    %3262 = vmatpush.msra.mxu0 0.0
    %3263 = vmatpush.msra.mxu0 0.0
    %3264 = vmatpush.msra.mxu0 0.0
    %3265 = vmatpush.msra.mxu0 0.0
    %3266 = vmatpush.msra.mxu0 0.0
    %3267 = vmatpush.msra.mxu0 0.0
    %3268 = vmatpush.msra.mxu0 0.0
    %3269 = vmatpush.msra.mxu0 %v2693
    %3270 = vmatmul.f32.gmra.mxu0 %v3252
    %v3271 = vpop.f32.mrf.mxu0
    %v3272 = vadd.f32 0.0, %v3271
    %3273 = vdwg.mxu0
    %v3275 = vsel %vm855, %v3103, 0
    %3277 = vmatpush.msra.mxu0 0.0
    %3278 = vmatpush.msra.mxu0 0.0
    %3279 = vmatpush.msra.mxu0 0.0
    %3280 = vmatpush.msra.mxu0 0.0
    %3281 = vmatpush.msra.mxu0 0.0
    %3282 = vmatpush.msra.mxu0 0.0
    %3283 = vmatpush.msra.mxu0 0.0
    %3284 = vmatpush.msra.mxu0 0.0
    %3285 = vmatpush.msra.mxu0 0.0
    %3286 = vmatpush.msra.mxu0 0.0
    %3287 = vmatpush.msra.mxu0 0.0
    %3288 = vmatpush.msra.mxu0 0.0
    %3289 = vmatpush.msra.mxu0 0.0
    %3290 = vmatpush.msra.mxu0 0.0
    %3291 = vmatpush.msra.mxu0 0.0
    %3292 = vmatpush.msra.mxu0 %v2695
    %3293 = vmatmul.f32.gmra.mxu0 %v3275
    %v3294 = vpop.f32.mrf.mxu0
    %v3295 = vadd.f32 0.0, %v3294
    %3296 = vdwg.mxu0
    %v3297 = vrot.slane %v3180, 4
    %v3298 = vsel %vm147, %v3297, %v3134
    %v3299 = vrot.slane %v3134, 4
    %v3300 = vsel %vm147, %v3180, %v3299
    %v3302 = vunpack.c.l.s4 1983009808
    %v3303 = vunpack.c.0.s8 %v3302
    %v3304 = vperm.slane %v3298, %v3303
    %v3306 = vunpack.c.l.s4 1983009808
    %v3307 = vunpack.c.0.s8 %v3306
    %v3308 = vperm.slane %v3300, %v3307
    %v3309 = vrot.slane %v3203, 4
    %v3310 = vsel %vm147, %v3309, %v3157
    %v3311 = vrot.slane %v3157, 4
    %v3312 = vsel %vm147, %v3203, %v3311
    %v3314 = vunpack.c.l.s4 1983009808
    %v3315 = vunpack.c.0.s8 %v3314
    %v3316 = vperm.slane %v3310, %v3315
    %v3318 = vunpack.c.l.s4 1983009808
    %v3319 = vunpack.c.0.s8 %v3318
    %v3320 = vperm.slane %v3312, %v3319
    %v3321 = vrot.slane %v3316, 4
    %v3322 = vsel %vm147, %v3321, %v3304
    %v3323 = vrot.slane %v3304, 4
    %v3324 = vsel %vm147, %v3316, %v3323
    %v3326 = vunpack.c.l.s4 1934713408
    %v3327 = vunpack.c.0.s8 %v3326
    %v3328 = vperm.slane %v3322, %v3327
    %v3330 = vunpack.c.l.s4 1934713408
    %v3331 = vunpack.c.0.s8 %v3330
    %v3332 = vperm.slane %v3324, %v3331
    %v3333 = vrot.slane %v3320, 4
    %v3334 = vsel %vm147, %v3333, %v3308
    %v3335 = vrot.slane %v3308, 4
    %v3336 = vsel %vm147, %v3320, %v3335
    %v3338 = vunpack.c.l.s4 1934713408
    %v3339 = vunpack.c.0.s8 %v3338
    %v3340 = vperm.slane %v3334, %v3339
    %v3342 = vunpack.c.l.s4 1934713408
    %v3343 = vunpack.c.0.s8 %v3342
    %v3344 = vperm.slane %v3336, %v3343
    %v3345 = vrot.slane %v3328, 4
    %v3346 = vsel %vm147, 0.0, %v3345
    %v3347 = vrot.slane %v3332, 4
    %v3348 = vsel %vm147, 0.0, %v3347
    %v3349 = vrot.slane %v3340, 4
    %v3350 = vsel %vm147, 0.0, %v3349
    %v3351 = vrot.slane %v3344, 4
    %v3352 = vsel %vm147, 0.0, %v3351
    %v3353 = vrot.slane %v3272, 4
    %v3354 = vsel %vm147, %v3353, %v3226
    %v3355 = vrot.slane %v3226, 4
    %v3356 = vsel %vm147, %v3272, %v3355
    %v3358 = vunpack.c.l.s4 1983009808
    %v3359 = vunpack.c.0.s8 %v3358
    %v3360 = vperm.slane %v3354, %v3359
    %v3362 = vunpack.c.l.s4 1983009808
    %v3363 = vunpack.c.0.s8 %v3362
    %v3364 = vperm.slane %v3356, %v3363
    %v3365 = vrot.slane %v3295, 4
    %v3366 = vsel %vm147, %v3365, %v3249
    %v3367 = vrot.slane %v3249, 4
    %v3368 = vsel %vm147, %v3295, %v3367
    %v3370 = vunpack.c.l.s4 1983009808
    %v3371 = vunpack.c.0.s8 %v3370
    %v3372 = vperm.slane %v3366, %v3371
    %v3374 = vunpack.c.l.s4 1983009808
    %v3375 = vunpack.c.0.s8 %v3374
    %v3376 = vperm.slane %v3368, %v3375
    %v3377 = vrot.slane %v3372, 4
    %v3378 = vsel %vm147, %v3377, %v3360
    %v3379 = vrot.slane %v3360, 4
    %v3380 = vsel %vm147, %v3372, %v3379
    %v3382 = vunpack.c.l.s4 1934713408
    %v3383 = vunpack.c.0.s8 %v3382
    %v3384 = vperm.slane %v3378, %v3383
    %v3386 = vunpack.c.l.s4 1934713408
    %v3387 = vunpack.c.0.s8 %v3386
    %v3388 = vperm.slane %v3380, %v3387
    %v3389 = vrot.slane %v3376, 4
    %v3390 = vsel %vm147, %v3389, %v3364
    %v3391 = vrot.slane %v3364, 4
    %v3392 = vsel %vm147, %v3376, %v3391
    %v3394 = vunpack.c.l.s4 1934713408
    %v3395 = vunpack.c.0.s8 %v3394
    %v3396 = vperm.slane %v3390, %v3395
    %v3398 = vunpack.c.l.s4 1934713408
    %v3399 = vunpack.c.0.s8 %v3398
    %v3400 = vperm.slane %v3392, %v3399
    %v3401 = vrot.slane %v3384, 4
    %v3402 = vsel %vm147, 0.0, %v3401
    %v3403 = vrot.slane %v3388, 4
    %v3404 = vsel %vm147, 0.0, %v3403
    %v3405 = vrot.slane %v3396, 4
    %v3406 = vsel %vm147, 0.0, %v3405
    %v3407 = vrot.slane %v3400, 4
    %v3408 = vsel %vm147, 0.0, %v3407
    %v3409 = vsel %vm147, %v3347, %v3328
    %v3411 = vunpack.c.l.s4 1983009808
    %v3412 = vunpack.c.0.s8 %v3411
    %v3413 = vperm.slane %v3409, %v3412
    %v3414 = vrot.slane %v3348, 4
    %v3415 = vsel %vm147, %v3414, %v3346
    %v3417 = vunpack.c.l.s4 1983009808
    %v3418 = vunpack.c.0.s8 %v3417
    %v3419 = vperm.slane %v3415, %v3418
    %v3420 = vsel %vm147, %v3351, %v3340
    %v3422 = vunpack.c.l.s4 1983009808
    %v3423 = vunpack.c.0.s8 %v3422
    %v3424 = vperm.slane %v3420, %v3423
    %v3425 = vrot.slane %v3352, 4
    %v3426 = vsel %vm147, %v3425, %v3350
    %v3428 = vunpack.c.l.s4 1983009808
    %v3429 = vunpack.c.0.s8 %v3428
    %v3430 = vperm.slane %v3426, %v3429
    %v3431 = vrot.slane %v3419, 4
    %v3432 = vsel %vm147, %v3431, %v3413
    %v3433 = vrot.slane %v3413, 4
    %v3434 = vsel %vm147, %v3419, %v3433
    %v3436 = vunpack.c.l.s4 1934713408
    %v3437 = vunpack.c.0.s8 %v3436
    %v3438 = vperm.slane %v3432, %v3437
    %v3440 = vunpack.c.l.s4 1934713408
    %v3441 = vunpack.c.0.s8 %v3440
    %v3442 = vperm.slane %v3434, %v3441
    %v3443 = vrot.slane %v3430, 4
    %v3444 = vsel %vm147, %v3443, %v3424
    %v3445 = vrot.slane %v3424, 4
    %v3446 = vsel %vm147, %v3430, %v3445
    %v3448 = vunpack.c.l.s4 1934713408
    %v3449 = vunpack.c.0.s8 %v3448
    %v3450 = vperm.slane %v3444, %v3449
    %v3452 = vunpack.c.l.s4 1934713408
    %v3453 = vunpack.c.0.s8 %v3452
    %v3454 = vperm.slane %v3446, %v3453
    %v3455 = vrot.slane %v3450, 4
    %v3456 = vsel %vm147, %v3455, %v3438
    %v3457 = vrot.slane %v3438, 4
    %v3458 = vsel %vm147, %v3450, %v3457
    %v3459 = vrot.slane %v3454, 4
    %v3460 = vsel %vm147, %v3459, %v3442
    %v3461 = vrot.slane %v3442, 4
    %v3462 = vsel %vm147, %v3454, %v3461
    %v3463 = vsel %vm147, %v3403, %v3384
    %v3465 = vunpack.c.l.s4 1983009808
    %v3466 = vunpack.c.0.s8 %v3465
    %v3467 = vperm.slane %v3463, %v3466
    %v3468 = vrot.slane %v3404, 4
    %v3469 = vsel %vm147, %v3468, %v3402
    %v3471 = vunpack.c.l.s4 1983009808
    %v3472 = vunpack.c.0.s8 %v3471
    %v3473 = vperm.slane %v3469, %v3472
    %v3474 = vsel %vm147, %v3407, %v3396
    %v3476 = vunpack.c.l.s4 1983009808
    %v3477 = vunpack.c.0.s8 %v3476
    %v3478 = vperm.slane %v3474, %v3477
    %v3479 = vrot.slane %v3408, 4
    %v3480 = vsel %vm147, %v3479, %v3406
    %v3482 = vunpack.c.l.s4 1983009808
    %v3483 = vunpack.c.0.s8 %v3482
    %v3484 = vperm.slane %v3480, %v3483
    %v3485 = vrot.slane %v3473, 4
    %v3486 = vsel %vm147, %v3485, %v3467
    %v3487 = vrot.slane %v3467, 4
    %v3488 = vsel %vm147, %v3473, %v3487
    %v3490 = vunpack.c.l.s4 1934713408
    %v3491 = vunpack.c.0.s8 %v3490
    %v3492 = vperm.slane %v3486, %v3491
    %v3494 = vunpack.c.l.s4 1934713408
    %v3495 = vunpack.c.0.s8 %v3494
    %v3496 = vperm.slane %v3488, %v3495
    %v3497 = vrot.slane %v3484, 4
    %v3498 = vsel %vm147, %v3497, %v3478
    %v3499 = vrot.slane %v3478, 4
    %v3500 = vsel %vm147, %v3484, %v3499
    %v3502 = vunpack.c.l.s4 1934713408
    %v3503 = vunpack.c.0.s8 %v3502
    %v3504 = vperm.slane %v3498, %v3503
    %v3506 = vunpack.c.l.s4 1934713408
    %v3507 = vunpack.c.0.s8 %v3506
    %v3508 = vperm.slane %v3500, %v3507
    %v3509 = vrot.slane %v3504, 4
    %v3510 = vsel %vm147, %v3509, %v3492
    %v3511 = vrot.slane %v3492, 4
    %v3512 = vsel %vm147, %v3504, %v3511
    %v3513 = vrot.slane %v3508, 4
    %v3514 = vsel %vm147, %v3513, %v3496
    %v3515 = vrot.slane %v3496, 4
    %v3516 = vsel %vm147, %v3508, %v3515
    %3519 = vrot.lane.b32.xlu0 %v3458, 8
    %v3520 = vpop.permute.xlu0 %3519
    %3521 = vrot.lane.b32.xlu0 %v3512, 8
    %v3522 = vpop.permute.xlu0 %3521
    %3527 = vrot.lane.b32.xlu0 %v3460, 16
    %v3528 = vpop.permute.xlu0 %3527
    %3529 = vrot.lane.b32.xlu0 %v3514, 16
    %v3530 = vpop.permute.xlu0 %3529
    %3535 = vrot.lane.b32.xlu0 %v3462, 24
    %v3536 = vpop.permute.xlu0 %3535
    %3537 = vrot.lane.b32.xlu0 %v3516, 24
    %v3538 = vpop.permute.xlu0 %3537
    %v3541 = vsel %vm855, %v3456, %v3520
    %v3542 = vsel %vm855, %v3510, %v3522
    %v3543 = vsel %vm1702, %v3541, %v3528
    %v3544 = vsel %vm1702, %v3542, %v3530
    %v3545 = vsel %vm1705, %v3543, %v3536
    %v3546 = vsel %vm1705, %v3544, %v3538
    %s3547 = scalar_lea.vmem %s3, 32
    %v3548 = vld [vmem:[%s3547] sm:$0xff]
    %v3549 = vld [vmem:[%s3547 + $0x8] sm:$0xff]
    %v3550 = vld [vmem:[%s3547 + $0x10] sm:$0xff]
    %v3551 = vld [vmem:[%s3547 + $0x18] sm:$0xff]
    %v3553 = vsel %vm96, %v3545, 0
    %v3556 = vsel %vm96, %v3546, 0
    %3558 = vmatpush.msra.mxu0 0.0
    %3559 = vmatpush.msra.mxu0 0.0
    %3560 = vmatpush.msra.mxu0 0.0
    %3561 = vmatpush.msra.mxu0 0.0
    %3562 = vmatpush.msra.mxu0 0.0
    %3563 = vmatpush.msra.mxu0 0.0
    %3564 = vmatpush.msra.mxu0 0.0
    %3565 = vmatpush.msra.mxu0 0.0
    %3566 = vmatpush.msra.mxu0 0.0
    %3567 = vmatpush.msra.mxu0 0.0
    %3568 = vmatpush.msra.mxu0 0.0
    %3569 = vmatpush.msra.mxu0 0.0
    %3570 = vmatpush.msra.mxu0 %v3551
    %3571 = vmatpush.msra.mxu0 %v3550
    %3572 = vmatpush.msra.mxu0 %v3549
    %3573 = vmatpush.msra.mxu0 %v3548
    %3574 = vmatmul.f32.gmra.mxu0 %v3553
    %v3575 = vpop.f32.mrf.mxu0
    %v3576 = vadd.f32 %v1932, %v3575
    %3577 = vmatmul.f32.gmra.mxu0 %v3556
    %v3578 = vpop.f32.mrf.mxu0
    %v3579 = vadd.f32 %v1933, %v3578
    %3580 = vdwg.mxu0
    %s3581 = scalar_lea.vmem %s6, 1
    %v3582 = vld [vmem:[%s3581] sm:$0x1]
    %s3583 = scalar_lea.vmem %s7, 1
    %v3584 = vld [vmem:[%s3583] sm:$0x1]
    %v3585 = vsel %vm96, %v3576, 0.0
    %3586 = vadd.xlane.f32.xlu0 %v3585
    %v3587 = vpop.xlane.xlu0 %3586
    %v3588 = vsel %vm96, %v3579, 0.0
    %3589 = vadd.xlane.f32.xlu0 %v3588
    %v3590 = vpop.xlane.xlu0 %3589
    %v3591 = vmul.f32 %v3587, 0.03125
    %v3592 = vmul.f32 %v3590, 0.03125
    %v3593 = vmul.f32 %v3576, %v3576
    %v3594 = vmul.f32 %v3579, %v3579
    %v3595 = vsel %vm96, %v3593, 0.0
    %3596 = vadd.xlane.f32.xlu0 %v3595
    %v3597 = vpop.xlane.xlu0 %3596
    %v3598 = vsel %vm96, %v3594, 0.0
    %3599 = vadd.xlane.f32.xlu0 %v3598
    %v3600 = vpop.xlane.xlu0 %3599
    %v3601 = vmul.f32 %v3597, 0.03125
    %v3602 = vmul.f32 %v3600, 0.03125
    %v3603 = vmul.f32 %v3591, %v3591
    %v3604 = vmul.f32 %v3592, %v3592
    %v3605 = vsub.f32 %v3601, %v3603
    %v3606 = vsub.f32 %v3602, %v3604
    %v3607 = vsub.f32 %v3576, %v3591
    %v3608 = vsub.f32 %v3579, %v3592
    %v3609 = vadd.f32 %v3605, 1e-05
    %v3610 = vadd.f32 %v3606, 1e-05
    %v3611 = vrsqrt.pop %v3609
    %v3612 = vmul.f32 %v3611, %v3609
    %v3613 = vmul.f32 %v3612, %v3611
    %v3614 = vmul.f32 0.5, %v3613
    %v3615 = vsub.f32 1.5, %v3614
    %v3616 = vmul.f32 %v3611, %v3615
    %vm3617 = vweird.f32 %v3609
    %vm3618 = vweird.f32 %v3611
    %vm3619 = vmor %vm3617, %vm3618
    %v3620 = vsel %vm3619, %v3611, %v3616
    %v3621 = vrsqrt.pop %v3610
    %v3622 = vmul.f32 %v3621, %v3610
    %v3623 = vmul.f32 %v3622, %v3621
    %v3624 = vmul.f32 0.5, %v3623
    %v3625 = vsub.f32 1.5, %v3624
    %v3626 = vmul.f32 %v3621, %v3625
    %vm3627 = vweird.f32 %v3610
    %vm3628 = vweird.f32 %v3621
    %vm3629 = vmor %vm3627, %vm3628
    %v3630 = vsel %vm3629, %v3621, %v3626
    %v3631 = vmul.f32 %v3607, %v3620
    %v3632 = vmul.f32 %v3608, %v3630
    %v3634 = vperm.slane %v3582, 0
    %v3636 = vmul.f32 %v3631, %v3634
    %v3637 = vmul.f32 %v3632, %v3634
    %v3639 = vperm.slane %v3584, 0
    %v3641 = vadd.f32 %v3636, %v3639
    %v3642 = vadd.f32 %v3637, %v3639
    %s3643 = scalar_lea.vmem %s4, 32
    %v3644 = vld [vmem:[%s3643] sm:$0xff]
    %v3645 = vld [vmem:[%s3643 + $0x8] sm:$0xff]
    %v3646 = vld [vmem:[%s3643 + $0x10] sm:$0xff]
    %v3647 = vld [vmem:[%s3643 + $0x18] sm:$0xff]
    %v3649 = vsel %vm96, %v3641, 0
    %v3652 = vsel %vm96, %v3642, 0
    %3654 = vmatpush.msra.mxu0 0.0
    %3655 = vmatpush.msra.mxu0 0.0
    %3656 = vmatpush.msra.mxu0 0.0
    %3657 = vmatpush.msra.mxu0 0.0
    %3658 = vmatpush.msra.mxu0 0.0
    %3659 = vmatpush.msra.mxu0 0.0
    %3660 = vmatpush.msra.mxu0 0.0
    %3661 = vmatpush.msra.mxu0 0.0
    %3662 = vmatpush.msra.mxu0 0.0
    %3663 = vmatpush.msra.mxu0 0.0
    %3664 = vmatpush.msra.mxu0 0.0
    %3665 = vmatpush.msra.mxu0 0.0
    %3666 = vmatpush.msra.mxu0 %v3647
    %3667 = vmatpush.msra.mxu0 %v3646
    %3668 = vmatpush.msra.mxu0 %v3645
    %3669 = vmatpush.msra.mxu0 %v3644
    %3670 = vmatmul.f32.gmra.mxu0 %v3649
    %v3671 = vpop.f32.mrf.mxu0
    %v3672 = vadd.f32 0.0, %v3671
    %3673 = vmatmul.f32.gmra.mxu0 %v3652
    %v3674 = vpop.f32.mrf.mxu0
    %v3675 = vadd.f32 0.0, %v3674
    %3676 = vdwg.mxu0
    %v3677 = vmax.f32 %v3672, 0.0
    %v3678 = vmax.f32 %v3675, 0.0
    %s3679 = scalar_lea.vmem %s5, 64
    %v3680 = vld [vmem:[%s3679] sm:$0xff]
    %v3681 = vld [vmem:[%s3679 + $0x8] sm:$0xff]
    %v3682 = vld [vmem:[%s3679 + $0x10] sm:$0xff]
    %v3683 = vld [vmem:[%s3679 + $0x18] sm:$0xff]
    %v3684 = vld [vmem:[%s3679 + $0x20] sm:$0xff]
    %v3685 = vld [vmem:[%s3679 + $0x28] sm:$0xff]
    %v3686 = vld [vmem:[%s3679 + $0x30] sm:$0xff]
    %v3687 = vld [vmem:[%s3679 + $0x38] sm:$0xff]
    %v3689 = vsel %vm1844, %v3677, 0
    %v3692 = vsel %vm1844, %v3678, 0
    %3694 = vmatpush.msra.mxu0 0.0
    %3695 = vmatpush.msra.mxu0 0.0
    %3696 = vmatpush.msra.mxu0 0.0
    %3697 = vmatpush.msra.mxu0 0.0
    %3698 = vmatpush.msra.mxu0 0.0
    %3699 = vmatpush.msra.mxu0 0.0
    %3700 = vmatpush.msra.mxu0 0.0
    %3701 = vmatpush.msra.mxu0 0.0
    %3702 = vmatpush.msra.mxu0 %v3687
    %3703 = vmatpush.msra.mxu0 %v3686
    %3704 = vmatpush.msra.mxu0 %v3685
    %3705 = vmatpush.msra.mxu0 %v3684
    %3706 = vmatpush.msra.mxu0 %v3683
    %3707 = vmatpush.msra.mxu0 %v3682
    %3708 = vmatpush.msra.mxu0 %v3681
    %3709 = vmatpush.msra.mxu0 %v3680
    %3710 = vmatmul.f32.gmra.mxu0 %v3689
    %v3711 = vpop.f32.mrf.mxu0
    %v3712 = vadd.f32 %v3641, %v3711
    %3713 = vmatmul.f32.gmra.mxu0 %v3692
    %v3714 = vpop.f32.mrf.mxu0
    %v3715 = vadd.f32 %v3642, %v3714
    %3716 = vdwg.mxu0
    %s3717 = scalar_lea.vmem [#allocation7], 1
    %v3718 = vld [vmem:[%s3717] sm:$0x1]
    %s3719 = scalar_lea.vmem %s9, 1
    %v3720 = vld [vmem:[%s3719] sm:$0x1]
    %v3721 = vsel %vm96, %v3712, 0.0
    %3722 = vadd.xlane.f32.xlu0 %v3721
    %v3723 = vpop.xlane.xlu0 %3722
    %v3724 = vsel %vm96, %v3715, 0.0
    %3725 = vadd.xlane.f32.xlu0 %v3724
    %v3726 = vpop.xlane.xlu0 %3725
    %v3727 = vmul.f32 %v3723, 0.03125
    %v3728 = vmul.f32 %v3726, 0.03125
    %v3729 = vmul.f32 %v3712, %v3712
    %v3730 = vmul.f32 %v3715, %v3715
    %v3731 = vsel %vm96, %v3729, 0.0
    %3732 = vadd.xlane.f32.xlu0 %v3731
    %v3733 = vpop.xlane.xlu0 %3732
    %v3734 = vsel %vm96, %v3730, 0.0
    %3735 = vadd.xlane.f32.xlu0 %v3734
    %v3736 = vpop.xlane.xlu0 %3735
    %v3737 = vmul.f32 %v3733, 0.03125
    %v3738 = vmul.f32 %v3736, 0.03125
    %v3739 = vmul.f32 %v3727, %v3727
    %v3740 = vmul.f32 %v3728, %v3728
    %v3741 = vsub.f32 %v3737, %v3739
    %v3742 = vsub.f32 %v3738, %v3740
    %v3743 = vsub.f32 %v3712, %v3727
    %v3744 = vsub.f32 %v3715, %v3728
    %v3745 = vadd.f32 %v3741, 1e-05
    %v3746 = vadd.f32 %v3742, 1e-05
    %v3747 = vrsqrt.pop %v3745
    %v3748 = vmul.f32 %v3747, %v3745
    %v3749 = vmul.f32 %v3748, %v3747
    %v3750 = vmul.f32 0.5, %v3749
    %v3751 = vsub.f32 1.5, %v3750
    %v3752 = vmul.f32 %v3747, %v3751
    %vm3753 = vweird.f32 %v3745
    %vm3754 = vweird.f32 %v3747
    %vm3755 = vmor %vm3753, %vm3754
    %v3756 = vsel %vm3755, %v3747, %v3752
    %v3757 = vrsqrt.pop %v3746
    %v3758 = vmul.f32 %v3757, %v3746
    %v3759 = vmul.f32 %v3758, %v3757
    %v3760 = vmul.f32 0.5, %v3759
    %v3761 = vsub.f32 1.5, %v3760
    %v3762 = vmul.f32 %v3757, %v3761
    %vm3763 = vweird.f32 %v3746
    %vm3764 = vweird.f32 %v3757
    %vm3765 = vmor %vm3763, %vm3764
    %v3766 = vsel %vm3765, %v3757, %v3762
    %v3767 = vmul.f32 %v3743, %v3756
    %v3768 = vmul.f32 %v3744, %v3766
    %v3770 = vperm.slane %v3718, 0
    %v3772 = vmul.f32 %v3767, %v3770
    %v3773 = vmul.f32 %v3768, %v3770
    %v3775 = vperm.slane %v3720, 0
    %v3777 = vadd.f32 %v3772, %v3775
    %v3778 = vadd.f32 %v3773, %v3775
    %3779 = vst.msk [vmem:[#allocation8] sm:$0xff] %vm96, %v3777
    %3780 = vst.msk [vmem:[#allocation8 + $0x8] sm:$0xff] %vm96, %v3778
    // Predicated region
    $region54: #{tpu_custom_call.1} parent=1 // pred_check
      _
    $region55: #{tpu_custom_call.1} parent=1 // pred_check_branch
      %3782 = sbr.rel (0) target = $region57
    $region56: #{tpu_custom_call.1} parent=1 // pred_region
      %3784 = vsyncadd [#allocation4], 0
      %s3785 = sshll.u32 [#allocation8], 4
      %s3786 = int_to_ptr.vmem [resolvable:$true] %s3785
      %s3787 = sshll.u32 %s10, 4
      %s3788 = int_to_ptr.hbm [resolvable:$true] %s3787
      %3793 = dma.vmem_to_hbm [thread:$0]  %s3786, 256, %s3788, [#allocation4], 128, 128, 8
    $region57: #{tpu_custom_call.1} parent=1 // pred_fallthru
      _
    // Predicated region
    $region58: #{tpu_custom_call.1} parent=1 // pred_check
      _
    $region59: #{tpu_custom_call.1} parent=1 // pred_check_branch
      %3795 = sbr.rel (0) target = $region61
    $region60: #{tpu_custom_call.1} parent=1 // pred_region
      %3797 = vsyncadd [#allocation10], 0
      %s3798 = sshll.u32 [#allocation9], 4
      %s3799 = int_to_ptr.vmem [resolvable:$true] %s3798
      %s3800 = sshll.u32 %s11, 4
      %s3801 = int_to_ptr.hbm [resolvable:$true] %s3800
      %3806 = dma.vmem_to_hbm [thread:$0]  %s3799, 2048, %s3801, [#allocation10], 128, 128, 8
    $region61: #{tpu_custom_call.1} parent=1 // pred_fallthru
      _
    // Predicated region
    $region62: #{tpu_custom_call.1} parent=1 // pred_check
      _
    $region63: #{tpu_custom_call.1} parent=1 // pred_check_branch
      %3808 = sbr.rel (0) target = $region65
    $region64: #{tpu_custom_call.1} parent=1 // pred_region
      %3810 = dma.done [#allocation4], 256
    $region65: #{tpu_custom_call.1} parent=1 // pred_fallthru
      _
    // Predicated region
    $region66: #{tpu_custom_call.1} parent=1 // pred_check
      _
    $region67: #{tpu_custom_call.1} parent=1 // pred_check_branch
      %3812 = sbr.rel (0) target = $region69
    $region68: #{tpu_custom_call.1} parent=1 // pred_region
      %3814 = dma.done [#allocation10], 2048
    $region69: #{tpu_custom_call.1} parent=1 // pred_fallthru
      _
    %3815 = vsyncpa [#allocation3], 1
    %3816 = vsyncpa [#allocation6], 1
    %3817 = vsyncpa [#allocation4], 1
    %3818 = vsyncpa [#allocation10], 1

</llo_original>
